<compile_context>
chip_gen: v7x
topology: tpu7x:2x2x1
jax: 0.10.0
libtpu: 0.0.40
codegen_flags: <defaults>
</compile_context>

<pallas_src>
import math

import jax
import jax.numpy as jnp
from jax.experimental import pallas as pl
from jax.experimental.pallas import tpu as pltpu

BN_EPS = 1e-5


# ------------------------------ in-kernel helpers ----------------------------

def _pad_hw(x, top, bottom, left, right):
    """Zero-pad a (h, w, c) value spatially via concatenation (no scratch)."""
    h, w, c = x.shape
    dt = x.dtype
    if left or right:
        parts = []
        if left:
            parts.append(jnp.zeros((h, left, c), dt))
        parts.append(x)
        if right:
            parts.append(jnp.zeros((h, right, c), dt))
        x = jnp.concatenate(parts, axis=1)
        w = w + left + right
    if top or bottom:
        parts = []
        if top:
            parts.append(jnp.zeros((top, w, c), dt))
        parts.append(x)
        if bottom:
            parts.append(jnp.zeros((bottom, w, c), dt))
        x = jnp.concatenate(parts, axis=0)
    return x


def _every_other(x, axis):
    """Take elements 0, 2, 4, ... along `axis` via unit slices + concat."""
    n = x.shape[axis] // 2
    parts = []
    for i in range(n):
        idx = [slice(None)] * x.ndim
        idx[axis] = slice(2 * i, 2 * i + 1)
        parts.append(x[tuple(idx)])
    return jnp.concatenate(parts, axis=axis)


def _conv_grouped(xpad, w, k, oh, ow):
    """Stride-1 'VALID' conv as ONE MXU matmul.

    LHS rows = oh*ow output positions; contraction = k*k*cin (all taps grouped
    along the lane axis).  xpad: (oh+k-1, ow+k-1, cin); w: (k*k*cin, cout) bf16.
    `ow` must be a multiple of 8 so the (oh, ow, K) -> (oh*ow, K) reshape is
    layout-trivial.  Returns (oh*ow, cout) float32.
    """
    cin = xpad.shape[-1]
    taps = [xpad[a:a + oh, b:b + ow, :] for a in range(k) for b in range(k)]
    lhs = jnp.concatenate(taps, axis=-1).reshape(oh * ow, k * k * cin)
    return jnp.dot(lhs.astype(jnp.bfloat16), w,
                   preferred_element_type=jnp.float32)


# ---------------------------------- kernel -----------------------------------

def _fused_resnet_kernel(xs_ref, w0, s0, b0,
                         w1a, s1a, b1a, w1b, s1b, b1b,
                         w2a, s2a, b2a, w2b, s2b, b2b,
                         wsc, ssc, bsc,
                         o_ref):
    # ---- stem: folded 7x7/2 conv (single K=256 matmul) + BN + ReLU ----------
    c1 = _conv_grouped(xs_ref[0], w0[...], 4, 16, 16)             # (256, 64) f32
    c1 = jnp.maximum(c1 * s0[...] + b0[...], 0.0)

    # ---- 3x3/2 maxpool, pad 1 (zero pad == -inf pad for post-ReLU input) ----
    z = _pad_hw(c1.reshape(16, 16, 64), 1, 1, 1, 1)               # (18, 18, 64)
    rmax = jnp.maximum(jnp.maximum(z[0:16], z[1:17]), z[2:18])    # (16, 18, 64)
    rsub = _every_other(rmax, 0)                                  # (8, 18, 64)
    cmax = jnp.maximum(jnp.maximum(rsub[:, 0:16], rsub[:, 1:17]),
                       rsub[:, 2:18])                             # (8, 16, 64)
    mp = _every_other(cmax, 1)                                    # (8, 8, 64)

    # ---- layer1 BasicBlock (stride 1, identity shortcut) --------------------
    a1 = _conv_grouped(_pad_hw(mp, 1, 1, 1, 1), w1a[...], 3, 8, 8)
    h1 = jnp.maximum(a1 * s1a[...] + b1a[...], 0.0)               # (64, 64)
    a2 = _conv_grouped(_pad_hw(h1.reshape(8, 8, 64), 1, 1, 1, 1),
                       w1b[...], 3, 8, 8)
    out1 = jnp.maximum(a2 * s1b[...] + b1b[...] + mp.reshape(64, 64), 0.0)

    # ---- layer2 BasicBlock (stride 2, 1x1/2 projection shortcut) ------------
    # conv1 3x3/2 pad 1: full stride-1 conv then even-row/col subsample.
    a3 = _conv_grouped(_pad_hw(out1.reshape(8, 8, 64), 1, 1, 1, 1),
                       w2a[...], 3, 8, 8)                         # (64, 128)
    h2 = _every_other(_every_other(a3.reshape(8, 8, 128), 0), 1)  # (4, 4, 128)
    h2 = jnp.maximum(h2 * s2a[...] + b2a[...], 0.0)
    # conv2 3x3/1 pad 1 with width-padded (ow=8) output; slice valid columns.
    a4 = _conv_grouped(_pad_hw(h2, 1, 1, 1, 5), w2b[...], 3, 4, 8)
    c2 = a4.reshape(4, 8, 128)[:, 0:4, :]                         # (4, 4, 128)
    # projection shortcut: 1x1 matmul then even-row/col subsample + BN.
    sc = jnp.dot(out1.astype(jnp.bfloat16), wsc[...],
                 preferred_element_type=jnp.float32)              # (64, 128)
    sc = _every_other(_every_other(sc.reshape(8, 8, 128), 0), 1)  # (4, 4, 128)
    out2 = jnp.maximum(c2 * s2b[...] + b2b[...] + sc * ssc[...] + bsc[...], 0.0)

    # ---- 4x4 global avgpool --------------------------------------------------
    pooled = jnp.sum(jnp.sum(out2, axis=0), axis=0, keepdims=True) * 0.0625
    o_ref[0] = pooled.astype(o_ref.dtype)                         # (1, 128)


# ------------------------------ pallas_call wrapper ---------------------------

def _nbytes(shape, dtype):
    return math.prod(shape) * jnp.dtype(dtype).itemsize


def _fused_call(p, y):
    n = y.shape[0]
    weights = [p["stem_w"], p["stem_s"], p["stem_b"],
               p["l1_w1"], p["l1_s1"], p["l1_b1"],
               p["l1_w2"], p["l1_s2"], p["l1_b2"],
               p["l2_w1"], p["l2_s1"], p["l2_b1"],
               p["l2_w2"], p["l2_s2"], p["l2_b2"],
               p["l2_wsc"], p["l2_ssc"], p["l2_bsc"]]
    in_specs = ([pl.BlockSpec((1,) + y.shape[1:], lambda i: (i, 0, 0, 0))]
                + [pl.BlockSpec(w.shape, lambda i: (0, 0)) for w in weights])
    flops_per_sample = 2 * (256 * 256 * 64 + 2 * 64 * 576 * 64
                            + 64 * 576 * 128 + 32 * 1152 * 128 + 64 * 64 * 128)
    bytes_accessed = (_nbytes(y.shape, y.dtype)
                      + sum(_nbytes(w.shape, w.dtype) for w in weights)
                      + _nbytes((n, 1, 128), jnp.float32))
    return pl.pallas_call(
        _fused_resnet_kernel,
        out_shape=jax.ShapeDtypeStruct((n, 1, 128), jnp.float32),
        grid=(n,),
        in_specs=in_specs,
        out_specs=pl.BlockSpec((1, 1, 128), lambda i: (i, 0, 0)),
        compiler_params=pltpu.CompilerParams(
            dimension_semantics=("parallel",),
            vmem_limit_bytes=32 * 1024 * 1024),
        cost_estimate=pl.CostEstimate(flops=n * flops_per_sample,
                                      transcendentals=0,
                                      bytes_accessed=bytes_accessed),
    )(y, *weights)


# ------------------------------- JAX layout glue ------------------------------

def _space_to_depth(x):
    """(N, H, W, C), H/W even -> (N, H//2, W//2, 4*C); channel = (di*2+dj)*C + c."""
    n, h, w, c = x.shape
    x = x.reshape(n, h // 2, 2, w // 2, 2, c)
    x = jnp.transpose(x, (0, 1, 3, 2, 4, 5))
    return x.reshape(n, h // 2, w // 2, 4 * c)


# ------------------------------ parameter setup -------------------------------

def _conv_weight(key, cin, cout, k):
    # PyTorch init: normal(0, sqrt(2 / (k*k*out_channels))); layout (KH,KW,Cin,Cout).
    n = k * k * cout
    return jax.random.normal(key, (k, k, cin, cout), jnp.float32) * math.sqrt(2.0 / n)


def _bn_affine(c):
    # eval-mode BatchNorm folded to a per-channel affine; conv bias (=0) folded in.
    gamma = jnp.ones((c,), jnp.float32)
    beta = jnp.zeros((c,), jnp.float32)
    mean = jnp.zeros((c,), jnp.float32)
    var = jnp.ones((c,), jnp.float32)
    bias = jnp.zeros((c,), jnp.float32)
    scale = gamma / jnp.sqrt(var + BN_EPS)
    shift = (bias - mean) * scale + beta
    return scale.reshape(1, c), shift.reshape(1, c)


def _fold_conv_weight(w, stride, delta=0):
    """Fold a (k,k,cin,cout) stride-`stride` conv weight into an equivalent
    stride-1 weight over the space-to-depth(stride) input layout."""
    k, _, cin, cout = w.shape
    if stride == 1 and delta == 0:
        return w
    k2 = -(-(k + delta) // stride)
    out = jnp.zeros((k2, k2, stride * stride * cin, cout), w.dtype)
    for ai in range(k2):
        for di in range(stride):
            ki = stride * ai + di - delta
            if not 0 <= ki < k:
                continue
            for aj in range(k2):
                for dj in range(stride):
                    kj = stride * aj + dj - delta
                    if not 0 <= kj < k:
                        continue
                    g = (di * stride + dj) * cin
                    out = out.at[ai, aj, g:g + cin, :].set(w[ki, kj])
    return out


def init_resnet_params(key, num_blocks=(1, 1)):
    # TODO(synk): the fully fused kernel is specialized to num_blocks=(1, 1).
    assert tuple(num_blocks) == (1, 1), "fused kernel supports num_blocks=(1, 1)"
    p = {}
    key, k0, k1a, k1b, k2a, k2b, k2c = jax.random.split(key, 7)

    # stem: 7x7/2 pad 3, folded onto space-to-depth(2) layout, Cin 12 -> 16.
    w_stem = _conv_weight(k0, 3, 64, 7)
    w_stem = _fold_conv_weight(w_stem, stride=2)                  # (4,4,12,64)
    w_stem = jnp.pad(w_stem, ((0, 0), (0, 0), (0, 4), (0, 0)))    # (4,4,16,64)
    p["stem_w"] = w_stem.reshape(256, 64).astype(jnp.bfloat16)    # grouped K=256
    p["stem_s"], p["stem_b"] = _bn_affine(64)

    # layer1 block (stride 1, 64 -> 64, identity shortcut).
    p["l1_w1"] = _conv_weight(k1a, 64, 64, 3).reshape(576, 64).astype(jnp.bfloat16)
    p["l1_s1"], p["l1_b1"] = _bn_affine(64)
    p["l1_w2"] = _conv_weight(k1b, 64, 64, 3).reshape(576, 64).astype(jnp.bfloat16)
    p["l1_s2"], p["l1_b2"] = _bn_affine(64)

    # layer2 block (stride 2, 64 -> 128, 1x1/2 projection shortcut).
    p["l2_w1"] = _conv_weight(k2a, 64, 128, 3).reshape(576, 128).astype(jnp.bfloat16)
    p["l2_s1"], p["l2_b1"] = _bn_affine(128)
    p["l2_w2"] = _conv_weight(k2b, 128, 128, 3).reshape(1152, 128).astype(jnp.bfloat16)
    p["l2_s2"], p["l2_b2"] = _bn_affine(128)
    p["l2_wsc"] = _conv_weight(k2c, 64, 128, 1).reshape(64, 128).astype(jnp.bfloat16)
    p["l2_ssc"], p["l2_bsc"] = _bn_affine(128)
    return p


# -------------------------------- forward pass --------------------------------

def resnet_forward(params, x_nchw):
    # Input pre-layout (one wrapper-side layout chain): NCHW -> NHWC, pad 3,
    # space-to-depth(2) to fold the stem's stride 2, channel pad 12 -> 16.
    x = jnp.transpose(x_nchw, (0, 2, 3, 1)).astype(jnp.float32)
    xp = jnp.pad(x, ((0, 0), (3, 3), (3, 3), (0, 0)))
    y = _space_to_depth(xp)                                       # (N, 19, 19, 12)
    y = jnp.pad(y, ((0, 0), (0, 0), (0, 0), (0, 4))).astype(jnp.bfloat16)

    out = _fused_call(params, y)                                  # (N, 1, 128)
    n = out.shape[0]
    # final 4x4 avgpool is fused in-kernel; NHWC(1x1) -> NCHW.
    return out.reshape(n, 1, 1, 128).transpose(0, 3, 1, 2).astype(jnp.float32)


# ------------------------------------ main -------------------------------------

if __name__ == "__main__":
    key = jax.random.PRNGKey(0)
    pkey, xkey = jax.random.split(key)
    params = init_resnet_params(pkey, num_blocks=(1, 1))
    # (batch=2, C=3, 32x32): 32 -> conv7x7/2 -> 16 -> maxpool/2 -> 8
    #                           -> layer1 -> 8 -> layer2/2 -> 4 -> avgpool(4) -> 1
    x = jax.random.normal(xkey, (2, 3, 32, 32), jnp.float32)

    fwd = jax.jit(lambda xx: resnet_forward(params, xx))
    out = fwd(x)
    jax.block_until_ready(out)

    assert out.shape == (2, 128, 1, 1), out.shape
    assert bool(jnp.all(jnp.isfinite(out)))
    print("KERNEL_OK")
</pallas_src>

<mosaic_0001>
module attributes {stable_mosaic.version = 11 : i64} {
  func.func @_fused_resnet_kernel(%arg0: i32, %arg1: memref<1x19x19x16xbf16, #tpu.memory_space<vmem>>, %arg2: memref<256x64xbf16, #tpu.memory_space<vmem>>, %arg3: memref<1x64xf32, #tpu.memory_space<vmem>>, %arg4: memref<1x64xf32, #tpu.memory_space<vmem>>, %arg5: memref<576x64xbf16, #tpu.memory_space<vmem>>, %arg6: memref<1x64xf32, #tpu.memory_space<vmem>>, %arg7: memref<1x64xf32, #tpu.memory_space<vmem>>, %arg8: memref<576x64xbf16, #tpu.memory_space<vmem>>, %arg9: memref<1x64xf32, #tpu.memory_space<vmem>>, %arg10: memref<1x64xf32, #tpu.memory_space<vmem>>, %arg11: memref<576x128xbf16, #tpu.memory_space<vmem>>, %arg12: memref<1x128xf32, #tpu.memory_space<vmem>>, %arg13: memref<1x128xf32, #tpu.memory_space<vmem>>, %arg14: memref<1152x128xbf16, #tpu.memory_space<vmem>>, %arg15: memref<1x128xf32, #tpu.memory_space<vmem>>, %arg16: memref<1x128xf32, #tpu.memory_space<vmem>>, %arg17: memref<64x128xbf16, #tpu.memory_space<vmem>>, %arg18: memref<1x128xf32, #tpu.memory_space<vmem>>, %arg19: memref<1x128xf32, #tpu.memory_space<vmem>>, %arg20: memref<1x1x128xf32, #tpu.memory_space<vmem>>) attributes {dimension_semantics = [#tpu.dimension_semantics<parallel>], iteration_bounds = array<i64: 2>, scalar_prefetch = 0 : i64, scratch_operands = 0 : i64, tpu.core_type = #tpu.core_type<tc>, window_params = [{transform_indices = @transform_0, window_bounds = array<i64: 1, 19, 19, 16>}, {pipeline_mode = #tpu.pipeline_mode<synchronous>, transform_indices = @transform_1, window_bounds = array<i64: 256, 64>}, {pipeline_mode = #tpu.pipeline_mode<synchronous>, transform_indices = @transform_2, window_bounds = array<i64: 1, 64>}, {pipeline_mode = #tpu.pipeline_mode<synchronous>, transform_indices = @transform_3, window_bounds = array<i64: 1, 64>}, {pipeline_mode = #tpu.pipeline_mode<synchronous>, transform_indices = @transform_4, window_bounds = array<i64: 576, 64>}, {pipeline_mode = #tpu.pipeline_mode<synchronous>, transform_indices = @transform_5, window_bounds = array<i64: 1, 64>}, {pipeline_mode = #tpu.pipeline_mode<synchronous>, transform_indices = @transform_6, window_bounds = array<i64: 1, 64>}, {pipeline_mode = #tpu.pipeline_mode<synchronous>, transform_indices = @transform_7, window_bounds = array<i64: 576, 64>}, {pipeline_mode = #tpu.pipeline_mode<synchronous>, transform_indices = @transform_8, window_bounds = array<i64: 1, 64>}, {pipeline_mode = #tpu.pipeline_mode<synchronous>, transform_indices = @transform_9, window_bounds = array<i64: 1, 64>}, {pipeline_mode = #tpu.pipeline_mode<synchronous>, transform_indices = @transform_10, window_bounds = array<i64: 576, 128>}, {pipeline_mode = #tpu.pipeline_mode<synchronous>, transform_indices = @transform_11, window_bounds = array<i64: 1, 128>}, {pipeline_mode = #tpu.pipeline_mode<synchronous>, transform_indices = @transform_12, window_bounds = array<i64: 1, 128>}, {pipeline_mode = #tpu.pipeline_mode<synchronous>, transform_indices = @transform_13, window_bounds = array<i64: 1152, 128>}, {pipeline_mode = #tpu.pipeline_mode<synchronous>, transform_indices = @transform_14, window_bounds = array<i64: 1, 128>}, {pipeline_mode = #tpu.pipeline_mode<synchronous>, transform_indices = @transform_15, window_bounds = array<i64: 1, 128>}, {pipeline_mode = #tpu.pipeline_mode<synchronous>, transform_indices = @transform_16, window_bounds = array<i64: 64, 128>}, {pipeline_mode = #tpu.pipeline_mode<synchronous>, transform_indices = @transform_17, window_bounds = array<i64: 1, 128>}, {pipeline_mode = #tpu.pipeline_mode<synchronous>, transform_indices = @transform_18, window_bounds = array<i64: 1, 128>}, {transform_indices = @transform_19, window_bounds = array<i64: 1, 1, 128>}]} {
    %c0 = arith.constant 0 : index
    %c0_0 = arith.constant 0 : index
    %c0_1 = arith.constant 0 : index
    %c0_2 = arith.constant 0 : index
    %0 = vector.load %arg1[%c0, %c0_0, %c0_1, %c0_2] : memref<1x19x19x16xbf16, #tpu.memory_space<vmem>>, vector<1x19x19x16xbf16>
    %1 = vector.shape_cast %0 : vector<1x19x19x16xbf16> to vector<19x19x16xbf16>
    %c0_3 = arith.constant 0 : index
    %c0_4 = arith.constant 0 : index
    %2 = vector.load %arg2[%c0_3, %c0_4] : memref<256x64xbf16, #tpu.memory_space<vmem>>, vector<256x64xbf16>
    %3 = vector.extract_strided_slice %1 {offsets = [0, 0, 0], sizes = [16, 16, 16], strides = [1, 1, 1]} : vector<19x19x16xbf16> to vector<16x16x16xbf16>
    %4 = vector.extract_strided_slice %1 {offsets = [0, 1, 0], sizes = [16, 16, 16], strides = [1, 1, 1]} : vector<19x19x16xbf16> to vector<16x16x16xbf16>
    %5 = vector.extract_strided_slice %1 {offsets = [0, 2, 0], sizes = [16, 16, 16], strides = [1, 1, 1]} : vector<19x19x16xbf16> to vector<16x16x16xbf16>
    %6 = vector.extract_strided_slice %1 {offsets = [0, 3, 0], sizes = [16, 16, 16], strides = [1, 1, 1]} : vector<19x19x16xbf16> to vector<16x16x16xbf16>
    %7 = vector.extract_strided_slice %1 {offsets = [1, 0, 0], sizes = [16, 16, 16], strides = [1, 1, 1]} : vector<19x19x16xbf16> to vector<16x16x16xbf16>
    %8 = vector.extract_strided_slice %1 {offsets = [1, 1, 0], sizes = [16, 16, 16], strides = [1, 1, 1]} : vector<19x19x16xbf16> to vector<16x16x16xbf16>
    %9 = vector.extract_strided_slice %1 {offsets = [1, 2, 0], sizes = [16, 16, 16], strides = [1, 1, 1]} : vector<19x19x16xbf16> to vector<16x16x16xbf16>
    %10 = vector.extract_strided_slice %1 {offsets = [1, 3, 0], sizes = [16, 16, 16], strides = [1, 1, 1]} : vector<19x19x16xbf16> to vector<16x16x16xbf16>
    %11 = vector.extract_strided_slice %1 {offsets = [2, 0, 0], sizes = [16, 16, 16], strides = [1, 1, 1]} : vector<19x19x16xbf16> to vector<16x16x16xbf16>
    %12 = vector.extract_strided_slice %1 {offsets = [2, 1, 0], sizes = [16, 16, 16], strides = [1, 1, 1]} : vector<19x19x16xbf16> to vector<16x16x16xbf16>
    %13 = vector.extract_strided_slice %1 {offsets = [2, 2, 0], sizes = [16, 16, 16], strides = [1, 1, 1]} : vector<19x19x16xbf16> to vector<16x16x16xbf16>
    %14 = vector.extract_strided_slice %1 {offsets = [2, 3, 0], sizes = [16, 16, 16], strides = [1, 1, 1]} : vector<19x19x16xbf16> to vector<16x16x16xbf16>
    %15 = vector.extract_strided_slice %1 {offsets = [3, 0, 0], sizes = [16, 16, 16], strides = [1, 1, 1]} : vector<19x19x16xbf16> to vector<16x16x16xbf16>
    %16 = vector.extract_strided_slice %1 {offsets = [3, 1, 0], sizes = [16, 16, 16], strides = [1, 1, 1]} : vector<19x19x16xbf16> to vector<16x16x16xbf16>
    %17 = vector.extract_strided_slice %1 {offsets = [3, 2, 0], sizes = [16, 16, 16], strides = [1, 1, 1]} : vector<19x19x16xbf16> to vector<16x16x16xbf16>
    %18 = vector.extract_strided_slice %1 {offsets = [3, 3, 0], sizes = [16, 16, 16], strides = [1, 1, 1]} : vector<19x19x16xbf16> to vector<16x16x16xbf16>
    %19 = tpu.concatenate %3, %4, %5, %6, %7, %8, %9, %10, %11, %12, %13, %14, %15, %16, %17, %18 in 2 : vector<16x16x16xbf16>, vector<16x16x16xbf16>, vector<16x16x16xbf16>, vector<16x16x16xbf16>, vector<16x16x16xbf16>, vector<16x16x16xbf16>, vector<16x16x16xbf16>, vector<16x16x16xbf16>, vector<16x16x16xbf16>, vector<16x16x16xbf16>, vector<16x16x16xbf16>, vector<16x16x16xbf16>, vector<16x16x16xbf16>, vector<16x16x16xbf16>, vector<16x16x16xbf16>, vector<16x16x16xbf16> -> vector<16x16x256xbf16>
    %20 = vector.shape_cast %19 : vector<16x16x256xbf16> to vector<256x256xbf16>
    %cst = arith.constant dense<0.000000e+00> : vector<256x64xf32>
    %21 = tpu.matmul %20, %2, %cst {dimension_numbers = #tpu.dot_dimension_numbers<[1], [0], [0], [1], [0, 0, 1, 1], [], []>} : vector<256x256xbf16>, vector<256x64xbf16>, vector<256x64xf32> -> vector<256x64xf32>
    %c0_5 = arith.constant 0 : index
    %c0_6 = arith.constant 0 : index
    %22 = vector.load %arg3[%c0_5, %c0_6] : memref<1x64xf32, #tpu.memory_space<vmem>>, vector<1x64xf32>
    %23 = vector.broadcast %22 : vector<1x64xf32> to vector<256x64xf32>
    %24 = arith.mulf %21, %23 : vector<256x64xf32>
    %c0_7 = arith.constant 0 : index
    %c0_8 = arith.constant 0 : index
    %25 = vector.load %arg4[%c0_7, %c0_8] : memref<1x64xf32, #tpu.memory_space<vmem>>, vector<1x64xf32>
    %26 = vector.broadcast %25 : vector<1x64xf32> to vector<256x64xf32>
    %27 = arith.addf %24, %26 : vector<256x64xf32>
    %cst_9 = arith.constant 0.000000e+00 : f32
    %28 = vector.broadcast %cst_9 : f32 to vector<256x64xf32>
    %29 = arith.maximumf %27, %28 : vector<256x64xf32>
    %30 = vector.shape_cast %29 : vector<256x64xf32> to vector<16x16x64xf32>
    %cst_10 = arith.constant 0.000000e+00 : f32
    %31 = vector.broadcast %cst_10 : f32 to vector<16x1x64xf32>
    %cst_11 = arith.constant 0.000000e+00 : f32
    %32 = vector.broadcast %cst_11 : f32 to vector<16x1x64xf32>
    %33 = tpu.concatenate %31, %30, %32 in 1 : vector<16x1x64xf32>, vector<16x16x64xf32>, vector<16x1x64xf32> -> vector<16x18x64xf32>
    %cst_12 = arith.constant 0.000000e+00 : f32
    %34 = vector.broadcast %cst_12 : f32 to vector<1x18x64xf32>
    %cst_13 = arith.constant 0.000000e+00 : f32
    %35 = vector.broadcast %cst_13 : f32 to vector<1x18x64xf32>
    %36 = tpu.concatenate %34, %33, %35 in 0 : vector<1x18x64xf32>, vector<16x18x64xf32>, vector<1x18x64xf32> -> vector<18x18x64xf32>
    %37 = vector.extract_strided_slice %36 {offsets = [0, 0, 0], sizes = [16, 18, 64], strides = [1, 1, 1]} : vector<18x18x64xf32> to vector<16x18x64xf32>
    %38 = vector.extract_strided_slice %36 {offsets = [1, 0, 0], sizes = [16, 18, 64], strides = [1, 1, 1]} : vector<18x18x64xf32> to vector<16x18x64xf32>
    %39 = arith.maximumf %37, %38 : vector<16x18x64xf32>
    %40 = vector.extract_strided_slice %36 {offsets = [2, 0, 0], sizes = [16, 18, 64], strides = [1, 1, 1]} : vector<18x18x64xf32> to vector<16x18x64xf32>
    %41 = arith.maximumf %39, %40 : vector<16x18x64xf32>
    %42 = vector.extract_strided_slice %41 {offsets = [0, 0, 0], sizes = [1, 18, 64], strides = [1, 1, 1]} : vector<16x18x64xf32> to vector<1x18x64xf32>
    %43 = vector.extract_strided_slice %41 {offsets = [2, 0, 0], sizes = [1, 18, 64], strides = [1, 1, 1]} : vector<16x18x64xf32> to vector<1x18x64xf32>
    %44 = vector.extract_strided_slice %41 {offsets = [4, 0, 0], sizes = [1, 18, 64], strides = [1, 1, 1]} : vector<16x18x64xf32> to vector<1x18x64xf32>
    %45 = vector.extract_strided_slice %41 {offsets = [6, 0, 0], sizes = [1, 18, 64], strides = [1, 1, 1]} : vector<16x18x64xf32> to vector<1x18x64xf32>
    %46 = vector.extract_strided_slice %41 {offsets = [8, 0, 0], sizes = [1, 18, 64], strides = [1, 1, 1]} : vector<16x18x64xf32> to vector<1x18x64xf32>
    %47 = vector.extract_strided_slice %41 {offsets = [10, 0, 0], sizes = [1, 18, 64], strides = [1, 1, 1]} : vector<16x18x64xf32> to vector<1x18x64xf32>
    %48 = vector.extract_strided_slice %41 {offsets = [12, 0, 0], sizes = [1, 18, 64], strides = [1, 1, 1]} : vector<16x18x64xf32> to vector<1x18x64xf32>
    %49 = vector.extract_strided_slice %41 {offsets = [14, 0, 0], sizes = [1, 18, 64], strides = [1, 1, 1]} : vector<16x18x64xf32> to vector<1x18x64xf32>
    %50 = tpu.concatenate %42, %43, %44, %45, %46, %47, %48, %49 in 0 : vector<1x18x64xf32>, vector<1x18x64xf32>, vector<1x18x64xf32>, vector<1x18x64xf32>, vector<1x18x64xf32>, vector<1x18x64xf32>, vector<1x18x64xf32>, vector<1x18x64xf32> -> vector<8x18x64xf32>
    %51 = vector.extract_strided_slice %50 {offsets = [0, 0, 0], sizes = [8, 16, 64], strides = [1, 1, 1]} : vector<8x18x64xf32> to vector<8x16x64xf32>
    %52 = vector.extract_strided_slice %50 {offsets = [0, 1, 0], sizes = [8, 16, 64], strides = [1, 1, 1]} : vector<8x18x64xf32> to vector<8x16x64xf32>
    %53 = arith.maximumf %51, %52 : vector<8x16x64xf32>
    %54 = vector.extract_strided_slice %50 {offsets = [0, 2, 0], sizes = [8, 16, 64], strides = [1, 1, 1]} : vector<8x18x64xf32> to vector<8x16x64xf32>
    %55 = arith.maximumf %53, %54 : vector<8x16x64xf32>
    %56 = vector.extract_strided_slice %55 {offsets = [0, 0, 0], sizes = [8, 1, 64], strides = [1, 1, 1]} : vector<8x16x64xf32> to vector<8x1x64xf32>
    %57 = vector.extract_strided_slice %55 {offsets = [0, 2, 0], sizes = [8, 1, 64], strides = [1, 1, 1]} : vector<8x16x64xf32> to vector<8x1x64xf32>
    %58 = vector.extract_strided_slice %55 {offsets = [0, 4, 0], sizes = [8, 1, 64], strides = [1, 1, 1]} : vector<8x16x64xf32> to vector<8x1x64xf32>
    %59 = vector.extract_strided_slice %55 {offsets = [0, 6, 0], sizes = [8, 1, 64], strides = [1, 1, 1]} : vector<8x16x64xf32> to vector<8x1x64xf32>
    %60 = vector.extract_strided_slice %55 {offsets = [0, 8, 0], sizes = [8, 1, 64], strides = [1, 1, 1]} : vector<8x16x64xf32> to vector<8x1x64xf32>
    %61 = vector.extract_strided_slice %55 {offsets = [0, 10, 0], sizes = [8, 1, 64], strides = [1, 1, 1]} : vector<8x16x64xf32> to vector<8x1x64xf32>
    %62 = vector.extract_strided_slice %55 {offsets = [0, 12, 0], sizes = [8, 1, 64], strides = [1, 1, 1]} : vector<8x16x64xf32> to vector<8x1x64xf32>
    %63 = vector.extract_strided_slice %55 {offsets = [0, 14, 0], sizes = [8, 1, 64], strides = [1, 1, 1]} : vector<8x16x64xf32> to vector<8x1x64xf32>
    %64 = tpu.concatenate %56, %57, %58, %59, %60, %61, %62, %63 in 1 : vector<8x1x64xf32>, vector<8x1x64xf32>, vector<8x1x64xf32>, vector<8x1x64xf32>, vector<8x1x64xf32>, vector<8x1x64xf32>, vector<8x1x64xf32>, vector<8x1x64xf32> -> vector<8x8x64xf32>
    %cst_14 = arith.constant 0.000000e+00 : f32
    %65 = vector.broadcast %cst_14 : f32 to vector<8x1x64xf32>
    %cst_15 = arith.constant 0.000000e+00 : f32
    %66 = vector.broadcast %cst_15 : f32 to vector<8x1x64xf32>
    %67 = tpu.concatenate %65, %64, %66 in 1 : vector<8x1x64xf32>, vector<8x8x64xf32>, vector<8x1x64xf32> -> vector<8x10x64xf32>
    %cst_16 = arith.constant 0.000000e+00 : f32
    %68 = vector.broadcast %cst_16 : f32 to vector<1x10x64xf32>
    %cst_17 = arith.constant 0.000000e+00 : f32
    %69 = vector.broadcast %cst_17 : f32 to vector<1x10x64xf32>
    %70 = tpu.concatenate %68, %67, %69 in 0 : vector<1x10x64xf32>, vector<8x10x64xf32>, vector<1x10x64xf32> -> vector<10x10x64xf32>
    %c0_18 = arith.constant 0 : index
    %c0_19 = arith.constant 0 : index
    %71 = vector.load %arg5[%c0_18, %c0_19] : memref<576x64xbf16, #tpu.memory_space<vmem>>, vector<576x64xbf16>
    %72 = vector.extract_strided_slice %70 {offsets = [0, 0, 0], sizes = [8, 8, 64], strides = [1, 1, 1]} : vector<10x10x64xf32> to vector<8x8x64xf32>
    %73 = vector.extract_strided_slice %70 {offsets = [0, 1, 0], sizes = [8, 8, 64], strides = [1, 1, 1]} : vector<10x10x64xf32> to vector<8x8x64xf32>
    %74 = vector.extract_strided_slice %70 {offsets = [0, 2, 0], sizes = [8, 8, 64], strides = [1, 1, 1]} : vector<10x10x64xf32> to vector<8x8x64xf32>
    %75 = vector.extract_strided_slice %70 {offsets = [1, 0, 0], sizes = [8, 8, 64], strides = [1, 1, 1]} : vector<10x10x64xf32> to vector<8x8x64xf32>
    %76 = vector.extract_strided_slice %70 {offsets = [1, 1, 0], sizes = [8, 8, 64], strides = [1, 1, 1]} : vector<10x10x64xf32> to vector<8x8x64xf32>
    %77 = vector.extract_strided_slice %70 {offsets = [1, 2, 0], sizes = [8, 8, 64], strides = [1, 1, 1]} : vector<10x10x64xf32> to vector<8x8x64xf32>
    %78 = vector.extract_strided_slice %70 {offsets = [2, 0, 0], sizes = [8, 8, 64], strides = [1, 1, 1]} : vector<10x10x64xf32> to vector<8x8x64xf32>
    %79 = vector.extract_strided_slice %70 {offsets = [2, 1, 0], sizes = [8, 8, 64], strides = [1, 1, 1]} : vector<10x10x64xf32> to vector<8x8x64xf32>
    %80 = vector.extract_strided_slice %70 {offsets = [2, 2, 0], sizes = [8, 8, 64], strides = [1, 1, 1]} : vector<10x10x64xf32> to vector<8x8x64xf32>
    %81 = tpu.concatenate %72, %73, %74, %75, %76, %77, %78, %79, %80 in 2 : vector<8x8x64xf32>, vector<8x8x64xf32>, vector<8x8x64xf32>, vector<8x8x64xf32>, vector<8x8x64xf32>, vector<8x8x64xf32>, vector<8x8x64xf32>, vector<8x8x64xf32>, vector<8x8x64xf32> -> vector<8x8x576xf32>
    %82 = vector.shape_cast %81 : vector<8x8x576xf32> to vector<64x576xf32>
    %83 = arith.truncf %82 : vector<64x576xf32> to vector<64x576xbf16>
    %cst_20 = arith.constant dense<0.000000e+00> : vector<64x64xf32>
    %84 = tpu.matmul %83, %71, %cst_20 {dimension_numbers = #tpu.dot_dimension_numbers<[1], [0], [0], [1], [0, 0, 1, 1], [], []>} : vector<64x576xbf16>, vector<576x64xbf16>, vector<64x64xf32> -> vector<64x64xf32>
    %c0_21 = arith.constant 0 : index
    %c0_22 = arith.constant 0 : index
    %85 = vector.load %arg6[%c0_21, %c0_22] : memref<1x64xf32, #tpu.memory_space<vmem>>, vector<1x64xf32>
    %86 = vector.broadcast %85 : vector<1x64xf32> to vector<64x64xf32>
    %87 = arith.mulf %84, %86 : vector<64x64xf32>
    %c0_23 = arith.constant 0 : index
    %c0_24 = arith.constant 0 : index
    %88 = vector.load %arg7[%c0_23, %c0_24] : memref<1x64xf32, #tpu.memory_space<vmem>>, vector<1x64xf32>
    %89 = vector.broadcast %88 : vector<1x64xf32> to vector<64x64xf32>
    %90 = arith.addf %87, %89 : vector<64x64xf32>
    %cst_25 = arith.constant 0.000000e+00 : f32
    %91 = vector.broadcast %cst_25 : f32 to vector<64x64xf32>
    %92 = arith.maximumf %90, %91 : vector<64x64xf32>
    %93 = vector.shape_cast %92 : vector<64x64xf32> to vector<8x8x64xf32>
    %cst_26 = arith.constant 0.000000e+00 : f32
    %94 = vector.broadcast %cst_26 : f32 to vector<8x1x64xf32>
    %cst_27 = arith.constant 0.000000e+00 : f32
    %95 = vector.broadcast %cst_27 : f32 to vector<8x1x64xf32>
    %96 = tpu.concatenate %94, %93, %95 in 1 : vector<8x1x64xf32>, vector<8x8x64xf32>, vector<8x1x64xf32> -> vector<8x10x64xf32>
    %cst_28 = arith.constant 0.000000e+00 : f32
    %97 = vector.broadcast %cst_28 : f32 to vector<1x10x64xf32>
    %cst_29 = arith.constant 0.000000e+00 : f32
    %98 = vector.broadcast %cst_29 : f32 to vector<1x10x64xf32>
    %99 = tpu.concatenate %97, %96, %98 in 0 : vector<1x10x64xf32>, vector<8x10x64xf32>, vector<1x10x64xf32> -> vector<10x10x64xf32>
    %c0_30 = arith.constant 0 : index
    %c0_31 = arith.constant 0 : index
    %100 = vector.load %arg8[%c0_30, %c0_31] : memref<576x64xbf16, #tpu.memory_space<vmem>>, vector<576x64xbf16>
    %101 = vector.extract_strided_slice %99 {offsets = [0, 0, 0], sizes = [8, 8, 64], strides = [1, 1, 1]} : vector<10x10x64xf32> to vector<8x8x64xf32>
    %102 = vector.extract_strided_slice %99 {offsets = [0, 1, 0], sizes = [8, 8, 64], strides = [1, 1, 1]} : vector<10x10x64xf32> to vector<8x8x64xf32>
    %103 = vector.extract_strided_slice %99 {offsets = [0, 2, 0], sizes = [8, 8, 64], strides = [1, 1, 1]} : vector<10x10x64xf32> to vector<8x8x64xf32>
    %104 = vector.extract_strided_slice %99 {offsets = [1, 0, 0], sizes = [8, 8, 64], strides = [1, 1, 1]} : vector<10x10x64xf32> to vector<8x8x64xf32>
    %105 = vector.extract_strided_slice %99 {offsets = [1, 1, 0], sizes = [8, 8, 64], strides = [1, 1, 1]} : vector<10x10x64xf32> to vector<8x8x64xf32>
    %106 = vector.extract_strided_slice %99 {offsets = [1, 2, 0], sizes = [8, 8, 64], strides = [1, 1, 1]} : vector<10x10x64xf32> to vector<8x8x64xf32>
    %107 = vector.extract_strided_slice %99 {offsets = [2, 0, 0], sizes = [8, 8, 64], strides = [1, 1, 1]} : vector<10x10x64xf32> to vector<8x8x64xf32>
    %108 = vector.extract_strided_slice %99 {offsets = [2, 1, 0], sizes = [8, 8, 64], strides = [1, 1, 1]} : vector<10x10x64xf32> to vector<8x8x64xf32>
    %109 = vector.extract_strided_slice %99 {offsets = [2, 2, 0], sizes = [8, 8, 64], strides = [1, 1, 1]} : vector<10x10x64xf32> to vector<8x8x64xf32>
    %110 = tpu.concatenate %101, %102, %103, %104, %105, %106, %107, %108, %109 in 2 : vector<8x8x64xf32>, vector<8x8x64xf32>, vector<8x8x64xf32>, vector<8x8x64xf32>, vector<8x8x64xf32>, vector<8x8x64xf32>, vector<8x8x64xf32>, vector<8x8x64xf32>, vector<8x8x64xf32> -> vector<8x8x576xf32>
    %111 = vector.shape_cast %110 : vector<8x8x576xf32> to vector<64x576xf32>
    %112 = arith.truncf %111 : vector<64x576xf32> to vector<64x576xbf16>
    %cst_32 = arith.constant dense<0.000000e+00> : vector<64x64xf32>
    %113 = tpu.matmul %112, %100, %cst_32 {dimension_numbers = #tpu.dot_dimension_numbers<[1], [0], [0], [1], [0, 0, 1, 1], [], []>} : vector<64x576xbf16>, vector<576x64xbf16>, vector<64x64xf32> -> vector<64x64xf32>
    %c0_33 = arith.constant 0 : index
    %c0_34 = arith.constant 0 : index
    %114 = vector.load %arg9[%c0_33, %c0_34] : memref<1x64xf32, #tpu.memory_space<vmem>>, vector<1x64xf32>
    %115 = vector.broadcast %114 : vector<1x64xf32> to vector<64x64xf32>
    %116 = arith.mulf %113, %115 : vector<64x64xf32>
    %c0_35 = arith.constant 0 : index
    %c0_36 = arith.constant 0 : index
    %117 = vector.load %arg10[%c0_35, %c0_36] : memref<1x64xf32, #tpu.memory_space<vmem>>, vector<1x64xf32>
    %118 = vector.broadcast %117 : vector<1x64xf32> to vector<64x64xf32>
    %119 = arith.addf %116, %118 : vector<64x64xf32>
    %120 = vector.shape_cast %64 : vector<8x8x64xf32> to vector<64x64xf32>
    %121 = arith.addf %119, %120 : vector<64x64xf32>
    %cst_37 = arith.constant 0.000000e+00 : f32
    %122 = vector.broadcast %cst_37 : f32 to vector<64x64xf32>
    %123 = arith.maximumf %121, %122 : vector<64x64xf32>
    %124 = vector.shape_cast %123 : vector<64x64xf32> to vector<8x8x64xf32>
    %cst_38 = arith.constant 0.000000e+00 : f32
    %125 = vector.broadcast %cst_38 : f32 to vector<8x1x64xf32>
    %cst_39 = arith.constant 0.000000e+00 : f32
    %126 = vector.broadcast %cst_39 : f32 to vector<8x1x64xf32>
    %127 = tpu.concatenate %125, %124, %126 in 1 : vector<8x1x64xf32>, vector<8x8x64xf32>, vector<8x1x64xf32> -> vector<8x10x64xf32>
    %cst_40 = arith.constant 0.000000e+00 : f32
    %128 = vector.broadcast %cst_40 : f32 to vector<1x10x64xf32>
    %cst_41 = arith.constant 0.000000e+00 : f32
    %129 = vector.broadcast %cst_41 : f32 to vector<1x10x64xf32>
    %130 = tpu.concatenate %128, %127, %129 in 0 : vector<1x10x64xf32>, vector<8x10x64xf32>, vector<1x10x64xf32> -> vector<10x10x64xf32>
    %c0_42 = arith.constant 0 : index
    %c0_43 = arith.constant 0 : index
    %131 = vector.load %arg11[%c0_42, %c0_43] : memref<576x128xbf16, #tpu.memory_space<vmem>>, vector<576x128xbf16>
    %132 = vector.extract_strided_slice %130 {offsets = [0, 0, 0], sizes = [8, 8, 64], strides = [1, 1, 1]} : vector<10x10x64xf32> to vector<8x8x64xf32>
    %133 = vector.extract_strided_slice %130 {offsets = [0, 1, 0], sizes = [8, 8, 64], strides = [1, 1, 1]} : vector<10x10x64xf32> to vector<8x8x64xf32>
    %134 = vector.extract_strided_slice %130 {offsets = [0, 2, 0], sizes = [8, 8, 64], strides = [1, 1, 1]} : vector<10x10x64xf32> to vector<8x8x64xf32>
    %135 = vector.extract_strided_slice %130 {offsets = [1, 0, 0], sizes = [8, 8, 64], strides = [1, 1, 1]} : vector<10x10x64xf32> to vector<8x8x64xf32>
    %136 = vector.extract_strided_slice %130 {offsets = [1, 1, 0], sizes = [8, 8, 64], strides = [1, 1, 1]} : vector<10x10x64xf32> to vector<8x8x64xf32>
    %137 = vector.extract_strided_slice %130 {offsets = [1, 2, 0], sizes = [8, 8, 64], strides = [1, 1, 1]} : vector<10x10x64xf32> to vector<8x8x64xf32>
    %138 = vector.extract_strided_slice %130 {offsets = [2, 0, 0], sizes = [8, 8, 64], strides = [1, 1, 1]} : vector<10x10x64xf32> to vector<8x8x64xf32>
    %139 = vector.extract_strided_slice %130 {offsets = [2, 1, 0], sizes = [8, 8, 64], strides = [1, 1, 1]} : vector<10x10x64xf32> to vector<8x8x64xf32>
    %140 = vector.extract_strided_slice %130 {offsets = [2, 2, 0], sizes = [8, 8, 64], strides = [1, 1, 1]} : vector<10x10x64xf32> to vector<8x8x64xf32>
    %141 = tpu.concatenate %132, %133, %134, %135, %136, %137, %138, %139, %140 in 2 : vector<8x8x64xf32>, vector<8x8x64xf32>, vector<8x8x64xf32>, vector<8x8x64xf32>, vector<8x8x64xf32>, vector<8x8x64xf32>, vector<8x8x64xf32>, vector<8x8x64xf32>, vector<8x8x64xf32> -> vector<8x8x576xf32>
    %142 = vector.shape_cast %141 : vector<8x8x576xf32> to vector<64x576xf32>
    %143 = arith.truncf %142 : vector<64x576xf32> to vector<64x576xbf16>
    %cst_44 = arith.constant dense<0.000000e+00> : vector<64x128xf32>
    %144 = tpu.matmul %143, %131, %cst_44 {dimension_numbers = #tpu.dot_dimension_numbers<[1], [0], [0], [1], [0, 0, 1, 1], [], []>} : vector<64x576xbf16>, vector<576x128xbf16>, vector<64x128xf32> -> vector<64x128xf32>
    %145 = vector.shape_cast %144 : vector<64x128xf32> to vector<8x8x128xf32>
    %146 = vector.extract_strided_slice %145 {offsets = [0, 0, 0], sizes = [1, 8, 128], strides = [1, 1, 1]} : vector<8x8x128xf32> to vector<1x8x128xf32>
    %147 = vector.extract_strided_slice %145 {offsets = [2, 0, 0], sizes = [1, 8, 128], strides = [1, 1, 1]} : vector<8x8x128xf32> to vector<1x8x128xf32>
    %148 = vector.extract_strided_slice %145 {offsets = [4, 0, 0], sizes = [1, 8, 128], strides = [1, 1, 1]} : vector<8x8x128xf32> to vector<1x8x128xf32>
    %149 = vector.extract_strided_slice %145 {offsets = [6, 0, 0], sizes = [1, 8, 128], strides = [1, 1, 1]} : vector<8x8x128xf32> to vector<1x8x128xf32>
    %150 = tpu.concatenate %146, %147, %148, %149 in 0 : vector<1x8x128xf32>, vector<1x8x128xf32>, vector<1x8x128xf32>, vector<1x8x128xf32> -> vector<4x8x128xf32>
    %151 = vector.extract_strided_slice %150 {offsets = [0, 0, 0], sizes = [4, 1, 128], strides = [1, 1, 1]} : vector<4x8x128xf32> to vector<4x1x128xf32>
    %152 = vector.extract_strided_slice %150 {offsets = [0, 2, 0], sizes = [4, 1, 128], strides = [1, 1, 1]} : vector<4x8x128xf32> to vector<4x1x128xf32>
    %153 = vector.extract_strided_slice %150 {offsets = [0, 4, 0], sizes = [4, 1, 128], strides = [1, 1, 1]} : vector<4x8x128xf32> to vector<4x1x128xf32>
    %154 = vector.extract_strided_slice %150 {offsets = [0, 6, 0], sizes = [4, 1, 128], strides = [1, 1, 1]} : vector<4x8x128xf32> to vector<4x1x128xf32>
    %155 = tpu.concatenate %151, %152, %153, %154 in 1 : vector<4x1x128xf32>, vector<4x1x128xf32>, vector<4x1x128xf32>, vector<4x1x128xf32> -> vector<4x4x128xf32>
    %c0_45 = arith.constant 0 : index
    %c0_46 = arith.constant 0 : index
    %156 = vector.load %arg12[%c0_45, %c0_46] : memref<1x128xf32, #tpu.memory_space<vmem>>, vector<1x128xf32>
    %157 = vector.shape_cast %156 : vector<1x128xf32> to vector<1x1x128xf32>
    %158 = vector.broadcast %157 : vector<1x1x128xf32> to vector<4x4x128xf32>
    %159 = arith.mulf %155, %158 : vector<4x4x128xf32>
    %c0_47 = arith.constant 0 : index
    %c0_48 = arith.constant 0 : index
    %160 = vector.load %arg13[%c0_47, %c0_48] : memref<1x128xf32, #tpu.memory_space<vmem>>, vector<1x128xf32>
    %161 = vector.shape_cast %160 : vector<1x128xf32> to vector<1x1x128xf32>
    %162 = vector.broadcast %161 : vector<1x1x128xf32> to vector<4x4x128xf32>
    %163 = arith.addf %159, %162 : vector<4x4x128xf32>
    %cst_49 = arith.constant 0.000000e+00 : f32
    %164 = vector.broadcast %cst_49 : f32 to vector<4x4x128xf32>
    %165 = arith.maximumf %163, %164 : vector<4x4x128xf32>
    %cst_50 = arith.constant 0.000000e+00 : f32
    %166 = vector.broadcast %cst_50 : f32 to vector<4x1x128xf32>
    %cst_51 = arith.constant 0.000000e+00 : f32
    %167 = vector.broadcast %cst_51 : f32 to vector<4x5x128xf32>
    %168 = tpu.concatenate %166, %165, %167 in 1 : vector<4x1x128xf32>, vector<4x4x128xf32>, vector<4x5x128xf32> -> vector<4x10x128xf32>
    %cst_52 = arith.constant 0.000000e+00 : f32
    %169 = vector.broadcast %cst_52 : f32 to vector<1x10x128xf32>
    %cst_53 = arith.constant 0.000000e+00 : f32
    %170 = vector.broadcast %cst_53 : f32 to vector<1x10x128xf32>
    %171 = tpu.concatenate %169, %168, %170 in 0 : vector<1x10x128xf32>, vector<4x10x128xf32>, vector<1x10x128xf32> -> vector<6x10x128xf32>
    %c0_54 = arith.constant 0 : index
    %c0_55 = arith.constant 0 : index
    %172 = vector.load %arg14[%c0_54, %c0_55] : memref<1152x128xbf16, #tpu.memory_space<vmem>>, vector<1152x128xbf16>
    %173 = vector.extract_strided_slice %171 {offsets = [0, 0, 0], sizes = [4, 8, 128], strides = [1, 1, 1]} : vector<6x10x128xf32> to vector<4x8x128xf32>
    %174 = vector.extract_strided_slice %171 {offsets = [0, 1, 0], sizes = [4, 8, 128], strides = [1, 1, 1]} : vector<6x10x128xf32> to vector<4x8x128xf32>
    %175 = vector.extract_strided_slice %171 {offsets = [0, 2, 0], sizes = [4, 8, 128], strides = [1, 1, 1]} : vector<6x10x128xf32> to vector<4x8x128xf32>
    %176 = vector.extract_strided_slice %171 {offsets = [1, 0, 0], sizes = [4, 8, 128], strides = [1, 1, 1]} : vector<6x10x128xf32> to vector<4x8x128xf32>
    %177 = vector.extract_strided_slice %171 {offsets = [1, 1, 0], sizes = [4, 8, 128], strides = [1, 1, 1]} : vector<6x10x128xf32> to vector<4x8x128xf32>
    %178 = vector.extract_strided_slice %171 {offsets = [1, 2, 0], sizes = [4, 8, 128], strides = [1, 1, 1]} : vector<6x10x128xf32> to vector<4x8x128xf32>
    %179 = vector.extract_strided_slice %171 {offsets = [2, 0, 0], sizes = [4, 8, 128], strides = [1, 1, 1]} : vector<6x10x128xf32> to vector<4x8x128xf32>
    %180 = vector.extract_strided_slice %171 {offsets = [2, 1, 0], sizes = [4, 8, 128], strides = [1, 1, 1]} : vector<6x10x128xf32> to vector<4x8x128xf32>
    %181 = vector.extract_strided_slice %171 {offsets = [2, 2, 0], sizes = [4, 8, 128], strides = [1, 1, 1]} : vector<6x10x128xf32> to vector<4x8x128xf32>
    %182 = tpu.concatenate %173, %174, %175, %176, %177, %178, %179, %180, %181 in 2 : vector<4x8x128xf32>, vector<4x8x128xf32>, vector<4x8x128xf32>, vector<4x8x128xf32>, vector<4x8x128xf32>, vector<4x8x128xf32>, vector<4x8x128xf32>, vector<4x8x128xf32>, vector<4x8x128xf32> -> vector<4x8x1152xf32>
    %183 = vector.shape_cast %182 : vector<4x8x1152xf32> to vector<32x1152xf32>
    %184 = arith.truncf %183 : vector<32x1152xf32> to vector<32x1152xbf16>
    %cst_56 = arith.constant dense<0.000000e+00> : vector<32x128xf32>
    %185 = tpu.matmul %184, %172, %cst_56 {dimension_numbers = #tpu.dot_dimension_numbers<[1], [0], [0], [1], [0, 0, 1, 1], [], []>} : vector<32x1152xbf16>, vector<1152x128xbf16>, vector<32x128xf32> -> vector<32x128xf32>
    %186 = vector.shape_cast %185 : vector<32x128xf32> to vector<4x8x128xf32>
    %187 = vector.extract_strided_slice %186 {offsets = [0, 0, 0], sizes = [4, 4, 128], strides = [1, 1, 1]} : vector<4x8x128xf32> to vector<4x4x128xf32>
    %188 = arith.truncf %123 : vector<64x64xf32> to vector<64x64xbf16>
    %c0_57 = arith.constant 0 : index
    %c0_58 = arith.constant 0 : index
    %189 = vector.load %arg17[%c0_57, %c0_58] : memref<64x128xbf16, #tpu.memory_space<vmem>>, vector<64x128xbf16>
    %cst_59 = arith.constant dense<0.000000e+00> : vector<64x128xf32>
    %190 = tpu.matmul %188, %189, %cst_59 {dimension_numbers = #tpu.dot_dimension_numbers<[1], [0], [0], [1], [0, 0, 1, 1], [], []>} : vector<64x64xbf16>, vector<64x128xbf16>, vector<64x128xf32> -> vector<64x128xf32>
    %191 = vector.shape_cast %190 : vector<64x128xf32> to vector<8x8x128xf32>
    %192 = vector.extract_strided_slice %191 {offsets = [0, 0, 0], sizes = [1, 8, 128], strides = [1, 1, 1]} : vector<8x8x128xf32> to vector<1x8x128xf32>
    %193 = vector.extract_strided_slice %191 {offsets = [2, 0, 0], sizes = [1, 8, 128], strides = [1, 1, 1]} : vector<8x8x128xf32> to vector<1x8x128xf32>
    %194 = vector.extract_strided_slice %191 {offsets = [4, 0, 0], sizes = [1, 8, 128], strides = [1, 1, 1]} : vector<8x8x128xf32> to vector<1x8x128xf32>
    %195 = vector.extract_strided_slice %191 {offsets = [6, 0, 0], sizes = [1, 8, 128], strides = [1, 1, 1]} : vector<8x8x128xf32> to vector<1x8x128xf32>
    %196 = tpu.concatenate %192, %193, %194, %195 in 0 : vector<1x8x128xf32>, vector<1x8x128xf32>, vector<1x8x128xf32>, vector<1x8x128xf32> -> vector<4x8x128xf32>
    %197 = vector.extract_strided_slice %196 {offsets = [0, 0, 0], sizes = [4, 1, 128], strides = [1, 1, 1]} : vector<4x8x128xf32> to vector<4x1x128xf32>
    %198 = vector.extract_strided_slice %196 {offsets = [0, 2, 0], sizes = [4, 1, 128], strides = [1, 1, 1]} : vector<4x8x128xf32> to vector<4x1x128xf32>
    %199 = vector.extract_strided_slice %196 {offsets = [0, 4, 0], sizes = [4, 1, 128], strides = [1, 1, 1]} : vector<4x8x128xf32> to vector<4x1x128xf32>
    %200 = vector.extract_strided_slice %196 {offsets = [0, 6, 0], sizes = [4, 1, 128], strides = [1, 1, 1]} : vector<4x8x128xf32> to vector<4x1x128xf32>
    %201 = tpu.concatenate %197, %198, %199, %200 in 1 : vector<4x1x128xf32>, vector<4x1x128xf32>, vector<4x1x128xf32>, vector<4x1x128xf32> -> vector<4x4x128xf32>
    %c0_60 = arith.constant 0 : index
    %c0_61 = arith.constant 0 : index
    %202 = vector.load %arg15[%c0_60, %c0_61] : memref<1x128xf32, #tpu.memory_space<vmem>>, vector<1x128xf32>
    %203 = vector.shape_cast %202 : vector<1x128xf32> to vector<1x1x128xf32>
    %204 = vector.broadcast %203 : vector<1x1x128xf32> to vector<4x4x128xf32>
    %205 = arith.mulf %187, %204 : vector<4x4x128xf32>
    %c0_62 = arith.constant 0 : index
    %c0_63 = arith.constant 0 : index
    %206 = vector.load %arg16[%c0_62, %c0_63] : memref<1x128xf32, #tpu.memory_space<vmem>>, vector<1x128xf32>
    %207 = vector.shape_cast %206 : vector<1x128xf32> to vector<1x1x128xf32>
    %208 = vector.broadcast %207 : vector<1x1x128xf32> to vector<4x4x128xf32>
    %209 = arith.addf %205, %208 : vector<4x4x128xf32>
    %c0_64 = arith.constant 0 : index
    %c0_65 = arith.constant 0 : index
    %210 = vector.load %arg18[%c0_64, %c0_65] : memref<1x128xf32, #tpu.memory_space<vmem>>, vector<1x128xf32>
    %211 = vector.shape_cast %210 : vector<1x128xf32> to vector<1x1x128xf32>
    %212 = vector.broadcast %211 : vector<1x1x128xf32> to vector<4x4x128xf32>
    %213 = arith.mulf %201, %212 : vector<4x4x128xf32>
    %214 = arith.addf %209, %213 : vector<4x4x128xf32>
    %c0_66 = arith.constant 0 : index
    %c0_67 = arith.constant 0 : index
    %215 = vector.load %arg19[%c0_66, %c0_67] : memref<1x128xf32, #tpu.memory_space<vmem>>, vector<1x128xf32>
    %216 = vector.shape_cast %215 : vector<1x128xf32> to vector<1x1x128xf32>
    %217 = vector.broadcast %216 : vector<1x1x128xf32> to vector<4x4x128xf32>
    %218 = arith.addf %214, %217 : vector<4x4x128xf32>
    %cst_68 = arith.constant 0.000000e+00 : f32
    %219 = vector.broadcast %cst_68 : f32 to vector<4x4x128xf32>
    %220 = arith.maximumf %218, %219 : vector<4x4x128xf32>
    %cst_69 = arith.constant dense<0.000000e+00> : vector<4x128xf32>
    %221 = vector.multi_reduction <add>, %220, %cst_69 [0] : vector<4x4x128xf32> to vector<4x128xf32>
    %cst_70 = arith.constant dense<0.000000e+00> : vector<128xf32>
    %222 = vector.multi_reduction <add>, %221, %cst_70 [0] : vector<4x128xf32> to vector<128xf32>
    %223 = vector.shape_cast %222 : vector<128xf32> to vector<1x128xf32>
    %cst_71 = arith.constant 6.250000e-02 : f32
    %224 = vector.broadcast %cst_71 : f32 to vector<1x128xf32>
    %225 = arith.mulf %223, %224 : vector<1x128xf32>
    %c0_72 = arith.constant 0 : index
    %c0_73 = arith.constant 0 : index
    %c0_74 = arith.constant 0 : index
    %226 = vector.load %arg20[%c0_72, %c0_73, %c0_74] : memref<1x1x128xf32, #tpu.memory_space<vmem>>, vector<1x1x128xf32>
    %227 = vector.shape_cast %226 : vector<1x1x128xf32> to vector<1x128xf32>
    %228 = vector.shape_cast %225 : vector<1x128xf32> to vector<1x1x128xf32>
    tpu.vector_store %arg20[%c0_72, %c0_73, %c0_74], %228 {strides = array<i32>} : memref<1x1x128xf32, #tpu.memory_space<vmem>>, vector<1x1x128xf32>,
    return
  }
  func.func @transform_0(%arg0: i32) -> (i32, i32, i32, i32) {
    %c0_i32 = arith.constant 0 : i32
    %c0_i32_0 = arith.constant 0 : i32
    %c0_i32_1 = arith.constant 0 : i32
    %c0_i32_2 = arith.constant 0 : i32
    return %arg0, %c0_i32, %c0_i32_0, %c0_i32_1 : i32, i32, i32, i32
  }
  func.func @transform_1(%arg0: i32) -> (i32, i32) {
    %c0_i32 = arith.constant 0 : i32
    %c0_i32_0 = arith.constant 0 : i32
    %c0_i32_1 = arith.constant 0 : i32
    return %c0_i32, %c0_i32_0 : i32, i32
  }
  func.func @transform_2(%arg0: i32) -> (i32, i32) {
    %c0_i32 = arith.constant 0 : i32
    %c0_i32_0 = arith.constant 0 : i32
    %c0_i32_1 = arith.constant 0 : i32
    return %c0_i32, %c0_i32_0 : i32, i32
  }
  func.func @transform_3(%arg0: i32) -> (i32, i32) {
    %c0_i32 = arith.constant 0 : i32
    %c0_i32_0 = arith.constant 0 : i32
    %c0_i32_1 = arith.constant 0 : i32
    return %c0_i32, %c0_i32_0 : i32, i32
  }
  func.func @transform_4(%arg0: i32) -> (i32, i32) {
    %c0_i32 = arith.constant 0 : i32
    %c0_i32_0 = arith.constant 0 : i32
    %c0_i32_1 = arith.constant 0 : i32
    return %c0_i32, %c0_i32_0 : i32, i32
  }
  func.func @transform_5(%arg0: i32) -> (i32, i32) {
    %c0_i32 = arith.constant 0 : i32
    %c0_i32_0 = arith.constant 0 : i32
    %c0_i32_1 = arith.constant 0 : i32
    return %c0_i32, %c0_i32_0 : i32, i32
  }
  func.func @transform_6(%arg0: i32) -> (i32, i32) {
    %c0_i32 = arith.constant 0 : i32
    %c0_i32_0 = arith.constant 0 : i32
    %c0_i32_1 = arith.constant 0 : i32
    return %c0_i32, %c0_i32_0 : i32, i32
  }
  func.func @transform_7(%arg0: i32) -> (i32, i32) {
    %c0_i32 = arith.constant 0 : i32
    %c0_i32_0 = arith.constant 0 : i32
    %c0_i32_1 = arith.constant 0 : i32
    return %c0_i32, %c0_i32_0 : i32, i32
  }
  func.func @transform_8(%arg0: i32) -> (i32, i32) {
    %c0_i32 = arith.constant 0 : i32
    %c0_i32_0 = arith.constant 0 : i32
    %c0_i32_1 = arith.constant 0 : i32
    return %c0_i32, %c0_i32_0 : i32, i32
  }
  func.func @transform_9(%arg0: i32) -> (i32, i32) {
    %c0_i32 = arith.constant 0 : i32
    %c0_i32_0 = arith.constant 0 : i32
    %c0_i32_1 = arith.constant 0 : i32
    return %c0_i32, %c0_i32_0 : i32, i32
  }
  func.func @transform_10(%arg0: i32) -> (i32, i32) {
    %c0_i32 = arith.constant 0 : i32
    %c0_i32_0 = arith.constant 0 : i32
    %c0_i32_1 = arith.constant 0 : i32
    return %c0_i32, %c0_i32_0 : i32, i32
  }
  func.func @transform_11(%arg0: i32) -> (i32, i32) {
    %c0_i32 = arith.constant 0 : i32
    %c0_i32_0 = arith.constant 0 : i32
    %c0_i32_1 = arith.constant 0 : i32
    return %c0_i32, %c0_i32_0 : i32, i32
  }
  func.func @transform_12(%arg0: i32) -> (i32, i32) {
    %c0_i32 = arith.constant 0 : i32
    %c0_i32_0 = arith.constant 0 : i32
    %c0_i32_1 = arith.constant 0 : i32
    return %c0_i32, %c0_i32_0 : i32, i32
  }
  func.func @transform_13(%arg0: i32) -> (i32, i32) {
    %c0_i32 = arith.constant 0 : i32
    %c0_i32_0 = arith.constant 0 : i32
    %c0_i32_1 = arith.constant 0 : i32
    return %c0_i32, %c0_i32_0 : i32, i32
  }
  func.func @transform_14(%arg0: i32) -> (i32, i32) {
    %c0_i32 = arith.constant 0 : i32
    %c0_i32_0 = arith.constant 0 : i32
    %c0_i32_1 = arith.constant 0 : i32
    return %c0_i32, %c0_i32_0 : i32, i32
  }
  func.func @transform_15(%arg0: i32) -> (i32, i32) {
    %c0_i32 = arith.constant 0 : i32
    %c0_i32_0 = arith.constant 0 : i32
    %c0_i32_1 = arith.constant 0 : i32
    return %c0_i32, %c0_i32_0 : i32, i32
  }
  func.func @transform_16(%arg0: i32) -> (i32, i32) {
    %c0_i32 = arith.constant 0 : i32
    %c0_i32_0 = arith.constant 0 : i32
    %c0_i32_1 = arith.constant 0 : i32
    return %c0_i32, %c0_i32_0 : i32, i32
  }
  func.func @transform_17(%arg0: i32) -> (i32, i32) {
    %c0_i32 = arith.constant 0 : i32
    %c0_i32_0 = arith.constant 0 : i32
    %c0_i32_1 = arith.constant 0 : i32
    return %c0_i32, %c0_i32_0 : i32, i32
  }
  func.func @transform_18(%arg0: i32) -> (i32, i32) {
    %c0_i32 = arith.constant 0 : i32
    %c0_i32_0 = arith.constant 0 : i32
    %c0_i32_1 = arith.constant 0 : i32
    return %c0_i32, %c0_i32_0 : i32, i32
  }
  func.func @transform_19(%arg0: i32) -> (i32, i32, i32) {
    %c0_i32 = arith.constant 0 : i32
    %c0_i32_0 = arith.constant 0 : i32
    %c0_i32_1 = arith.constant 0 : i32
    return %arg0, %c0_i32, %c0_i32_0 : i32, i32, i32
  }
}

</mosaic_0001>

<llo_original>
// kernel: _lambda_.1
$region0: #{_lambda_.1}
  #allocation0 [shape = 'u32[]', space=smem, size = 0x4, offset = 0x4, fixed_abs, tag = 'smem constant byte address 0x4 - core index']
  #allocation1 [shape = 'u32[144,128]{1,0:T(1,128)}', space=vmem, size = 0x12000, scoped, tag = 'internal scratch']
  %s0 = inlined_call_operand.vmem [shape: bf16[2,19,19,16], index: 0, kind: input, shape index: {}]
  %s1 = inlined_call_operand.vmem [shape: bf16[256,64], index: 1, kind: input, shape index: {}]
  %s2 = inlined_call_operand.vmem [shape: f32[1,64], index: 2, kind: input, shape index: {}, may-alias: {2,5,8}]
  %s3 = inlined_call_operand.vmem [shape: f32[1,64], index: 3, kind: input, shape index: {}, may-alias: {3,6,9}]
  %s4 = inlined_call_operand.vmem [shape: bf16[576,64], index: 4, kind: input, shape index: {}]
  %s5 = inlined_call_operand.vmem [shape: f32[1,64], index: 5, kind: input, shape index: {}, may-alias: {2,5,8}]
  %s6 = inlined_call_operand.vmem [shape: f32[1,64], index: 6, kind: input, shape index: {}, may-alias: {3,6,9}]
  %s7 = inlined_call_operand.vmem [shape: bf16[576,64], index: 7, kind: input, shape index: {}]
  %s8 = inlined_call_operand.vmem [shape: f32[1,64], index: 8, kind: input, shape index: {}, may-alias: {2,5,8}]
  %s9 = inlined_call_operand.vmem [shape: f32[1,64], index: 9, kind: input, shape index: {}, may-alias: {3,6,9}]
  %s10 = inlined_call_operand.vmem [shape: bf16[576,128], index: 10, kind: input, shape index: {}]
  %s11 = inlined_call_operand.vmem [shape: f32[1,128], index: 11, kind: input, shape index: {}, may-alias: {11,14,17}]
  %s12 = inlined_call_operand.vmem [shape: f32[1,128], index: 12, kind: input, shape index: {}, may-alias: {12,15,18}]
  %s13 = inlined_call_operand.vmem [shape: bf16[1152,128], index: 13, kind: input, shape index: {}]
  %s14 = inlined_call_operand.vmem [shape: f32[1,128], index: 14, kind: input, shape index: {}, may-alias: {11,14,17}]
  %s15 = inlined_call_operand.vmem [shape: f32[1,128], index: 15, kind: input, shape index: {}, may-alias: {12,15,18}]
  %s16 = inlined_call_operand.vmem [shape: bf16[64,128], index: 16, kind: input, shape index: {}]
  %s17 = inlined_call_operand.vmem [shape: f32[1,128], index: 17, kind: input, shape index: {}, may-alias: {11,14,17}]
  %s18 = inlined_call_operand.vmem [shape: f32[1,128], index: 18, kind: input, shape index: {}, may-alias: {12,15,18}]
  %s19 = inlined_call_operand.hbm [shape: f32[2,1,128], index: 19, kind: output, shape index: {}]
  %s20 = sld [smem:[#allocation0]]
  $region109: #{_lambda_.1} parent=0
    _
  %s22 = ssub.s32 1, %s20
  %s23 = scalar_select 0, %s22, %s20
  $region1: #{_lambda_.1} parent=0
    #allocation2 [shape = 'u8[1024]{0}', space=vmem, size = 0x400, scoped, tag = 'output window, operand 0']
    #allocation3 [shape = 's32[2]{0}', space=sflag, size = 0x8, scoped, tag = 'scoped memory for _lambda_.1']
    %24 = vsyncpa [#allocation3], 0
    %s25 = scalar_lea.sflag [#allocation3], 1
    %26 = vsyncpa %s25, 0
    loop: start=0, step=1, limit=4
    $region2: #{_lambda_.1} parent=1 // loop_pre_header
      _
    $region3: #{_lambda_.1} parent=1 // loop_header
      %s28 = sphi 0, %s32
      %p29 = scmp.ge.s32.totalorder %s28, 4
      %s38 = sphi 0, %s40
      %s41 = sphi 0, %s38
      %s42 = sphi 0, %s41
      %s58 = sphi 0, %s42
      %s62 = sphi 0, %s62
      %s64 = sphi 0, %s62
      %s65 = sphi 0, %s64
      %s79 = sphi 0, %s65
      %s83 = sphi 0, %s83
      %s85 = sphi 0, %s83
      %s86 = sphi 0, %s85
      %s100 = sphi 0, %s86
      %s104 = sphi 0, %s104
      %s106 = sphi 0, %s104
      %s107 = sphi 0, %s106
      %s121 = sphi 0, %s107
      %s125 = sphi 0, %s125
      %s127 = sphi 0, %s125
      %s128 = sphi 0, %s127
      %s142 = sphi 0, %s128
      %s146 = sphi 0, %s146
      %s148 = sphi 0, %s146
      %s149 = sphi 0, %s148
      %s163 = sphi 0, %s149
      %s167 = sphi 0, %s167
      %s169 = sphi 0, %s167
      %s170 = sphi 0, %s169
      %s184 = sphi 0, %s170
      %s188 = sphi 0, %s188
      %s190 = sphi 0, %s188
      %s191 = sphi 0, %s190
      %s205 = sphi 0, %s191
      %s209 = sphi 0, %s209
      %s211 = sphi 0, %s209
      %s212 = sphi 0, %s211
      %s226 = sphi 0, %s212
      %s230 = sphi 0, %s230
      %s232 = sphi 0, %s230
      %s233 = sphi 0, %s232
      %s247 = sphi 0, %s233
      %s251 = sphi 0, %s251
      %s253 = sphi 0, %s251
      %s254 = sphi 0, %s253
      %s268 = sphi 0, %s254
      %s272 = sphi 0, %s272
      %s274 = sphi 0, %s272
      %s275 = sphi 0, %s274
      %s289 = sphi 0, %s275
      %s293 = sphi 0, %s293
      %s295 = sphi 0, %s293
      %s296 = sphi 0, %s295
      %s310 = sphi 0, %s296
      %s314 = sphi 0, %s314
      %s316 = sphi 0, %s314
      %s317 = sphi 0, %s316
      %s331 = sphi 0, %s317
      %s335 = sphi 0, %s335
      %s337 = sphi 0, %s335
      %s338 = sphi 0, %s337
      %s352 = sphi 0, %s338
      %s356 = sphi 0, %s356
      %s358 = sphi 0, %s356
      %s359 = sphi 0, %s358
      %s373 = sphi 0, %s359
      %s377 = sphi 0, %s377
      %s379 = sphi 0, %s377
      %s380 = sphi 0, %s379
      %s394 = sphi 0, %s380
      %s398 = sphi 0, %s398
      %s400 = sphi 0, %s398
      %s401 = sphi 0, %s400
      %s415 = sphi 0, %s401
      %s419 = sphi 0, %s419
      %s421 = sphi 0, %s419
      %s422 = sphi 0, %s421
      %s436 = sphi 0, %s422
      %s442 = sphi 0, %s444
      %s445 = sphi 0, %s442
      %s446 = sphi 0, %s445
      %s462 = sphi 0, %s446
    $region4: #{_lambda_.1} parent=1 // loop_header_branch
      %31 = sbr.rel (%p29) target = $region8
    $region5: #{_lambda_.1} parent=1 // loop_body
      %s33 = ssub.s32 %s28, 1
      %s34 = ssub.s32 %s28, 2
      %s35 = sadd.s32 %s28, 1
      %s36 = ssub.s32 %s28, %s35
      %p37 = scmp.eq.s32.totalorder %s36, 0
      %s39 = sadd.s32 %s38, 1
      %s40 = scalar_select %p37, %s38, %s39
      %p43 = pneg %p37
      %p44 = scmp.eq.s32.totalorder %s28, 1
      %p45 = por %p43, %p44
      %p46 = scmp.ne.s32.totalorder %s38, %s41
      %p47 = scmp.eq.s32.totalorder %s28, 0
      %p48 = por %p46, %p47
      %p49 = scmp.ne.s32.totalorder %s38, %s41
      %p50 = scmp.eq.s32.totalorder %s33, 1
      %p51 = por %p49, %p50
      %p52 = scmp.ne.s32.totalorder %s41, %s42
      %p53 = scmp.eq.s32.totalorder %s33, 0
      %p54 = por %p52, %p53
      %p55 = scmp.ne.s32.totalorder %s41, %s42
      %p56 = scmp.eq.s32.totalorder %s34, 1
      %p57 = por %p55, %p56
      %p59 = scmp.ne.s32.totalorder %s42, %s58
      %p60 = scmp.eq.s32.totalorder %s34, 0
      %p61 = por %p59, %p60
      %s63 = sadd.s32 %s62, 1
      %p66 = scmp.eq.s32.totalorder %s28, 1
      %p67 = scmp.ne.s32.totalorder %s62, %s64
      %p68 = scmp.eq.s32.totalorder %s28, 0
      %p69 = por %p67, %p68
      %p70 = scmp.ne.s32.totalorder %s62, %s64
      %p71 = scmp.eq.s32.totalorder %s33, 1
      %p72 = por %p70, %p71
      %p73 = scmp.ne.s32.totalorder %s64, %s65
      %p74 = scmp.eq.s32.totalorder %s33, 0
      %p75 = por %p73, %p74
      %p76 = scmp.ne.s32.totalorder %s64, %s65
      %p77 = scmp.eq.s32.totalorder %s34, 1
      %p78 = por %p76, %p77
      %p80 = scmp.ne.s32.totalorder %s65, %s79
      %p81 = scmp.eq.s32.totalorder %s34, 0
      %p82 = por %p80, %p81
      %s84 = sadd.s32 %s83, 1
      %p87 = scmp.eq.s32.totalorder %s28, 1
      %p88 = scmp.ne.s32.totalorder %s83, %s85
      %p89 = scmp.eq.s32.totalorder %s28, 0
      %p90 = por %p88, %p89
      %p91 = scmp.ne.s32.totalorder %s83, %s85
      %p92 = scmp.eq.s32.totalorder %s33, 1
      %p93 = por %p91, %p92
      %p94 = scmp.ne.s32.totalorder %s85, %s86
      %p95 = scmp.eq.s32.totalorder %s33, 0
      %p96 = por %p94, %p95
      %p97 = scmp.ne.s32.totalorder %s85, %s86
      %p98 = scmp.eq.s32.totalorder %s34, 1
      %p99 = por %p97, %p98
      %p101 = scmp.ne.s32.totalorder %s86, %s100
      %p102 = scmp.eq.s32.totalorder %s34, 0
      %p103 = por %p101, %p102
      %s105 = sadd.s32 %s104, 1
      %p108 = scmp.eq.s32.totalorder %s28, 1
      %p109 = scmp.ne.s32.totalorder %s104, %s106
      %p110 = scmp.eq.s32.totalorder %s28, 0
      %p111 = por %p109, %p110
      %p112 = scmp.ne.s32.totalorder %s104, %s106
      %p113 = scmp.eq.s32.totalorder %s33, 1
      %p114 = por %p112, %p113
      %p115 = scmp.ne.s32.totalorder %s106, %s107
      %p116 = scmp.eq.s32.totalorder %s33, 0
      %p117 = por %p115, %p116
      %p118 = scmp.ne.s32.totalorder %s106, %s107
      %p119 = scmp.eq.s32.totalorder %s34, 1
      %p120 = por %p118, %p119
      %p122 = scmp.ne.s32.totalorder %s107, %s121
      %p123 = scmp.eq.s32.totalorder %s34, 0
      %p124 = por %p122, %p123
      %s126 = sadd.s32 %s125, 1
      %p129 = scmp.eq.s32.totalorder %s28, 1
      %p130 = scmp.ne.s32.totalorder %s125, %s127
      %p131 = scmp.eq.s32.totalorder %s28, 0
      %p132 = por %p130, %p131
      %p133 = scmp.ne.s32.totalorder %s125, %s127
      %p134 = scmp.eq.s32.totalorder %s33, 1
      %p135 = por %p133, %p134
      %p136 = scmp.ne.s32.totalorder %s127, %s128
      %p137 = scmp.eq.s32.totalorder %s33, 0
      %p138 = por %p136, %p137
      %p139 = scmp.ne.s32.totalorder %s127, %s128
      %p140 = scmp.eq.s32.totalorder %s34, 1
      %p141 = por %p139, %p140
      %p143 = scmp.ne.s32.totalorder %s128, %s142
      %p144 = scmp.eq.s32.totalorder %s34, 0
      %p145 = por %p143, %p144
      %s147 = sadd.s32 %s146, 1
      %p150 = scmp.eq.s32.totalorder %s28, 1
      %p151 = scmp.ne.s32.totalorder %s146, %s148
      %p152 = scmp.eq.s32.totalorder %s28, 0
      %p153 = por %p151, %p152
      %p154 = scmp.ne.s32.totalorder %s146, %s148
      %p155 = scmp.eq.s32.totalorder %s33, 1
      %p156 = por %p154, %p155
      %p157 = scmp.ne.s32.totalorder %s148, %s149
      %p158 = scmp.eq.s32.totalorder %s33, 0
      %p159 = por %p157, %p158
      %p160 = scmp.ne.s32.totalorder %s148, %s149
      %p161 = scmp.eq.s32.totalorder %s34, 1
      %p162 = por %p160, %p161
      %p164 = scmp.ne.s32.totalorder %s149, %s163
      %p165 = scmp.eq.s32.totalorder %s34, 0
      %p166 = por %p164, %p165
      %s168 = sadd.s32 %s167, 1
      %p171 = scmp.eq.s32.totalorder %s28, 1
      %p172 = scmp.ne.s32.totalorder %s167, %s169
      %p173 = scmp.eq.s32.totalorder %s28, 0
      %p174 = por %p172, %p173
      %p175 = scmp.ne.s32.totalorder %s167, %s169
      %p176 = scmp.eq.s32.totalorder %s33, 1
      %p177 = por %p175, %p176
      %p178 = scmp.ne.s32.totalorder %s169, %s170
      %p179 = scmp.eq.s32.totalorder %s33, 0
      %p180 = por %p178, %p179
      %p181 = scmp.ne.s32.totalorder %s169, %s170
      %p182 = scmp.eq.s32.totalorder %s34, 1
      %p183 = por %p181, %p182
      %p185 = scmp.ne.s32.totalorder %s170, %s184
      %p186 = scmp.eq.s32.totalorder %s34, 0
      %p187 = por %p185, %p186
      %s189 = sadd.s32 %s188, 1
      %p192 = scmp.eq.s32.totalorder %s28, 1
      %p193 = scmp.ne.s32.totalorder %s188, %s190
      %p194 = scmp.eq.s32.totalorder %s28, 0
      %p195 = por %p193, %p194
      %p196 = scmp.ne.s32.totalorder %s188, %s190
      %p197 = scmp.eq.s32.totalorder %s33, 1
      %p198 = por %p196, %p197
      %p199 = scmp.ne.s32.totalorder %s190, %s191
      %p200 = scmp.eq.s32.totalorder %s33, 0
      %p201 = por %p199, %p200
      %p202 = scmp.ne.s32.totalorder %s190, %s191
      %p203 = scmp.eq.s32.totalorder %s34, 1
      %p204 = por %p202, %p203
      %p206 = scmp.ne.s32.totalorder %s191, %s205
      %p207 = scmp.eq.s32.totalorder %s34, 0
      %p208 = por %p206, %p207
      %s210 = sadd.s32 %s209, 1
      %p213 = scmp.eq.s32.totalorder %s28, 1
      %p214 = scmp.ne.s32.totalorder %s209, %s211
      %p215 = scmp.eq.s32.totalorder %s28, 0
      %p216 = por %p214, %p215
      %p217 = scmp.ne.s32.totalorder %s209, %s211
      %p218 = scmp.eq.s32.totalorder %s33, 1
      %p219 = por %p217, %p218
      %p220 = scmp.ne.s32.totalorder %s211, %s212
      %p221 = scmp.eq.s32.totalorder %s33, 0
      %p222 = por %p220, %p221
      %p223 = scmp.ne.s32.totalorder %s211, %s212
      %p224 = scmp.eq.s32.totalorder %s34, 1
      %p225 = por %p223, %p224
      %p227 = scmp.ne.s32.totalorder %s212, %s226
      %p228 = scmp.eq.s32.totalorder %s34, 0
      %p229 = por %p227, %p228
      %s231 = sadd.s32 %s230, 1
      %p234 = scmp.eq.s32.totalorder %s28, 1
      %p235 = scmp.ne.s32.totalorder %s230, %s232
      %p236 = scmp.eq.s32.totalorder %s28, 0
      %p237 = por %p235, %p236
      %p238 = scmp.ne.s32.totalorder %s230, %s232
      %p239 = scmp.eq.s32.totalorder %s33, 1
      %p240 = por %p238, %p239
      %p241 = scmp.ne.s32.totalorder %s232, %s233
      %p242 = scmp.eq.s32.totalorder %s33, 0
      %p243 = por %p241, %p242
      %p244 = scmp.ne.s32.totalorder %s232, %s233
      %p245 = scmp.eq.s32.totalorder %s34, 1
      %p246 = por %p244, %p245
      %p248 = scmp.ne.s32.totalorder %s233, %s247
      %p249 = scmp.eq.s32.totalorder %s34, 0
      %p250 = por %p248, %p249
      %s252 = sadd.s32 %s251, 1
      %p255 = scmp.eq.s32.totalorder %s28, 1
      %p256 = scmp.ne.s32.totalorder %s251, %s253
      %p257 = scmp.eq.s32.totalorder %s28, 0
      %p258 = por %p256, %p257
      %p259 = scmp.ne.s32.totalorder %s251, %s253
      %p260 = scmp.eq.s32.totalorder %s33, 1
      %p261 = por %p259, %p260
      %p262 = scmp.ne.s32.totalorder %s253, %s254
      %p263 = scmp.eq.s32.totalorder %s33, 0
      %p264 = por %p262, %p263
      %p265 = scmp.ne.s32.totalorder %s253, %s254
      %p266 = scmp.eq.s32.totalorder %s34, 1
      %p267 = por %p265, %p266
      %p269 = scmp.ne.s32.totalorder %s254, %s268
      %p270 = scmp.eq.s32.totalorder %s34, 0
      %p271 = por %p269, %p270
      %s273 = sadd.s32 %s272, 1
      %p276 = scmp.eq.s32.totalorder %s28, 1
      %p277 = scmp.ne.s32.totalorder %s272, %s274
      %p278 = scmp.eq.s32.totalorder %s28, 0
      %p279 = por %p277, %p278
      %p280 = scmp.ne.s32.totalorder %s272, %s274
      %p281 = scmp.eq.s32.totalorder %s33, 1
      %p282 = por %p280, %p281
      %p283 = scmp.ne.s32.totalorder %s274, %s275
      %p284 = scmp.eq.s32.totalorder %s33, 0
      %p285 = por %p283, %p284
      %p286 = scmp.ne.s32.totalorder %s274, %s275
      %p287 = scmp.eq.s32.totalorder %s34, 1
      %p288 = por %p286, %p287
      %p290 = scmp.ne.s32.totalorder %s275, %s289
      %p291 = scmp.eq.s32.totalorder %s34, 0
      %p292 = por %p290, %p291
      %s294 = sadd.s32 %s293, 1
      %p297 = scmp.eq.s32.totalorder %s28, 1
      %p298 = scmp.ne.s32.totalorder %s293, %s295
      %p299 = scmp.eq.s32.totalorder %s28, 0
      %p300 = por %p298, %p299
      %p301 = scmp.ne.s32.totalorder %s293, %s295
      %p302 = scmp.eq.s32.totalorder %s33, 1
      %p303 = por %p301, %p302
      %p304 = scmp.ne.s32.totalorder %s295, %s296
      %p305 = scmp.eq.s32.totalorder %s33, 0
      %p306 = por %p304, %p305
      %p307 = scmp.ne.s32.totalorder %s295, %s296
      %p308 = scmp.eq.s32.totalorder %s34, 1
      %p309 = por %p307, %p308
      %p311 = scmp.ne.s32.totalorder %s296, %s310
      %p312 = scmp.eq.s32.totalorder %s34, 0
      %p313 = por %p311, %p312
      %s315 = sadd.s32 %s314, 1
      %p318 = scmp.eq.s32.totalorder %s28, 1
      %p319 = scmp.ne.s32.totalorder %s314, %s316
      %p320 = scmp.eq.s32.totalorder %s28, 0
      %p321 = por %p319, %p320
      %p322 = scmp.ne.s32.totalorder %s314, %s316
      %p323 = scmp.eq.s32.totalorder %s33, 1
      %p324 = por %p322, %p323
      %p325 = scmp.ne.s32.totalorder %s316, %s317
      %p326 = scmp.eq.s32.totalorder %s33, 0
      %p327 = por %p325, %p326
      %p328 = scmp.ne.s32.totalorder %s316, %s317
      %p329 = scmp.eq.s32.totalorder %s34, 1
      %p330 = por %p328, %p329
      %p332 = scmp.ne.s32.totalorder %s317, %s331
      %p333 = scmp.eq.s32.totalorder %s34, 0
      %p334 = por %p332, %p333
      %s336 = sadd.s32 %s335, 1
      %p339 = scmp.eq.s32.totalorder %s28, 1
      %p340 = scmp.ne.s32.totalorder %s335, %s337
      %p341 = scmp.eq.s32.totalorder %s28, 0
      %p342 = por %p340, %p341
      %p343 = scmp.ne.s32.totalorder %s335, %s337
      %p344 = scmp.eq.s32.totalorder %s33, 1
      %p345 = por %p343, %p344
      %p346 = scmp.ne.s32.totalorder %s337, %s338
      %p347 = scmp.eq.s32.totalorder %s33, 0
      %p348 = por %p346, %p347
      %p349 = scmp.ne.s32.totalorder %s337, %s338
      %p350 = scmp.eq.s32.totalorder %s34, 1
      %p351 = por %p349, %p350
      %p353 = scmp.ne.s32.totalorder %s338, %s352
      %p354 = scmp.eq.s32.totalorder %s34, 0
      %p355 = por %p353, %p354
      %s357 = sadd.s32 %s356, 1
      %p360 = scmp.eq.s32.totalorder %s28, 1
      %p361 = scmp.ne.s32.totalorder %s356, %s358
      %p362 = scmp.eq.s32.totalorder %s28, 0
      %p363 = por %p361, %p362
      %p364 = scmp.ne.s32.totalorder %s356, %s358
      %p365 = scmp.eq.s32.totalorder %s33, 1
      %p366 = por %p364, %p365
      %p367 = scmp.ne.s32.totalorder %s358, %s359
      %p368 = scmp.eq.s32.totalorder %s33, 0
      %p369 = por %p367, %p368
      %p370 = scmp.ne.s32.totalorder %s358, %s359
      %p371 = scmp.eq.s32.totalorder %s34, 1
      %p372 = por %p370, %p371
      %p374 = scmp.ne.s32.totalorder %s359, %s373
      %p375 = scmp.eq.s32.totalorder %s34, 0
      %p376 = por %p374, %p375
      %s378 = sadd.s32 %s377, 1
      %p381 = scmp.eq.s32.totalorder %s28, 1
      %p382 = scmp.ne.s32.totalorder %s377, %s379
      %p383 = scmp.eq.s32.totalorder %s28, 0
      %p384 = por %p382, %p383
      %p385 = scmp.ne.s32.totalorder %s377, %s379
      %p386 = scmp.eq.s32.totalorder %s33, 1
      %p387 = por %p385, %p386
      %p388 = scmp.ne.s32.totalorder %s379, %s380
      %p389 = scmp.eq.s32.totalorder %s33, 0
      %p390 = por %p388, %p389
      %p391 = scmp.ne.s32.totalorder %s379, %s380
      %p392 = scmp.eq.s32.totalorder %s34, 1
      %p393 = por %p391, %p392
      %p395 = scmp.ne.s32.totalorder %s380, %s394
      %p396 = scmp.eq.s32.totalorder %s34, 0
      %p397 = por %p395, %p396
      %s399 = sadd.s32 %s398, 1
      %p402 = scmp.eq.s32.totalorder %s28, 1
      %p403 = scmp.ne.s32.totalorder %s398, %s400
      %p404 = scmp.eq.s32.totalorder %s28, 0
      %p405 = por %p403, %p404
      %p406 = scmp.ne.s32.totalorder %s398, %s400
      %p407 = scmp.eq.s32.totalorder %s33, 1
      %p408 = por %p406, %p407
      %p409 = scmp.ne.s32.totalorder %s400, %s401
      %p410 = scmp.eq.s32.totalorder %s33, 0
      %p411 = por %p409, %p410
      %p412 = scmp.ne.s32.totalorder %s400, %s401
      %p413 = scmp.eq.s32.totalorder %s34, 1
      %p414 = por %p412, %p413
      %p416 = scmp.ne.s32.totalorder %s401, %s415
      %p417 = scmp.eq.s32.totalorder %s34, 0
      %p418 = por %p416, %p417
      %s420 = sadd.s32 %s419, 1
      %p423 = scmp.eq.s32.totalorder %s28, 1
      %p424 = scmp.ne.s32.totalorder %s419, %s421
      %p425 = scmp.eq.s32.totalorder %s28, 0
      %p426 = por %p424, %p425
      %p427 = scmp.ne.s32.totalorder %s419, %s421
      %p428 = scmp.eq.s32.totalorder %s33, 1
      %p429 = por %p427, %p428
      %p430 = scmp.ne.s32.totalorder %s421, %s422
      %p431 = scmp.eq.s32.totalorder %s33, 0
      %p432 = por %p430, %p431
      %p433 = scmp.ne.s32.totalorder %s421, %s422
      %p434 = scmp.eq.s32.totalorder %s34, 1
      %p435 = por %p433, %p434
      %p437 = scmp.ne.s32.totalorder %s422, %s436
      %p438 = scmp.eq.s32.totalorder %s34, 0
      %p439 = por %p437, %p438
      %s440 = ssub.s32 %s28, %s35
      %p441 = scmp.eq.s32.totalorder %s440, 0
      %s443 = sadd.s32 %s442, 1
      %s444 = scalar_select %p441, %s442, %s443
      %p447 = pneg %p441
      %p448 = scmp.eq.s32.totalorder %s28, 1
      %p449 = por %p447, %p448
      %p450 = scmp.ne.s32.totalorder %s442, %s445
      %p451 = scmp.eq.s32.totalorder %s28, 0
      %p452 = por %p450, %p451
      %p453 = scmp.ne.s32.totalorder %s442, %s445
      %p454 = scmp.eq.s32.totalorder %s33, 1
      %p455 = por %p453, %p454
      %p456 = scmp.ne.s32.totalorder %s445, %s446
      %p457 = scmp.eq.s32.totalorder %s33, 0
      %p458 = por %p456, %p457
      %p459 = scmp.ne.s32.totalorder %s445, %s446
      %p460 = scmp.eq.s32.totalorder %s34, 1
      %p461 = por %p459, %p460
      %p463 = scmp.ne.s32.totalorder %s446, %s462
      %p464 = scmp.eq.s32.totalorder %s34, 0
      %p465 = por %p463, %p464
      %p466 = scmp.le.s32.totalorder 1, %s28
      %p467 = scmp.lt.s32.totalorder %s28, 3
      %p468 = pnand %p466, %p467
      %p469 = pneg %p468
      // Predicated region
      $region9: #{_lambda_.1} parent=5 // pred_check
        _
      $region10: #{_lambda_.1} parent=5 // pred_check_branch
        %471 = sbr.rel (%p468) target = $region12
      $region11: #{_lambda_.1} parent=5 // pred_region
        %s472 = ssub.s32 %s28, 1
        // Predicated region
        $region13: #{_lambda_.1} parent=11 // pred_check
          %p473 = pneg %p75
        $region14: #{_lambda_.1} parent=11 // pred_check_branch
          %475 = sbr.rel (%p473) target = $region16
        $region15: #{_lambda_.1} parent=11 // pred_region
          _
        $region16: #{_lambda_.1} parent=11 // pred_fallthru
          _
        // Predicated region
        $region17: #{_lambda_.1} parent=11 // pred_check
          %p476 = pneg %p96
        $region18: #{_lambda_.1} parent=11 // pred_check_branch
          %478 = sbr.rel (%p476) target = $region20
        $region19: #{_lambda_.1} parent=11 // pred_region
          _
        $region20: #{_lambda_.1} parent=11 // pred_fallthru
          _
        // Predicated region
        $region21: #{_lambda_.1} parent=11 // pred_check
          %p479 = pneg %p117
        $region22: #{_lambda_.1} parent=11 // pred_check_branch
          %481 = sbr.rel (%p479) target = $region24
        $region23: #{_lambda_.1} parent=11 // pred_region
          _
        $region24: #{_lambda_.1} parent=11 // pred_fallthru
          _
        // Predicated region
        $region25: #{_lambda_.1} parent=11 // pred_check
          %p482 = pneg %p138
        $region26: #{_lambda_.1} parent=11 // pred_check_branch
          %484 = sbr.rel (%p482) target = $region28
        $region27: #{_lambda_.1} parent=11 // pred_region
          _
        $region28: #{_lambda_.1} parent=11 // pred_fallthru
          _
        // Predicated region
        $region29: #{_lambda_.1} parent=11 // pred_check
          %p485 = pneg %p159
        $region30: #{_lambda_.1} parent=11 // pred_check_branch
          %487 = sbr.rel (%p485) target = $region32
        $region31: #{_lambda_.1} parent=11 // pred_region
          _
        $region32: #{_lambda_.1} parent=11 // pred_fallthru
          _
        // Predicated region
        $region33: #{_lambda_.1} parent=11 // pred_check
          %p488 = pneg %p180
        $region34: #{_lambda_.1} parent=11 // pred_check_branch
          %490 = sbr.rel (%p488) target = $region36
        $region35: #{_lambda_.1} parent=11 // pred_region
          _
        $region36: #{_lambda_.1} parent=11 // pred_fallthru
          _
        // Predicated region
        $region37: #{_lambda_.1} parent=11 // pred_check
          %p491 = pneg %p201
        $region38: #{_lambda_.1} parent=11 // pred_check_branch
          %493 = sbr.rel (%p491) target = $region40
        $region39: #{_lambda_.1} parent=11 // pred_region
          _
        $region40: #{_lambda_.1} parent=11 // pred_fallthru
          _
        // Predicated region
        $region41: #{_lambda_.1} parent=11 // pred_check
          %p494 = pneg %p222
        $region42: #{_lambda_.1} parent=11 // pred_check_branch
          %496 = sbr.rel (%p494) target = $region44
        $region43: #{_lambda_.1} parent=11 // pred_region
          _
        $region44: #{_lambda_.1} parent=11 // pred_fallthru
          _
        // Predicated region
        $region45: #{_lambda_.1} parent=11 // pred_check
          %p497 = pneg %p243
        $region46: #{_lambda_.1} parent=11 // pred_check_branch
          %499 = sbr.rel (%p497) target = $region48
        $region47: #{_lambda_.1} parent=11 // pred_region
          _
        $region48: #{_lambda_.1} parent=11 // pred_fallthru
          _
        // Predicated region
        $region49: #{_lambda_.1} parent=11 // pred_check
          %p500 = pneg %p264
        $region50: #{_lambda_.1} parent=11 // pred_check_branch
          %502 = sbr.rel (%p500) target = $region52
        $region51: #{_lambda_.1} parent=11 // pred_region
          _
        $region52: #{_lambda_.1} parent=11 // pred_fallthru
          _
        // Predicated region
        $region53: #{_lambda_.1} parent=11 // pred_check
          %p503 = pneg %p285
        $region54: #{_lambda_.1} parent=11 // pred_check_branch
          %505 = sbr.rel (%p503) target = $region56
        $region55: #{_lambda_.1} parent=11 // pred_region
          _
        $region56: #{_lambda_.1} parent=11 // pred_fallthru
          _
        // Predicated region
        $region57: #{_lambda_.1} parent=11 // pred_check
          %p506 = pneg %p306
        $region58: #{_lambda_.1} parent=11 // pred_check_branch
          %508 = sbr.rel (%p506) target = $region60
        $region59: #{_lambda_.1} parent=11 // pred_region
          _
        $region60: #{_lambda_.1} parent=11 // pred_fallthru
          _
        // Predicated region
        $region61: #{_lambda_.1} parent=11 // pred_check
          %p509 = pneg %p327
        $region62: #{_lambda_.1} parent=11 // pred_check_branch
          %511 = sbr.rel (%p509) target = $region64
        $region63: #{_lambda_.1} parent=11 // pred_region
          _
        $region64: #{_lambda_.1} parent=11 // pred_fallthru
          _
        // Predicated region
        $region65: #{_lambda_.1} parent=11 // pred_check
          %p512 = pneg %p348
        $region66: #{_lambda_.1} parent=11 // pred_check_branch
          %514 = sbr.rel (%p512) target = $region68
        $region67: #{_lambda_.1} parent=11 // pred_region
          _
        $region68: #{_lambda_.1} parent=11 // pred_fallthru
          _
        // Predicated region
        $region69: #{_lambda_.1} parent=11 // pred_check
          %p515 = pneg %p369
        $region70: #{_lambda_.1} parent=11 // pred_check_branch
          %517 = sbr.rel (%p515) target = $region72
        $region71: #{_lambda_.1} parent=11 // pred_region
          _
        $region72: #{_lambda_.1} parent=11 // pred_fallthru
          _
        // Predicated region
        $region73: #{_lambda_.1} parent=11 // pred_check
          %p518 = pneg %p390
        $region74: #{_lambda_.1} parent=11 // pred_check_branch
          %520 = sbr.rel (%p518) target = $region76
        $region75: #{_lambda_.1} parent=11 // pred_region
          _
        $region76: #{_lambda_.1} parent=11 // pred_fallthru
          _
        // Predicated region
        $region77: #{_lambda_.1} parent=11 // pred_check
          %p521 = pneg %p411
        $region78: #{_lambda_.1} parent=11 // pred_check_branch
          %523 = sbr.rel (%p521) target = $region80
        $region79: #{_lambda_.1} parent=11 // pred_region
          _
        $region80: #{_lambda_.1} parent=11 // pred_fallthru
          _
        // Predicated region
        $region81: #{_lambda_.1} parent=11 // pred_check
          %p524 = pneg %p432
        $region82: #{_lambda_.1} parent=11 // pred_check_branch
          %526 = sbr.rel (%p524) target = $region84
        $region83: #{_lambda_.1} parent=11 // pred_region
          _
        $region84: #{_lambda_.1} parent=11 // pred_fallthru
          _
      $region12: #{_lambda_.1} parent=5 // pred_fallthru
        _
      %p527 = scmp.lt.s32.totalorder %s28, 2
      // Predicated region
      $region85: #{_lambda_.1} parent=5 // pred_check
        %p528 = pneg %p527
      $region86: #{_lambda_.1} parent=5 // pred_check_branch
        %530 = sbr.rel (%p528) target = $region88
      $region87: #{_lambda_.1} parent=5 // pred_region
        // Predicated region
        $region89: #{_lambda_.1} parent=87 // pred_check
          %p531 = pneg %p48
        $region90: #{_lambda_.1} parent=87 // pred_check_branch
          %533 = sbr.rel (%p531) target = $region92
        $region91: #{_lambda_.1} parent=87 // pred_region
          %p534 = scmp.lt.s32.totalorder %s28, 1
          %s535 = scalar_select %p534, %s28, 1
          %s536 = smul.addr %s535, 57
          %s537 = smul.addr %s536, 4
          %s538 = scalar_lea.vmem %s0, %s537
        $region92: #{_lambda_.1} parent=87 // pred_fallthru
          _
      $region88: #{_lambda_.1} parent=5 // pred_fallthru
        _
      %p539 = scmp.le.s32.totalorder 1, %s28
      %p540 = scmp.lt.s32.totalorder %s28, 3
      %p541 = pnand %p539, %p540
      %p542 = pneg %p541
      // Predicated region
      $region93: #{_lambda_.1} parent=5 // pred_check
        _
      $region94: #{_lambda_.1} parent=5 // pred_check_branch
        %544 = sbr.rel (%p541) target = $region96
      $region95: #{_lambda_.1} parent=5 // pred_region
        %s545 = ssub.s32 %s28, 1
        %p546 = scmp.lt.s32.totalorder %s33, 1
        %s547 = scalar_select %p546, %s33, 1
        %s548 = smul.addr %s547, 57
        %s549 = smul.addr %s548, 4
        %s550 = scalar_lea.vmem %s0, %s549
        %p551 = pneg %p54
        %p552 = pneg %p51
        %p553 = pneg %p75
        %p554 = pneg %p72
        %p555 = pneg %p96
        %p556 = pneg %p93
        %p557 = pneg %p117
        %p558 = pneg %p114
        %p559 = pneg %p138
        %p560 = pneg %p135
        %p561 = pneg %p159
        %p562 = pneg %p156
        %p563 = pneg %p180
        %p564 = pneg %p177
        %p565 = pneg %p201
        %p566 = pneg %p198
        %p567 = pneg %p222
        %p568 = pneg %p219
        %p569 = pneg %p243
        %p570 = pneg %p240
        %p571 = pneg %p264
        %p572 = pneg %p261
        %p573 = pneg %p285
        %p574 = pneg %p282
        %p575 = pneg %p306
        %p576 = pneg %p303
        %p577 = pneg %p327
        %p578 = pneg %p324
        %p579 = pneg %p348
        %p580 = pneg %p345
        %p581 = pneg %p369
        %p582 = pneg %p366
        %p583 = pneg %p390
        %p584 = pneg %p387
        %p585 = pneg %p411
        %p586 = pneg %p408
        %p587 = pneg %p432
        %p588 = pneg %p429
        %p589 = pneg %p458
        %p590 = pneg %p455
        %s591 = sand.u32 %s445, 1
        %s592 = scalar_lea.sflag [#allocation3], %s591
        %s593 = sand.u32 %s445, 1
        %s594 = scalar_lea.vmem [#allocation2], %s593
        %p595 = scmp.lt.s32.totalorder %s33, 1
        %s596 = scalar_select %p595, %s33, 1
        %s597 = smul.addr %s596, 57
        %s598 = smul.addr %s597, 4
        %s599 = scalar_lea.vmem %s0, %s598
        %v601 = vld [vmem:[%s599] sm:$0xf]
        %v602 = vld [vmem:[%s599 + $0x4] sm:$0xf]
        %v603 = vld [vmem:[%s599 + $0x8] sm:$0x3]
        %v604 = vld [vmem:[%s599 + $0xc] sm:$0xf]
        %v605 = vld [vmem:[%s599 + $0x10] sm:$0xf]
        %v606 = vld [vmem:[%s599 + $0x14] sm:$0x3]
        %v607 = vld [vmem:[%s599 + $0x18] sm:$0xf]
        %v608 = vld [vmem:[%s599 + $0x1c] sm:$0xf]
        %v609 = vld [vmem:[%s599 + $0x20] sm:$0x3]
        %v610 = vld [vmem:[%s599 + $0x24] sm:$0xf]
        %v611 = vld [vmem:[%s599 + $0x28] sm:$0xf]
        %v612 = vld [vmem:[%s599 + $0x2c] sm:$0x3]
        %v613 = vld [vmem:[%s599 + $0x30] sm:$0xf]
        %v614 = vld [vmem:[%s599 + $0x34] sm:$0xf]
        %v615 = vld [vmem:[%s599 + $0x38] sm:$0x3]
        %v616 = vld [vmem:[%s599 + $0x3c] sm:$0xf]
        %v617 = vld [vmem:[%s599 + $0x40] sm:$0xf]
        %v618 = vld [vmem:[%s599 + $0x44] sm:$0x3]
        %v619 = vld [vmem:[%s599 + $0x48] sm:$0xf]
        %v620 = vld [vmem:[%s599 + $0x4c] sm:$0xf]
        %v621 = vld [vmem:[%s599 + $0x50] sm:$0x3]
        %v622 = vld [vmem:[%s599 + $0x54] sm:$0xf]
        %v623 = vld [vmem:[%s599 + $0x58] sm:$0xf]
        %v624 = vld [vmem:[%s599 + $0x5c] sm:$0x3]
        %v625 = vld [vmem:[%s599 + $0x60] sm:$0xf]
        %v626 = vld [vmem:[%s599 + $0x64] sm:$0xf]
        %v627 = vld [vmem:[%s599 + $0x68] sm:$0x3]
        %v628 = vld [vmem:[%s599 + $0x6c] sm:$0xf]
        %v629 = vld [vmem:[%s599 + $0x70] sm:$0xf]
        %v630 = vld [vmem:[%s599 + $0x74] sm:$0x3]
        %v631 = vld [vmem:[%s599 + $0x78] sm:$0xf]
        %v632 = vld [vmem:[%s599 + $0x7c] sm:$0xf]
        %v633 = vld [vmem:[%s599 + $0x80] sm:$0x3]
        %v634 = vld [vmem:[%s599 + $0x84] sm:$0xf]
        %v635 = vld [vmem:[%s599 + $0x88] sm:$0xf]
        %v636 = vld [vmem:[%s599 + $0x8c] sm:$0x3]
        %v637 = vld [vmem:[%s599 + $0x90] sm:$0xf]
        %v638 = vld [vmem:[%s599 + $0x94] sm:$0xf]
        %v639 = vld [vmem:[%s599 + $0x98] sm:$0x3]
        %v640 = vld [vmem:[%s599 + $0x9c] sm:$0xf]
        %v641 = vld [vmem:[%s599 + $0xa0] sm:$0xf]
        %v642 = vld [vmem:[%s599 + $0xa4] sm:$0x3]
        %v643 = vld [vmem:[%s599 + $0xa8] sm:$0xf]
        %v644 = vld [vmem:[%s599 + $0xac] sm:$0xf]
        %v645 = vld [vmem:[%s599 + $0xb0] sm:$0x3]
        %v646 = vld [vmem:[%s599 + $0xb4] sm:$0xf]
        %v647 = vld [vmem:[%s599 + $0xb8] sm:$0xf]
        %v648 = vld [vmem:[%s599 + $0xbc] sm:$0x3]
        %v649 = vld [vmem:[%s599 + $0xc0] sm:$0xf]
        %v650 = vld [vmem:[%s599 + $0xc4] sm:$0xf]
        %v651 = vld [vmem:[%s599 + $0xc8] sm:$0x3]
        %v652 = vld [vmem:[%s599 + $0xcc] sm:$0xf]
        %v653 = vld [vmem:[%s599 + $0xd0] sm:$0xf]
        %v654 = vld [vmem:[%s599 + $0xd4] sm:$0x3]
        %v655 = vld [vmem:[%s599 + $0xd8] sm:$0xf]
        %v656 = vld [vmem:[%s599 + $0xdc] sm:$0xf]
        %v657 = vld [vmem:[%s599 + $0xe0] sm:$0x3]
        %v658 = vld [vmem:[%s1] sm:$0xf]
        %v659 = vld [vmem:[%s1 + $0x4] sm:$0xf]
        %v660 = vld [vmem:[%s1 + $0x8] sm:$0xf]
        %v661 = vld [vmem:[%s1 + $0xc] sm:$0xf]
        %v662 = vld [vmem:[%s1 + $0x10] sm:$0xf]
        %v663 = vld [vmem:[%s1 + $0x14] sm:$0xf]
        %v664 = vld [vmem:[%s1 + $0x18] sm:$0xf]
        %v665 = vld [vmem:[%s1 + $0x1c] sm:$0xf]
        %v666 = vld [vmem:[%s1 + $0x20] sm:$0xf]
        %v667 = vld [vmem:[%s1 + $0x24] sm:$0xf]
        %v668 = vld [vmem:[%s1 + $0x28] sm:$0xf]
        %v669 = vld [vmem:[%s1 + $0x2c] sm:$0xf]
        %v670 = vld [vmem:[%s1 + $0x30] sm:$0xf]
        %v671 = vld [vmem:[%s1 + $0x34] sm:$0xf]
        %v672 = vld [vmem:[%s1 + $0x38] sm:$0xf]
        %v673 = vld [vmem:[%s1 + $0x3c] sm:$0xf]
        %v674 = vld [vmem:[%s1 + $0x40] sm:$0xf]
        %v675 = vld [vmem:[%s1 + $0x44] sm:$0xf]
        %v676 = vld [vmem:[%s1 + $0x48] sm:$0xf]
        %v677 = vld [vmem:[%s1 + $0x4c] sm:$0xf]
        %v678 = vld [vmem:[%s1 + $0x50] sm:$0xf]
        %v679 = vld [vmem:[%s1 + $0x54] sm:$0xf]
        %v680 = vld [vmem:[%s1 + $0x58] sm:$0xf]
        %v681 = vld [vmem:[%s1 + $0x5c] sm:$0xf]
        %v682 = vld [vmem:[%s1 + $0x60] sm:$0xf]
        %v683 = vld [vmem:[%s1 + $0x64] sm:$0xf]
        %v684 = vld [vmem:[%s1 + $0x68] sm:$0xf]
        %v685 = vld [vmem:[%s1 + $0x6c] sm:$0xf]
        %v686 = vld [vmem:[%s1 + $0x70] sm:$0xf]
        %v687 = vld [vmem:[%s1 + $0x74] sm:$0xf]
        %v688 = vld [vmem:[%s1 + $0x78] sm:$0xf]
        %v689 = vld [vmem:[%s1 + $0x7c] sm:$0xf]
        %v722 = vunpack.c.l.b16 %v601
        %v723 = vunpack.c.l.b16 %v602
        %v724 = vunpack.c.l.b16 %v604
        %v725 = vunpack.c.l.b16 %v605
        %v726 = vunpack.c.l.b16 %v607
        %v727 = vunpack.c.l.b16 %v608
        %v728 = vunpack.c.l.b16 %v610
        %v729 = vunpack.c.l.b16 %v611
        %v730 = vunpack.c.l.b16 %v613
        %v731 = vunpack.c.l.b16 %v614
        %v732 = vunpack.c.l.b16 %v616
        %v733 = vunpack.c.l.b16 %v617
        %v734 = vunpack.c.l.b16 %v619
        %v735 = vunpack.c.l.b16 %v620
        %v736 = vunpack.c.l.b16 %v622
        %v737 = vunpack.c.l.b16 %v623
        %v738 = vunpack.c.l.b16 %v625
        %v739 = vunpack.c.l.b16 %v626
        %v740 = vunpack.c.l.b16 %v628
        %v741 = vunpack.c.l.b16 %v629
        %v742 = vunpack.c.l.b16 %v631
        %v743 = vunpack.c.l.b16 %v632
        %v744 = vunpack.c.l.b16 %v634
        %v745 = vunpack.c.l.b16 %v635
        %v746 = vunpack.c.l.b16 %v637
        %v747 = vunpack.c.l.b16 %v638
        %v748 = vunpack.c.l.b16 %v640
        %v749 = vunpack.c.l.b16 %v641
        %v750 = vunpack.c.l.b16 %v643
        %v751 = vunpack.c.l.b16 %v644
        %v752 = vunpack.c.l.b16 %v646
        %v753 = vunpack.c.l.b16 %v647
        %v754 = vpack.c.b16 %v723, %v722
        %v755 = vpack.c.b16 %v725, %v724
        %v756 = vpack.c.b16 %v727, %v726
        %v757 = vpack.c.b16 %v729, %v728
        %v758 = vpack.c.b16 %v731, %v730
        %v759 = vpack.c.b16 %v733, %v732
        %v760 = vpack.c.b16 %v735, %v734
        %v761 = vpack.c.b16 %v737, %v736
        %v762 = vpack.c.b16 %v739, %v738
        %v763 = vpack.c.b16 %v741, %v740
        %v764 = vpack.c.b16 %v743, %v742
        %v765 = vpack.c.b16 %v745, %v744
        %v766 = vpack.c.b16 %v747, %v746
        %v767 = vpack.c.b16 %v749, %v748
        %v768 = vpack.c.b16 %v751, %v750
        %v769 = vpack.c.b16 %v753, %v752
        %v786 = vunpack.c.l.b16 %v603
        %v787 = vunpack.c.l.b16 %v606
        %v788 = vunpack.c.l.b16 %v609
        %v789 = vunpack.c.l.b16 %v612
        %v790 = vunpack.c.l.b16 %v615
        %v791 = vunpack.c.l.b16 %v618
        %v792 = vunpack.c.l.b16 %v621
        %v793 = vunpack.c.l.b16 %v624
        %v794 = vunpack.c.l.b16 %v627
        %v795 = vunpack.c.l.b16 %v630
        %v796 = vunpack.c.l.b16 %v633
        %v797 = vunpack.c.l.b16 %v636
        %v798 = vunpack.c.l.b16 %v639
        %v799 = vunpack.c.l.b16 %v642
        %v800 = vunpack.c.l.b16 %v645
        %v801 = vunpack.c.l.b16 %v648
        %v802 = vpack.c.b16 %v786, %v786
        %v803 = vpack.c.b16 %v787, %v787
        %v804 = vpack.c.b16 %v788, %v788
        %v805 = vpack.c.b16 %v789, %v789
        %v806 = vpack.c.b16 %v790, %v790
        %v807 = vpack.c.b16 %v791, %v791
        %v808 = vpack.c.b16 %v792, %v792
        %v809 = vpack.c.b16 %v793, %v793
        %v810 = vpack.c.b16 %v794, %v794
        %v811 = vpack.c.b16 %v795, %v795
        %v812 = vpack.c.b16 %v796, %v796
        %v813 = vpack.c.b16 %v797, %v797
        %v814 = vpack.c.b16 %v798, %v798
        %v815 = vpack.c.b16 %v799, %v799
        %v816 = vpack.c.b16 %v800, %v800
        %v817 = vpack.c.b16 %v801, %v801
        %vm818 = vsmask.f32 7424
        %v820 = vshrl.u32 %v754, 16
        %v822 = vshll.u32 %v754, 16
        %v824 = vrot.slane %v822, 1
        %v825 = vor.u32 %v820, %v824
        %v827 = vshll.u32 %v802, 16
        %v829 = vrot.slane %v827, 1
        %v830 = vsel %vm818, %v825, %v829
        %v832 = vshrl.u32 %v755, 16
        %v834 = vshll.u32 %v755, 16
        %v836 = vrot.slane %v834, 1
        %v837 = vor.u32 %v832, %v836
        %v839 = vshll.u32 %v803, 16
        %v841 = vrot.slane %v839, 1
        %v842 = vsel %vm818, %v837, %v841
        %v844 = vshrl.u32 %v756, 16
        %v846 = vshll.u32 %v756, 16
        %v848 = vrot.slane %v846, 1
        %v849 = vor.u32 %v844, %v848
        %v851 = vshll.u32 %v804, 16
        %v853 = vrot.slane %v851, 1
        %v854 = vsel %vm818, %v849, %v853
        %v856 = vshrl.u32 %v757, 16
        %v858 = vshll.u32 %v757, 16
        %v860 = vrot.slane %v858, 1
        %v861 = vor.u32 %v856, %v860
        %v863 = vshll.u32 %v805, 16
        %v865 = vrot.slane %v863, 1
        %v866 = vsel %vm818, %v861, %v865
        %v868 = vshrl.u32 %v758, 16
        %v870 = vshll.u32 %v758, 16
        %v872 = vrot.slane %v870, 1
        %v873 = vor.u32 %v868, %v872
        %v875 = vshll.u32 %v806, 16
        %v877 = vrot.slane %v875, 1
        %v878 = vsel %vm818, %v873, %v877
        %v880 = vshrl.u32 %v759, 16
        %v882 = vshll.u32 %v759, 16
        %v884 = vrot.slane %v882, 1
        %v885 = vor.u32 %v880, %v884
        %v887 = vshll.u32 %v807, 16
        %v889 = vrot.slane %v887, 1
        %v890 = vsel %vm818, %v885, %v889
        %v892 = vshrl.u32 %v760, 16
        %v894 = vshll.u32 %v760, 16
        %v896 = vrot.slane %v894, 1
        %v897 = vor.u32 %v892, %v896
        %v899 = vshll.u32 %v808, 16
        %v901 = vrot.slane %v899, 1
        %v902 = vsel %vm818, %v897, %v901
        %v904 = vshrl.u32 %v761, 16
        %v906 = vshll.u32 %v761, 16
        %v908 = vrot.slane %v906, 1
        %v909 = vor.u32 %v904, %v908
        %v911 = vshll.u32 %v809, 16
        %v913 = vrot.slane %v911, 1
        %v914 = vsel %vm818, %v909, %v913
        %v916 = vshrl.u32 %v762, 16
        %v918 = vshll.u32 %v762, 16
        %v920 = vrot.slane %v918, 1
        %v921 = vor.u32 %v916, %v920
        %v923 = vshll.u32 %v810, 16
        %v925 = vrot.slane %v923, 1
        %v926 = vsel %vm818, %v921, %v925
        %v928 = vshrl.u32 %v763, 16
        %v930 = vshll.u32 %v763, 16
        %v932 = vrot.slane %v930, 1
        %v933 = vor.u32 %v928, %v932
        %v935 = vshll.u32 %v811, 16
        %v937 = vrot.slane %v935, 1
        %v938 = vsel %vm818, %v933, %v937
        %v940 = vshrl.u32 %v764, 16
        %v942 = vshll.u32 %v764, 16
        %v944 = vrot.slane %v942, 1
        %v945 = vor.u32 %v940, %v944
        %v947 = vshll.u32 %v812, 16
        %v949 = vrot.slane %v947, 1
        %v950 = vsel %vm818, %v945, %v949
        %v952 = vshrl.u32 %v765, 16
        %v954 = vshll.u32 %v765, 16
        %v956 = vrot.slane %v954, 1
        %v957 = vor.u32 %v952, %v956
        %v959 = vshll.u32 %v813, 16
        %v961 = vrot.slane %v959, 1
        %v962 = vsel %vm818, %v957, %v961
        %v964 = vshrl.u32 %v766, 16
        %v966 = vshll.u32 %v766, 16
        %v968 = vrot.slane %v966, 1
        %v969 = vor.u32 %v964, %v968
        %v971 = vshll.u32 %v814, 16
        %v973 = vrot.slane %v971, 1
        %v974 = vsel %vm818, %v969, %v973
        %v976 = vshrl.u32 %v767, 16
        %v978 = vshll.u32 %v767, 16
        %v980 = vrot.slane %v978, 1
        %v981 = vor.u32 %v976, %v980
        %v983 = vshll.u32 %v815, 16
        %v985 = vrot.slane %v983, 1
        %v986 = vsel %vm818, %v981, %v985
        %v988 = vshrl.u32 %v768, 16
        %v990 = vshll.u32 %v768, 16
        %v992 = vrot.slane %v990, 1
        %v993 = vor.u32 %v988, %v992
        %v995 = vshll.u32 %v816, 16
        %v997 = vrot.slane %v995, 1
        %v998 = vsel %vm818, %v993, %v997
        %v1000 = vshrl.u32 %v769, 16
        %v1002 = vshll.u32 %v769, 16
        %v1004 = vrot.slane %v1002, 1
        %v1005 = vor.u32 %v1000, %v1004
        %v1007 = vshll.u32 %v817, 16
        %v1009 = vrot.slane %v1007, 1
        %v1010 = vsel %vm818, %v1005, %v1009
        %1011 = vrot.lane.b32.xlu0 %v830, 16
        %v1012 = vpop.permute.xlu0 %1011
        %1013 = vrot.lane.b32.xlu0 %v842, 16
        %v1014 = vpop.permute.xlu0 %1013
        %1015 = vrot.lane.b32.xlu0 %v854, 16
        %v1016 = vpop.permute.xlu0 %1015
        %1017 = vrot.lane.b32.xlu0 %v866, 16
        %v1018 = vpop.permute.xlu0 %1017
        %1019 = vrot.lane.b32.xlu0 %v878, 16
        %v1020 = vpop.permute.xlu0 %1019
        %1021 = vrot.lane.b32.xlu0 %v890, 16
        %v1022 = vpop.permute.xlu0 %1021
        %1023 = vrot.lane.b32.xlu0 %v902, 16
        %v1024 = vpop.permute.xlu0 %1023
        %1025 = vrot.lane.b32.xlu0 %v914, 16
        %v1026 = vpop.permute.xlu0 %1025
        %1027 = vrot.lane.b32.xlu0 %v926, 16
        %v1028 = vpop.permute.xlu0 %1027
        %1029 = vrot.lane.b32.xlu0 %v938, 16
        %v1030 = vpop.permute.xlu0 %1029
        %1031 = vrot.lane.b32.xlu0 %v950, 16
        %v1032 = vpop.permute.xlu0 %1031
        %1033 = vrot.lane.b32.xlu0 %v962, 16
        %v1034 = vpop.permute.xlu0 %1033
        %1035 = vrot.lane.b32.xlu0 %v974, 16
        %v1036 = vpop.permute.xlu0 %1035
        %1037 = vrot.lane.b32.xlu0 %v986, 16
        %v1038 = vpop.permute.xlu0 %1037
        %1039 = vrot.lane.b32.xlu0 %v998, 16
        %v1040 = vpop.permute.xlu0 %1039
        %1041 = vrot.lane.b32.xlu0 %v1010, 16
        %v1042 = vpop.permute.xlu0 %1041
        %vm1043 = vcmask 1046528
        %v1044 = vrot.slane %v754, 1
        %v1045 = vrot.slane %v802, 1
        %v1046 = vsel %vm1043, %v1044, %v1045
        %v1047 = vrot.slane %v755, 1
        %v1048 = vrot.slane %v803, 1
        %v1049 = vsel %vm1043, %v1047, %v1048
        %v1050 = vrot.slane %v756, 1
        %v1051 = vrot.slane %v804, 1
        %v1052 = vsel %vm1043, %v1050, %v1051
        %v1053 = vrot.slane %v757, 1
        %v1054 = vrot.slane %v805, 1
        %v1055 = vsel %vm1043, %v1053, %v1054
        %v1056 = vrot.slane %v758, 1
        %v1057 = vrot.slane %v806, 1
        %v1058 = vsel %vm1043, %v1056, %v1057
        %v1059 = vrot.slane %v759, 1
        %v1060 = vrot.slane %v807, 1
        %v1061 = vsel %vm1043, %v1059, %v1060
        %v1062 = vrot.slane %v760, 1
        %v1063 = vrot.slane %v808, 1
        %v1064 = vsel %vm1043, %v1062, %v1063
        %v1065 = vrot.slane %v761, 1
        %v1066 = vrot.slane %v809, 1
        %v1067 = vsel %vm1043, %v1065, %v1066
        %v1068 = vrot.slane %v762, 1
        %v1069 = vrot.slane %v810, 1
        %v1070 = vsel %vm1043, %v1068, %v1069
        %v1071 = vrot.slane %v763, 1
        %v1072 = vrot.slane %v811, 1
        %v1073 = vsel %vm1043, %v1071, %v1072
        %v1074 = vrot.slane %v764, 1
        %v1075 = vrot.slane %v812, 1
        %v1076 = vsel %vm1043, %v1074, %v1075
        %v1077 = vrot.slane %v765, 1
        %v1078 = vrot.slane %v813, 1
        %v1079 = vsel %vm1043, %v1077, %v1078
        %v1080 = vrot.slane %v766, 1
        %v1081 = vrot.slane %v814, 1
        %v1082 = vsel %vm1043, %v1080, %v1081
        %v1083 = vrot.slane %v767, 1
        %v1084 = vrot.slane %v815, 1
        %v1085 = vsel %vm1043, %v1083, %v1084
        %v1086 = vrot.slane %v768, 1
        %v1087 = vrot.slane %v816, 1
        %v1088 = vsel %vm1043, %v1086, %v1087
        %v1089 = vrot.slane %v769, 1
        %v1090 = vrot.slane %v817, 1
        %v1091 = vsel %vm1043, %v1089, %v1090
        %1092 = vrot.lane.b32.xlu0 %v1046, 32
        %v1093 = vpop.permute.xlu0 %1092
        %1094 = vrot.lane.b32.xlu0 %v1049, 32
        %v1095 = vpop.permute.xlu0 %1094
        %1096 = vrot.lane.b32.xlu0 %v1052, 32
        %v1097 = vpop.permute.xlu0 %1096
        %1098 = vrot.lane.b32.xlu0 %v1055, 32
        %v1099 = vpop.permute.xlu0 %1098
        %1100 = vrot.lane.b32.xlu0 %v1058, 32
        %v1101 = vpop.permute.xlu0 %1100
        %1102 = vrot.lane.b32.xlu0 %v1061, 32
        %v1103 = vpop.permute.xlu0 %1102
        %1104 = vrot.lane.b32.xlu0 %v1064, 32
        %v1105 = vpop.permute.xlu0 %1104
        %1106 = vrot.lane.b32.xlu0 %v1067, 32
        %v1107 = vpop.permute.xlu0 %1106
        %1108 = vrot.lane.b32.xlu0 %v1070, 32
        %v1109 = vpop.permute.xlu0 %1108
        %1110 = vrot.lane.b32.xlu0 %v1073, 32
        %v1111 = vpop.permute.xlu0 %1110
        %1112 = vrot.lane.b32.xlu0 %v1076, 32
        %v1113 = vpop.permute.xlu0 %1112
        %1114 = vrot.lane.b32.xlu0 %v1079, 32
        %v1115 = vpop.permute.xlu0 %1114
        %1116 = vrot.lane.b32.xlu0 %v1082, 32
        %v1117 = vpop.permute.xlu0 %1116
        %1118 = vrot.lane.b32.xlu0 %v1085, 32
        %v1119 = vpop.permute.xlu0 %1118
        %1120 = vrot.lane.b32.xlu0 %v1088, 32
        %v1121 = vpop.permute.xlu0 %1120
        %1122 = vrot.lane.b32.xlu0 %v1091, 32
        %v1123 = vpop.permute.xlu0 %1122
        %vm1124 = vsmask.f32 6400
        %v1125 = vrot.slane %v820, 1
        %v1126 = vrot.slane %v822, 2
        %v1127 = vor.u32 %v1125, %v1126
        %v1128 = vshrl.u32 %v802, 16
        %v1130 = vrot.slane %v1128, 1
        %v1131 = vrot.slane %v827, 2
        %v1132 = vor.u32 %v1130, %v1131
        %v1133 = vsel %vm1124, %v1127, %v1132
        %v1134 = vrot.slane %v832, 1
        %v1135 = vrot.slane %v834, 2
        %v1136 = vor.u32 %v1134, %v1135
        %v1137 = vshrl.u32 %v803, 16
        %v1139 = vrot.slane %v1137, 1
        %v1140 = vrot.slane %v839, 2
        %v1141 = vor.u32 %v1139, %v1140
        %v1142 = vsel %vm1124, %v1136, %v1141
        %v1143 = vrot.slane %v844, 1
        %v1144 = vrot.slane %v846, 2
        %v1145 = vor.u32 %v1143, %v1144
        %v1146 = vshrl.u32 %v804, 16
        %v1148 = vrot.slane %v1146, 1
        %v1149 = vrot.slane %v851, 2
        %v1150 = vor.u32 %v1148, %v1149
        %v1151 = vsel %vm1124, %v1145, %v1150
        %v1152 = vrot.slane %v856, 1
        %v1153 = vrot.slane %v858, 2
        %v1154 = vor.u32 %v1152, %v1153
        %v1155 = vshrl.u32 %v805, 16
        %v1157 = vrot.slane %v1155, 1
        %v1158 = vrot.slane %v863, 2
        %v1159 = vor.u32 %v1157, %v1158
        %v1160 = vsel %vm1124, %v1154, %v1159
        %v1161 = vrot.slane %v868, 1
        %v1162 = vrot.slane %v870, 2
        %v1163 = vor.u32 %v1161, %v1162
        %v1164 = vshrl.u32 %v806, 16
        %v1166 = vrot.slane %v1164, 1
        %v1167 = vrot.slane %v875, 2
        %v1168 = vor.u32 %v1166, %v1167
        %v1169 = vsel %vm1124, %v1163, %v1168
        %v1170 = vrot.slane %v880, 1
        %v1171 = vrot.slane %v882, 2
        %v1172 = vor.u32 %v1170, %v1171
        %v1173 = vshrl.u32 %v807, 16
        %v1175 = vrot.slane %v1173, 1
        %v1176 = vrot.slane %v887, 2
        %v1177 = vor.u32 %v1175, %v1176
        %v1178 = vsel %vm1124, %v1172, %v1177
        %v1179 = vrot.slane %v892, 1
        %v1180 = vrot.slane %v894, 2
        %v1181 = vor.u32 %v1179, %v1180
        %v1182 = vshrl.u32 %v808, 16
        %v1184 = vrot.slane %v1182, 1
        %v1185 = vrot.slane %v899, 2
        %v1186 = vor.u32 %v1184, %v1185
        %v1187 = vsel %vm1124, %v1181, %v1186
        %v1188 = vrot.slane %v904, 1
        %v1189 = vrot.slane %v906, 2
        %v1190 = vor.u32 %v1188, %v1189
        %v1191 = vshrl.u32 %v809, 16
        %v1193 = vrot.slane %v1191, 1
        %v1194 = vrot.slane %v911, 2
        %v1195 = vor.u32 %v1193, %v1194
        %v1196 = vsel %vm1124, %v1190, %v1195
        %v1197 = vrot.slane %v916, 1
        %v1198 = vrot.slane %v918, 2
        %v1199 = vor.u32 %v1197, %v1198
        %v1200 = vshrl.u32 %v810, 16
        %v1202 = vrot.slane %v1200, 1
        %v1203 = vrot.slane %v923, 2
        %v1204 = vor.u32 %v1202, %v1203
        %v1205 = vsel %vm1124, %v1199, %v1204
        %v1206 = vrot.slane %v928, 1
        %v1207 = vrot.slane %v930, 2
        %v1208 = vor.u32 %v1206, %v1207
        %v1209 = vshrl.u32 %v811, 16
        %v1211 = vrot.slane %v1209, 1
        %v1212 = vrot.slane %v935, 2
        %v1213 = vor.u32 %v1211, %v1212
        %v1214 = vsel %vm1124, %v1208, %v1213
        %v1215 = vrot.slane %v940, 1
        %v1216 = vrot.slane %v942, 2
        %v1217 = vor.u32 %v1215, %v1216
        %v1218 = vshrl.u32 %v812, 16
        %v1220 = vrot.slane %v1218, 1
        %v1221 = vrot.slane %v947, 2
        %v1222 = vor.u32 %v1220, %v1221
        %v1223 = vsel %vm1124, %v1217, %v1222
        %v1224 = vrot.slane %v952, 1
        %v1225 = vrot.slane %v954, 2
        %v1226 = vor.u32 %v1224, %v1225
        %v1227 = vshrl.u32 %v813, 16
        %v1229 = vrot.slane %v1227, 1
        %v1230 = vrot.slane %v959, 2
        %v1231 = vor.u32 %v1229, %v1230
        %v1232 = vsel %vm1124, %v1226, %v1231
        %v1233 = vrot.slane %v964, 1
        %v1234 = vrot.slane %v966, 2
        %v1235 = vor.u32 %v1233, %v1234
        %v1236 = vshrl.u32 %v814, 16
        %v1238 = vrot.slane %v1236, 1
        %v1239 = vrot.slane %v971, 2
        %v1240 = vor.u32 %v1238, %v1239
        %v1241 = vsel %vm1124, %v1235, %v1240
        %v1242 = vrot.slane %v976, 1
        %v1243 = vrot.slane %v978, 2
        %v1244 = vor.u32 %v1242, %v1243
        %v1245 = vshrl.u32 %v815, 16
        %v1247 = vrot.slane %v1245, 1
        %v1248 = vrot.slane %v983, 2
        %v1249 = vor.u32 %v1247, %v1248
        %v1250 = vsel %vm1124, %v1244, %v1249
        %v1251 = vrot.slane %v988, 1
        %v1252 = vrot.slane %v990, 2
        %v1253 = vor.u32 %v1251, %v1252
        %v1254 = vshrl.u32 %v816, 16
        %v1256 = vrot.slane %v1254, 1
        %v1257 = vrot.slane %v995, 2
        %v1258 = vor.u32 %v1256, %v1257
        %v1259 = vsel %vm1124, %v1253, %v1258
        %v1260 = vrot.slane %v1000, 1
        %v1261 = vrot.slane %v1002, 2
        %v1262 = vor.u32 %v1260, %v1261
        %v1263 = vshrl.u32 %v817, 16
        %v1265 = vrot.slane %v1263, 1
        %v1266 = vrot.slane %v1007, 2
        %v1267 = vor.u32 %v1265, %v1266
        %v1268 = vsel %vm1124, %v1262, %v1267
        %1269 = vrot.lane.b32.xlu0 %v1133, 48
        %v1270 = vpop.permute.xlu0 %1269
        %1271 = vrot.lane.b32.xlu0 %v1142, 48
        %v1272 = vpop.permute.xlu0 %1271
        %1273 = vrot.lane.b32.xlu0 %v1151, 48
        %v1274 = vpop.permute.xlu0 %1273
        %1275 = vrot.lane.b32.xlu0 %v1160, 48
        %v1276 = vpop.permute.xlu0 %1275
        %1277 = vrot.lane.b32.xlu0 %v1169, 48
        %v1278 = vpop.permute.xlu0 %1277
        %1279 = vrot.lane.b32.xlu0 %v1178, 48
        %v1280 = vpop.permute.xlu0 %1279
        %1281 = vrot.lane.b32.xlu0 %v1187, 48
        %v1282 = vpop.permute.xlu0 %1281
        %1283 = vrot.lane.b32.xlu0 %v1196, 48
        %v1284 = vpop.permute.xlu0 %1283
        %1285 = vrot.lane.b32.xlu0 %v1205, 48
        %v1286 = vpop.permute.xlu0 %1285
        %1287 = vrot.lane.b32.xlu0 %v1214, 48
        %v1288 = vpop.permute.xlu0 %1287
        %1289 = vrot.lane.b32.xlu0 %v1223, 48
        %v1290 = vpop.permute.xlu0 %1289
        %1291 = vrot.lane.b32.xlu0 %v1232, 48
        %v1292 = vpop.permute.xlu0 %1291
        %1293 = vrot.lane.b32.xlu0 %v1241, 48
        %v1294 = vpop.permute.xlu0 %1293
        %1295 = vrot.lane.b32.xlu0 %v1250, 48
        %v1296 = vpop.permute.xlu0 %1295
        %1297 = vrot.lane.b32.xlu0 %v1259, 48
        %v1298 = vpop.permute.xlu0 %1297
        %1299 = vrot.lane.b32.xlu0 %v1268, 48
        %v1300 = vpop.permute.xlu0 %1299
        %v1303 = vunpack.c.l.b16 %v649
        %v1304 = vunpack.c.l.b16 %v650
        %v1305 = vpack.c.b16 %v1304, %v1303
        %1306 = vrot.lane.b32.xlu0 %v755, 64
        %v1307 = vpop.permute.xlu0 %1306
        %1308 = vrot.lane.b32.xlu0 %v756, 64
        %v1309 = vpop.permute.xlu0 %1308
        %1310 = vrot.lane.b32.xlu0 %v757, 64
        %v1311 = vpop.permute.xlu0 %1310
        %1312 = vrot.lane.b32.xlu0 %v758, 64
        %v1313 = vpop.permute.xlu0 %1312
        %1314 = vrot.lane.b32.xlu0 %v759, 64
        %v1315 = vpop.permute.xlu0 %1314
        %1316 = vrot.lane.b32.xlu0 %v760, 64
        %v1317 = vpop.permute.xlu0 %1316
        %1318 = vrot.lane.b32.xlu0 %v761, 64
        %v1319 = vpop.permute.xlu0 %1318
        %1320 = vrot.lane.b32.xlu0 %v762, 64
        %v1321 = vpop.permute.xlu0 %1320
        %1322 = vrot.lane.b32.xlu0 %v763, 64
        %v1323 = vpop.permute.xlu0 %1322
        %1324 = vrot.lane.b32.xlu0 %v764, 64
        %v1325 = vpop.permute.xlu0 %1324
        %1326 = vrot.lane.b32.xlu0 %v765, 64
        %v1327 = vpop.permute.xlu0 %1326
        %1328 = vrot.lane.b32.xlu0 %v766, 64
        %v1329 = vpop.permute.xlu0 %1328
        %1330 = vrot.lane.b32.xlu0 %v767, 64
        %v1331 = vpop.permute.xlu0 %1330
        %1332 = vrot.lane.b32.xlu0 %v768, 64
        %v1333 = vpop.permute.xlu0 %1332
        %1334 = vrot.lane.b32.xlu0 %v769, 64
        %v1335 = vpop.permute.xlu0 %1334
        %1336 = vrot.lane.b32.xlu0 %v1305, 64
        %v1337 = vpop.permute.xlu0 %1336
        %v1339 = vunpack.c.l.b16 %v651
        %v1340 = vpack.c.b16 %v1339, %v1339
        %v1342 = vshrl.u32 %v1305, 16
        %v1344 = vshll.u32 %v1305, 16
        %v1346 = vrot.slane %v1344, 1
        %v1347 = vor.u32 %v1342, %v1346
        %v1349 = vshll.u32 %v1340, 16
        %v1351 = vrot.slane %v1349, 1
        %v1352 = vsel %vm818, %v1347, %v1351
        %1353 = vrot.lane.b32.xlu0 %v842, 80
        %v1354 = vpop.permute.xlu0 %1353
        %1355 = vrot.lane.b32.xlu0 %v854, 80
        %v1356 = vpop.permute.xlu0 %1355
        %1357 = vrot.lane.b32.xlu0 %v866, 80
        %v1358 = vpop.permute.xlu0 %1357
        %1359 = vrot.lane.b32.xlu0 %v878, 80
        %v1360 = vpop.permute.xlu0 %1359
        %1361 = vrot.lane.b32.xlu0 %v890, 80
        %v1362 = vpop.permute.xlu0 %1361
        %1363 = vrot.lane.b32.xlu0 %v902, 80
        %v1364 = vpop.permute.xlu0 %1363
        %1365 = vrot.lane.b32.xlu0 %v914, 80
        %v1366 = vpop.permute.xlu0 %1365
        %1367 = vrot.lane.b32.xlu0 %v926, 80
        %v1368 = vpop.permute.xlu0 %1367
        %1369 = vrot.lane.b32.xlu0 %v938, 80
        %v1370 = vpop.permute.xlu0 %1369
        %1371 = vrot.lane.b32.xlu0 %v950, 80
        %v1372 = vpop.permute.xlu0 %1371
        %1373 = vrot.lane.b32.xlu0 %v962, 80
        %v1374 = vpop.permute.xlu0 %1373
        %1375 = vrot.lane.b32.xlu0 %v974, 80
        %v1376 = vpop.permute.xlu0 %1375
        %1377 = vrot.lane.b32.xlu0 %v986, 80
        %v1378 = vpop.permute.xlu0 %1377
        %1379 = vrot.lane.b32.xlu0 %v998, 80
        %v1380 = vpop.permute.xlu0 %1379
        %1381 = vrot.lane.b32.xlu0 %v1010, 80
        %v1382 = vpop.permute.xlu0 %1381
        %1383 = vrot.lane.b32.xlu0 %v1352, 80
        %v1384 = vpop.permute.xlu0 %1383
        %v1385 = vrot.slane %v1305, 1
        %v1386 = vrot.slane %v1340, 1
        %v1387 = vsel %vm1043, %v1385, %v1386
        %1388 = vrot.lane.b32.xlu0 %v1049, 96
        %v1389 = vpop.permute.xlu0 %1388
        %1390 = vrot.lane.b32.xlu0 %v1052, 96
        %v1391 = vpop.permute.xlu0 %1390
        %1392 = vrot.lane.b32.xlu0 %v1055, 96
        %v1393 = vpop.permute.xlu0 %1392
        %1394 = vrot.lane.b32.xlu0 %v1058, 96
        %v1395 = vpop.permute.xlu0 %1394
        %1396 = vrot.lane.b32.xlu0 %v1061, 96
        %v1397 = vpop.permute.xlu0 %1396
        %1398 = vrot.lane.b32.xlu0 %v1064, 96
        %v1399 = vpop.permute.xlu0 %1398
        %1400 = vrot.lane.b32.xlu0 %v1067, 96
        %v1401 = vpop.permute.xlu0 %1400
        %1402 = vrot.lane.b32.xlu0 %v1070, 96
        %v1403 = vpop.permute.xlu0 %1402
        %1404 = vrot.lane.b32.xlu0 %v1073, 96
        %v1405 = vpop.permute.xlu0 %1404
        %1406 = vrot.lane.b32.xlu0 %v1076, 96
        %v1407 = vpop.permute.xlu0 %1406
        %1408 = vrot.lane.b32.xlu0 %v1079, 96
        %v1409 = vpop.permute.xlu0 %1408
        %1410 = vrot.lane.b32.xlu0 %v1082, 96
        %v1411 = vpop.permute.xlu0 %1410
        %1412 = vrot.lane.b32.xlu0 %v1085, 96
        %v1413 = vpop.permute.xlu0 %1412
        %1414 = vrot.lane.b32.xlu0 %v1088, 96
        %v1415 = vpop.permute.xlu0 %1414
        %1416 = vrot.lane.b32.xlu0 %v1091, 96
        %v1417 = vpop.permute.xlu0 %1416
        %1418 = vrot.lane.b32.xlu0 %v1387, 96
        %v1419 = vpop.permute.xlu0 %1418
        %v1420 = vrot.slane %v1342, 1
        %v1421 = vrot.slane %v1344, 2
        %v1422 = vor.u32 %v1420, %v1421
        %v1423 = vshrl.u32 %v1340, 16
        %v1425 = vrot.slane %v1423, 1
        %v1426 = vrot.slane %v1349, 2
        %v1427 = vor.u32 %v1425, %v1426
        %v1428 = vsel %vm1124, %v1422, %v1427
        %1429 = vrot.lane.b32.xlu0 %v1142, 112
        %v1430 = vpop.permute.xlu0 %1429
        %1431 = vrot.lane.b32.xlu0 %v1151, 112
        %v1432 = vpop.permute.xlu0 %1431
        %1433 = vrot.lane.b32.xlu0 %v1160, 112
        %v1434 = vpop.permute.xlu0 %1433
        %1435 = vrot.lane.b32.xlu0 %v1169, 112
        %v1436 = vpop.permute.xlu0 %1435
        %1437 = vrot.lane.b32.xlu0 %v1178, 112
        %v1438 = vpop.permute.xlu0 %1437
        %1439 = vrot.lane.b32.xlu0 %v1187, 112
        %v1440 = vpop.permute.xlu0 %1439
        %1441 = vrot.lane.b32.xlu0 %v1196, 112
        %v1442 = vpop.permute.xlu0 %1441
        %1443 = vrot.lane.b32.xlu0 %v1205, 112
        %v1444 = vpop.permute.xlu0 %1443
        %1445 = vrot.lane.b32.xlu0 %v1214, 112
        %v1446 = vpop.permute.xlu0 %1445
        %1447 = vrot.lane.b32.xlu0 %v1223, 112
        %v1448 = vpop.permute.xlu0 %1447
        %1449 = vrot.lane.b32.xlu0 %v1232, 112
        %v1450 = vpop.permute.xlu0 %1449
        %1451 = vrot.lane.b32.xlu0 %v1241, 112
        %v1452 = vpop.permute.xlu0 %1451
        %1453 = vrot.lane.b32.xlu0 %v1250, 112
        %v1454 = vpop.permute.xlu0 %1453
        %1455 = vrot.lane.b32.xlu0 %v1259, 112
        %v1456 = vpop.permute.xlu0 %1455
        %1457 = vrot.lane.b32.xlu0 %v1268, 112
        %v1458 = vpop.permute.xlu0 %1457
        %1459 = vrot.lane.b32.xlu0 %v1428, 112
        %v1460 = vpop.permute.xlu0 %1459
        %v1463 = vunpack.c.l.b16 %v652
        %v1464 = vunpack.c.l.b16 %v653
        %v1465 = vpack.c.b16 %v1464, %v1463
        %v1467 = vunpack.c.l.b16 %v654
        %v1468 = vpack.c.b16 %v1467, %v1467
        %v1470 = vshrl.u32 %v1465, 16
        %v1472 = vshll.u32 %v1465, 16
        %v1474 = vrot.slane %v1472, 1
        %v1475 = vor.u32 %v1470, %v1474
        %v1477 = vshll.u32 %v1468, 16
        %v1479 = vrot.slane %v1477, 1
        %v1480 = vsel %vm818, %v1475, %v1479
        %1481 = vrot.lane.b32.xlu0 %v1352, 16
        %v1482 = vpop.permute.xlu0 %1481
        %1483 = vrot.lane.b32.xlu0 %v1480, 16
        %v1484 = vpop.permute.xlu0 %1483
        %v1485 = vrot.slane %v1465, 1
        %v1486 = vrot.slane %v1468, 1
        %v1487 = vsel %vm1043, %v1485, %v1486
        %1488 = vrot.lane.b32.xlu0 %v1387, 32
        %v1489 = vpop.permute.xlu0 %1488
        %1490 = vrot.lane.b32.xlu0 %v1487, 32
        %v1491 = vpop.permute.xlu0 %1490
        %v1492 = vrot.slane %v1470, 1
        %v1493 = vrot.slane %v1472, 2
        %v1494 = vor.u32 %v1492, %v1493
        %v1495 = vshrl.u32 %v1468, 16
        %v1497 = vrot.slane %v1495, 1
        %v1498 = vrot.slane %v1477, 2
        %v1499 = vor.u32 %v1497, %v1498
        %v1500 = vsel %vm1124, %v1494, %v1499
        %1501 = vrot.lane.b32.xlu0 %v1428, 48
        %v1502 = vpop.permute.xlu0 %1501
        %1503 = vrot.lane.b32.xlu0 %v1500, 48
        %v1504 = vpop.permute.xlu0 %1503
        %v1507 = vunpack.c.l.b16 %v655
        %v1508 = vunpack.c.l.b16 %v656
        %v1509 = vpack.c.b16 %v1508, %v1507
        %1510 = vrot.lane.b32.xlu0 %v1465, 64
        %v1511 = vpop.permute.xlu0 %1510
        %1512 = vrot.lane.b32.xlu0 %v1509, 64
        %v1513 = vpop.permute.xlu0 %1512
        %v1515 = vunpack.c.l.b16 %v657
        %v1516 = vpack.c.b16 %v1515, %v1515
        %v1518 = vshrl.u32 %v1509, 16
        %v1520 = vshll.u32 %v1509, 16
        %v1522 = vrot.slane %v1520, 1
        %v1523 = vor.u32 %v1518, %v1522
        %v1525 = vshll.u32 %v1516, 16
        %v1527 = vrot.slane %v1525, 1
        %v1528 = vsel %vm818, %v1523, %v1527
        %1529 = vrot.lane.b32.xlu0 %v1480, 80
        %v1530 = vpop.permute.xlu0 %1529
        %1531 = vrot.lane.b32.xlu0 %v1528, 80
        %v1532 = vpop.permute.xlu0 %1531
        %v1533 = vrot.slane %v1509, 1
        %v1534 = vrot.slane %v1516, 1
        %v1535 = vsel %vm1043, %v1533, %v1534
        %1536 = vrot.lane.b32.xlu0 %v1487, 96
        %v1537 = vpop.permute.xlu0 %1536
        %1538 = vrot.lane.b32.xlu0 %v1535, 96
        %v1539 = vpop.permute.xlu0 %1538
        %v1540 = vrot.slane %v1518, 1
        %v1541 = vrot.slane %v1520, 2
        %v1542 = vor.u32 %v1540, %v1541
        %v1543 = vshrl.u32 %v1516, 16
        %v1545 = vrot.slane %v1543, 1
        %v1546 = vrot.slane %v1525, 2
        %v1547 = vor.u32 %v1545, %v1546
        %v1548 = vsel %vm1124, %v1542, %v1547
        %1549 = vrot.lane.b32.xlu0 %v1500, 112
        %v1550 = vpop.permute.xlu0 %1549
        %1551 = vrot.lane.b32.xlu0 %v1548, 112
        %v1552 = vpop.permute.xlu0 %1551
        %vm1553 = vcmask 130048
        %v1555 = vsel %vm1553, %v754, %v1012
        %v1557 = vsel %vm1553, %v755, %v1014
        %v1559 = vsel %vm1553, %v756, %v1016
        %v1561 = vsel %vm1553, %v757, %v1018
        %v1563 = vsel %vm1553, %v758, %v1020
        %v1565 = vsel %vm1553, %v759, %v1022
        %v1567 = vsel %vm1553, %v760, %v1024
        %v1569 = vsel %vm1553, %v761, %v1026
        %v1571 = vsel %vm1553, %v762, %v1028
        %v1573 = vsel %vm1553, %v763, %v1030
        %v1575 = vsel %vm1553, %v764, %v1032
        %v1577 = vsel %vm1553, %v765, %v1034
        %v1579 = vsel %vm1553, %v766, %v1036
        %v1581 = vsel %vm1553, %v767, %v1038
        %v1583 = vsel %vm1553, %v768, %v1040
        %v1585 = vsel %vm1553, %v769, %v1042
        %vm1586 = vcmask 261120
        %v1588 = vsel %vm1586, %v1555, %v1093
        %v1590 = vsel %vm1586, %v1557, %v1095
        %v1592 = vsel %vm1586, %v1559, %v1097
        %v1594 = vsel %vm1586, %v1561, %v1099
        %v1596 = vsel %vm1586, %v1563, %v1101
        %v1598 = vsel %vm1586, %v1565, %v1103
        %v1600 = vsel %vm1586, %v1567, %v1105
        %v1602 = vsel %vm1586, %v1569, %v1107
        %v1604 = vsel %vm1586, %v1571, %v1109
        %v1606 = vsel %vm1586, %v1573, %v1111
        %v1608 = vsel %vm1586, %v1575, %v1113
        %v1610 = vsel %vm1586, %v1577, %v1115
        %v1612 = vsel %vm1586, %v1579, %v1117
        %v1614 = vsel %vm1586, %v1581, %v1119
        %v1616 = vsel %vm1586, %v1583, %v1121
        %v1618 = vsel %vm1586, %v1585, %v1123
        %vm1619 = vcmask 392192
        %v1621 = vsel %vm1619, %v1588, %v1270
        %v1623 = vsel %vm1619, %v1590, %v1272
        %v1625 = vsel %vm1619, %v1592, %v1274
        %v1627 = vsel %vm1619, %v1594, %v1276
        %v1629 = vsel %vm1619, %v1596, %v1278
        %v1631 = vsel %vm1619, %v1598, %v1280
        %v1633 = vsel %vm1619, %v1600, %v1282
        %v1635 = vsel %vm1619, %v1602, %v1284
        %v1637 = vsel %vm1619, %v1604, %v1286
        %v1639 = vsel %vm1619, %v1606, %v1288
        %v1641 = vsel %vm1619, %v1608, %v1290
        %v1643 = vsel %vm1619, %v1610, %v1292
        %v1645 = vsel %vm1619, %v1612, %v1294
        %v1647 = vsel %vm1619, %v1614, %v1296
        %v1649 = vsel %vm1619, %v1616, %v1298
        %v1651 = vsel %vm1619, %v1618, %v1300
        %vm1652 = vcmask 523264
        %v1654 = vsel %vm1652, %v1621, %v1307
        %v1656 = vsel %vm1652, %v1623, %v1309
        %v1658 = vsel %vm1652, %v1625, %v1311
        %v1660 = vsel %vm1652, %v1627, %v1313
        %v1662 = vsel %vm1652, %v1629, %v1315
        %v1664 = vsel %vm1652, %v1631, %v1317
        %v1666 = vsel %vm1652, %v1633, %v1319
        %v1668 = vsel %vm1652, %v1635, %v1321
        %v1670 = vsel %vm1652, %v1637, %v1323
        %v1672 = vsel %vm1652, %v1639, %v1325
        %v1674 = vsel %vm1652, %v1641, %v1327
        %v1676 = vsel %vm1652, %v1643, %v1329
        %v1678 = vsel %vm1652, %v1645, %v1331
        %v1680 = vsel %vm1652, %v1647, %v1333
        %v1682 = vsel %vm1652, %v1649, %v1335
        %v1684 = vsel %vm1652, %v1651, %v1337
        %vm1685 = vcmask 654336
        %v1687 = vsel %vm1685, %v1654, %v1354
        %v1689 = vsel %vm1685, %v1656, %v1356
        %v1691 = vsel %vm1685, %v1658, %v1358
        %v1693 = vsel %vm1685, %v1660, %v1360
        %v1695 = vsel %vm1685, %v1662, %v1362
        %v1697 = vsel %vm1685, %v1664, %v1364
        %v1699 = vsel %vm1685, %v1666, %v1366
        %v1701 = vsel %vm1685, %v1668, %v1368
        %v1703 = vsel %vm1685, %v1670, %v1370
        %v1705 = vsel %vm1685, %v1672, %v1372
        %v1707 = vsel %vm1685, %v1674, %v1374
        %v1709 = vsel %vm1685, %v1676, %v1376
        %v1711 = vsel %vm1685, %v1678, %v1378
        %v1713 = vsel %vm1685, %v1680, %v1380
        %v1715 = vsel %vm1685, %v1682, %v1382
        %v1717 = vsel %vm1685, %v1684, %v1384
        %vm1718 = vcmask 785408
        %v1720 = vsel %vm1718, %v1687, %v1389
        %v1722 = vsel %vm1718, %v1689, %v1391
        %v1724 = vsel %vm1718, %v1691, %v1393
        %v1726 = vsel %vm1718, %v1693, %v1395
        %v1728 = vsel %vm1718, %v1695, %v1397
        %v1730 = vsel %vm1718, %v1697, %v1399
        %v1732 = vsel %vm1718, %v1699, %v1401
        %v1734 = vsel %vm1718, %v1701, %v1403
        %v1736 = vsel %vm1718, %v1703, %v1405
        %v1738 = vsel %vm1718, %v1705, %v1407
        %v1740 = vsel %vm1718, %v1707, %v1409
        %v1742 = vsel %vm1718, %v1709, %v1411
        %v1744 = vsel %vm1718, %v1711, %v1413
        %v1746 = vsel %vm1718, %v1713, %v1415
        %v1748 = vsel %vm1718, %v1715, %v1417
        %v1750 = vsel %vm1718, %v1717, %v1419
        %vm1751 = vcmask 916480
        %v1753 = vsel %vm1751, %v1720, %v1430
        %v1756 = vsel %vm1751, %v1722, %v1432
        %v1759 = vsel %vm1751, %v1724, %v1434
        %v1762 = vsel %vm1751, %v1726, %v1436
        %v1765 = vsel %vm1751, %v1728, %v1438
        %v1768 = vsel %vm1751, %v1730, %v1440
        %v1771 = vsel %vm1751, %v1732, %v1442
        %v1774 = vsel %vm1751, %v1734, %v1444
        %v1777 = vsel %vm1751, %v1736, %v1446
        %v1780 = vsel %vm1751, %v1738, %v1448
        %v1783 = vsel %vm1751, %v1740, %v1450
        %v1786 = vsel %vm1751, %v1742, %v1452
        %v1789 = vsel %vm1751, %v1744, %v1454
        %v1792 = vsel %vm1751, %v1746, %v1456
        %v1795 = vsel %vm1751, %v1748, %v1458
        %v1798 = vsel %vm1751, %v1750, %v1460
        %v1801 = vsel %vm1553, %v1305, %v1482
        %v1803 = vsel %vm1553, %v1465, %v1484
        %v1805 = vsel %vm1586, %v1801, %v1489
        %v1807 = vsel %vm1586, %v1803, %v1491
        %v1809 = vsel %vm1619, %v1805, %v1502
        %v1811 = vsel %vm1619, %v1807, %v1504
        %v1813 = vsel %vm1652, %v1809, %v1511
        %v1815 = vsel %vm1652, %v1811, %v1513
        %v1817 = vsel %vm1685, %v1813, %v1530
        %v1819 = vsel %vm1685, %v1815, %v1532
        %v1821 = vsel %vm1718, %v1817, %v1537
        %v1823 = vsel %vm1718, %v1819, %v1539
        %v1825 = vsel %vm1751, %v1821, %v1550
        %v1828 = vsel %vm1751, %v1823, %v1552
        %v1862 = vunpack.c.l.b16 %v658
        %v1863 = vunpack.c.l.b16 %v659
        %v1864 = vunpack.c.l.b16 %v660
        %v1865 = vunpack.c.l.b16 %v661
        %v1866 = vunpack.c.l.b16 %v662
        %v1867 = vunpack.c.l.b16 %v663
        %v1868 = vunpack.c.l.b16 %v664
        %v1869 = vunpack.c.l.b16 %v665
        %v1870 = vunpack.c.l.b16 %v666
        %v1871 = vunpack.c.l.b16 %v667
        %v1872 = vunpack.c.l.b16 %v668
        %v1873 = vunpack.c.l.b16 %v669
        %v1874 = vunpack.c.l.b16 %v670
        %v1875 = vunpack.c.l.b16 %v671
        %v1876 = vunpack.c.l.b16 %v672
        %v1877 = vunpack.c.l.b16 %v673
        %v1878 = vunpack.c.l.b16 %v674
        %v1879 = vunpack.c.l.b16 %v675
        %v1880 = vunpack.c.l.b16 %v676
        %v1881 = vunpack.c.l.b16 %v677
        %v1882 = vunpack.c.l.b16 %v678
        %v1883 = vunpack.c.l.b16 %v679
        %v1884 = vunpack.c.l.b16 %v680
        %v1885 = vunpack.c.l.b16 %v681
        %v1886 = vunpack.c.l.b16 %v682
        %v1887 = vunpack.c.l.b16 %v683
        %v1888 = vunpack.c.l.b16 %v684
        %v1889 = vunpack.c.l.b16 %v685
        %v1890 = vunpack.c.l.b16 %v686
        %v1891 = vunpack.c.l.b16 %v687
        %v1892 = vunpack.c.l.b16 %v688
        %v1893 = vunpack.c.l.b16 %v689
        %v1894 = vpack.c.b16 %v1863, %v1862
        %v1895 = vpack.c.b16 %v1865, %v1864
        %v1896 = vpack.c.b16 %v1867, %v1866
        %v1897 = vpack.c.b16 %v1869, %v1868
        %v1898 = vpack.c.b16 %v1871, %v1870
        %v1899 = vpack.c.b16 %v1873, %v1872
        %v1900 = vpack.c.b16 %v1875, %v1874
        %v1901 = vpack.c.b16 %v1877, %v1876
        %v1902 = vpack.c.b16 %v1879, %v1878
        %v1903 = vpack.c.b16 %v1881, %v1880
        %v1904 = vpack.c.b16 %v1883, %v1882
        %v1905 = vpack.c.b16 %v1885, %v1884
        %v1906 = vpack.c.b16 %v1887, %v1886
        %v1907 = vpack.c.b16 %v1889, %v1888
        %v1908 = vpack.c.b16 %v1891, %v1890
        %v1909 = vpack.c.b16 %v1893, %v1892
        %1926 = vmatprep.subr.bf16.mxu0 0
        %1927 = vmatpush1.bf16.msra.mxu0 %v1894
        %1928 = vmatprep.subr.bf16.mxu0 0
        %1929 = vmatpush1.bf16.msra.mxu0 %v1895
        %1930 = vmatprep.subr.bf16.mxu0 0
        %1931 = vmatpush1.bf16.msra.mxu0 %v1896
        %1932 = vmatprep.subr.bf16.mxu0 0
        %1933 = vmatpush1.bf16.msra.mxu0 %v1897
        %1934 = vmatprep.subr.bf16.mxu0 0
        %1935 = vmatpush1.bf16.msra.mxu0 %v1898
        %1936 = vmatprep.subr.bf16.mxu0 0
        %1937 = vmatpush1.bf16.msra.mxu0 %v1899
        %1938 = vmatprep.subr.bf16.mxu0 0
        %1939 = vmatpush1.bf16.msra.mxu0 %v1900
        %1940 = vmatprep.subr.bf16.mxu0 0
        %1941 = vmatpush1.bf16.msra.mxu0 %v1901
        %1942 = vmatprep.subr.bf16.mxu0 0
        %1943 = vmatpush1.bf16.msra.mxu0 %v1902
        %1944 = vmatprep.subr.bf16.mxu0 0
        %1945 = vmatpush1.bf16.msra.mxu0 %v1903
        %1946 = vmatprep.subr.bf16.mxu0 0
        %1947 = vmatpush1.bf16.msra.mxu0 %v1904
        %1948 = vmatprep.subr.bf16.mxu0 0
        %1949 = vmatpush1.bf16.msra.mxu0 %v1905
        %1950 = vmatprep.subr.bf16.mxu0 0
        %1951 = vmatpush1.bf16.msra.mxu0 %v1906
        %1952 = vmatprep.subr.bf16.mxu0 0
        %1953 = vmatpush1.bf16.msra.mxu0 %v1907
        %1954 = vmatprep.subr.bf16.mxu0 0
        %1955 = vmatpush1.bf16.msra.mxu0 %v1908
        %1956 = vmatprep.subr.bf16.mxu0 0
        %1957 = vmatpush1.bf16.msra.mxu0 %v1909
        %1958 = vmatprep.mubr.bf16.mxu0 %v1759
        %1959 = vmatmul.mubr.bf16.gmra.mrb[0].mxu0 %v1753
        %v1960 = vpop.f32.mrb[0].mxu0
        %v1961 = vadd.f32 0.0, %v1960
        %v1962 = vpop.f32.mrb[0].mxu0
        %v1963 = vpop.f32.mrb[0].mxu0
        %v1964 = vadd.f32 0.0, %v1963
        %v1965 = vpop.f32.mrb[0].mxu0
        %1966 = vmatprep.mubr.bf16.mxu0 %v1762
        %1967 = vmatmul.mubr.bf16.gmra.mrb[0].mxu0 %v1756
        %v1968 = vpop.f32.mrb[0].mxu0
        %v1969 = vadd.f32 0.0, %v1968
        %v1970 = vpop.f32.mrb[0].mxu0
        %v1971 = vpop.f32.mrb[0].mxu0
        %v1972 = vadd.f32 0.0, %v1971
        %v1973 = vpop.f32.mrb[0].mxu0
        %1974 = vmatprep.mubr.bf16.mxu0 %v1765
        %1975 = vmatmul.mubr.bf16.gmra.mrb[0].mxu0 %v1759
        %v1976 = vpop.f32.mrb[0].mxu0
        %v1977 = vadd.f32 0.0, %v1976
        %v1978 = vpop.f32.mrb[0].mxu0
        %v1979 = vpop.f32.mrb[0].mxu0
        %v1980 = vadd.f32 0.0, %v1979
        %v1981 = vpop.f32.mrb[0].mxu0
        %1982 = vmatprep.mubr.bf16.mxu0 %v1768
        %1983 = vmatmul.mubr.bf16.gmra.mrb[0].mxu0 %v1762
        %v1984 = vpop.f32.mrb[0].mxu0
        %v1985 = vadd.f32 0.0, %v1984
        %v1986 = vpop.f32.mrb[0].mxu0
        %v1987 = vpop.f32.mrb[0].mxu0
        %v1988 = vadd.f32 0.0, %v1987
        %v1989 = vpop.f32.mrb[0].mxu0
        %1990 = vmatprep.mubr.bf16.mxu0 %v1771
        %1991 = vmatmul.mubr.bf16.gmra.mrb[0].mxu0 %v1765
        %v1992 = vpop.f32.mrb[0].mxu0
        %v1993 = vadd.f32 0.0, %v1992
        %v1994 = vpop.f32.mrb[0].mxu0
        %v1995 = vpop.f32.mrb[0].mxu0
        %v1996 = vadd.f32 0.0, %v1995
        %v1997 = vpop.f32.mrb[0].mxu0
        %1998 = vmatprep.mubr.bf16.mxu0 %v1774
        %1999 = vmatmul.mubr.bf16.gmra.mrb[0].mxu0 %v1768
        %v2000 = vpop.f32.mrb[0].mxu0
        %v2001 = vadd.f32 0.0, %v2000
        %v2002 = vpop.f32.mrb[0].mxu0
        %v2003 = vpop.f32.mrb[0].mxu0
        %v2004 = vadd.f32 0.0, %v2003
        %v2005 = vpop.f32.mrb[0].mxu0
        %2006 = vmatprep.mubr.bf16.mxu0 %v1777
        %2007 = vmatmul.mubr.bf16.gmra.mrb[0].mxu0 %v1771
        %v2008 = vpop.f32.mrb[0].mxu0
        %v2009 = vadd.f32 0.0, %v2008
        %v2010 = vpop.f32.mrb[0].mxu0
        %v2011 = vpop.f32.mrb[0].mxu0
        %v2012 = vadd.f32 0.0, %v2011
        %v2013 = vpop.f32.mrb[0].mxu0
        %2014 = vmatprep.mubr.bf16.mxu0 %v1780
        %2015 = vmatmul.mubr.bf16.gmra.mrb[0].mxu0 %v1774
        %v2016 = vpop.f32.mrb[0].mxu0
        %v2017 = vadd.f32 0.0, %v2016
        %v2018 = vpop.f32.mrb[0].mxu0
        %v2019 = vpop.f32.mrb[0].mxu0
        %v2020 = vadd.f32 0.0, %v2019
        %v2021 = vpop.f32.mrb[0].mxu0
        %2022 = vmatprep.mubr.bf16.mxu0 %v1783
        %2023 = vmatmul.mubr.bf16.gmra.mrb[0].mxu0 %v1777
        %v2024 = vpop.f32.mrb[0].mxu0
        %v2025 = vadd.f32 0.0, %v2024
        %v2026 = vpop.f32.mrb[0].mxu0
        %v2027 = vpop.f32.mrb[0].mxu0
        %v2028 = vadd.f32 0.0, %v2027
        %v2029 = vpop.f32.mrb[0].mxu0
        %2030 = vmatprep.mubr.bf16.mxu0 %v1786
        %2031 = vmatmul.mubr.bf16.gmra.mrb[0].mxu0 %v1780
        %v2032 = vpop.f32.mrb[0].mxu0
        %v2033 = vadd.f32 0.0, %v2032
        %v2034 = vpop.f32.mrb[0].mxu0
        %v2035 = vpop.f32.mrb[0].mxu0
        %v2036 = vadd.f32 0.0, %v2035
        %v2037 = vpop.f32.mrb[0].mxu0
        %2038 = vmatprep.mubr.bf16.mxu0 %v1789
        %2039 = vmatmul.mubr.bf16.gmra.mrb[0].mxu0 %v1783
        %v2040 = vpop.f32.mrb[0].mxu0
        %v2041 = vadd.f32 0.0, %v2040
        %v2042 = vpop.f32.mrb[0].mxu0
        %v2043 = vpop.f32.mrb[0].mxu0
        %v2044 = vadd.f32 0.0, %v2043
        %v2045 = vpop.f32.mrb[0].mxu0
        %2046 = vmatprep.mubr.bf16.mxu0 %v1792
        %2047 = vmatmul.mubr.bf16.gmra.mrb[0].mxu0 %v1786
        %v2048 = vpop.f32.mrb[0].mxu0
        %v2049 = vadd.f32 0.0, %v2048
        %v2050 = vpop.f32.mrb[0].mxu0
        %v2051 = vpop.f32.mrb[0].mxu0
        %v2052 = vadd.f32 0.0, %v2051
        %v2053 = vpop.f32.mrb[0].mxu0
        %2054 = vmatprep.mubr.bf16.mxu0 %v1795
        %2055 = vmatmul.mubr.bf16.gmra.mrb[0].mxu0 %v1789
        %v2056 = vpop.f32.mrb[0].mxu0
        %v2057 = vadd.f32 0.0, %v2056
        %v2058 = vpop.f32.mrb[0].mxu0
        %v2059 = vpop.f32.mrb[0].mxu0
        %v2060 = vadd.f32 0.0, %v2059
        %v2061 = vpop.f32.mrb[0].mxu0
        %2062 = vmatprep.mubr.bf16.mxu0 %v1798
        %2063 = vmatmul.mubr.bf16.gmra.mrb[0].mxu0 %v1792
        %v2064 = vpop.f32.mrb[0].mxu0
        %v2065 = vadd.f32 0.0, %v2064
        %v2066 = vpop.f32.mrb[0].mxu0
        %v2067 = vpop.f32.mrb[0].mxu0
        %v2068 = vadd.f32 0.0, %v2067
        %v2069 = vpop.f32.mrb[0].mxu0
        %2070 = vmatprep.mubr.bf16.mxu0 %v1825
        %2071 = vmatmul.mubr.bf16.gmra.mrb[0].mxu0 %v1795
        %v2072 = vpop.f32.mrb[0].mxu0
        %v2073 = vadd.f32 0.0, %v2072
        %v2074 = vpop.f32.mrb[0].mxu0
        %v2075 = vpop.f32.mrb[0].mxu0
        %v2076 = vadd.f32 0.0, %v2075
        %v2077 = vpop.f32.mrb[0].mxu0
        %2078 = vmatprep.mubr.bf16.mxu0 %v1828
        %2079 = vmatmul.mubr.bf16.gmra.mrb[0].mxu0 %v1798
        %v2080 = vpop.f32.mrb[0].mxu0
        %v2081 = vadd.f32 0.0, %v2080
        %v2082 = vpop.f32.mrb[0].mxu0
        %v2083 = vpop.f32.mrb[0].mxu0
        %v2084 = vadd.f32 0.0, %v2083
        %v2085 = vpop.f32.mrb[0].mxu0
        %2086 = vdwg.mxu0
        %v2087 = vld [vmem:[%s2] sm:$0x1]
        %v2089 = vlaneseq
        %v2090 = vshrl.u32 %v2089, 7
        %v2091 = vsub.s32 0, %v2090
        %v2092 = vrot.slane %v2087, %v2091
        %v2094 = vmul.f32 %v1961, %v2092
        %v2095 = vmul.f32 %v1964, %v2092
        %v2096 = vmul.f32 %v1969, %v2092
        %v2097 = vmul.f32 %v1972, %v2092
        %v2098 = vmul.f32 %v1977, %v2092
        %v2099 = vmul.f32 %v1980, %v2092
        %v2100 = vmul.f32 %v1985, %v2092
        %v2101 = vmul.f32 %v1988, %v2092
        %v2102 = vmul.f32 %v1993, %v2092
        %v2103 = vmul.f32 %v1996, %v2092
        %v2104 = vmul.f32 %v2001, %v2092
        %v2105 = vmul.f32 %v2004, %v2092
        %v2106 = vmul.f32 %v2009, %v2092
        %v2107 = vmul.f32 %v2012, %v2092
        %v2108 = vmul.f32 %v2017, %v2092
        %v2109 = vmul.f32 %v2020, %v2092
        %v2110 = vmul.f32 %v2025, %v2092
        %v2111 = vmul.f32 %v2028, %v2092
        %v2112 = vmul.f32 %v2033, %v2092
        %v2113 = vmul.f32 %v2036, %v2092
        %v2114 = vmul.f32 %v2041, %v2092
        %v2115 = vmul.f32 %v2044, %v2092
        %v2116 = vmul.f32 %v2049, %v2092
        %v2117 = vmul.f32 %v2052, %v2092
        %v2118 = vmul.f32 %v2057, %v2092
        %v2119 = vmul.f32 %v2060, %v2092
        %v2120 = vmul.f32 %v2065, %v2092
        %v2121 = vmul.f32 %v2068, %v2092
        %v2122 = vmul.f32 %v2073, %v2092
        %v2123 = vmul.f32 %v2076, %v2092
        %v2124 = vmul.f32 %v2081, %v2092
        %v2125 = vmul.f32 %v2084, %v2092
        %v2126 = vld [vmem:[%s3] sm:$0x1]
        %v2128 = vlaneseq
        %v2129 = vshrl.u32 %v2128, 7
        %v2130 = vsub.s32 0, %v2129
        %v2131 = vrot.slane %v2126, %v2130
        %v2133 = vadd.f32 %v2094, %v2131
        %v2134 = vadd.f32 %v2095, %v2131
        %v2135 = vadd.f32 %v2096, %v2131
        %v2136 = vadd.f32 %v2097, %v2131
        %v2137 = vadd.f32 %v2098, %v2131
        %v2138 = vadd.f32 %v2099, %v2131
        %v2139 = vadd.f32 %v2100, %v2131
        %v2140 = vadd.f32 %v2101, %v2131
        %v2141 = vadd.f32 %v2102, %v2131
        %v2142 = vadd.f32 %v2103, %v2131
        %v2143 = vadd.f32 %v2104, %v2131
        %v2144 = vadd.f32 %v2105, %v2131
        %v2145 = vadd.f32 %v2106, %v2131
        %v2146 = vadd.f32 %v2107, %v2131
        %v2147 = vadd.f32 %v2108, %v2131
        %v2148 = vadd.f32 %v2109, %v2131
        %v2149 = vadd.f32 %v2110, %v2131
        %v2150 = vadd.f32 %v2111, %v2131
        %v2151 = vadd.f32 %v2112, %v2131
        %v2152 = vadd.f32 %v2113, %v2131
        %v2153 = vadd.f32 %v2114, %v2131
        %v2154 = vadd.f32 %v2115, %v2131
        %v2155 = vadd.f32 %v2116, %v2131
        %v2156 = vadd.f32 %v2117, %v2131
        %v2157 = vadd.f32 %v2118, %v2131
        %v2158 = vadd.f32 %v2119, %v2131
        %v2159 = vadd.f32 %v2120, %v2131
        %v2160 = vadd.f32 %v2121, %v2131
        %v2161 = vadd.f32 %v2122, %v2131
        %v2162 = vadd.f32 %v2123, %v2131
        %v2163 = vadd.f32 %v2124, %v2131
        %v2164 = vadd.f32 %v2125, %v2131
        %v2165 = vmax.f32 %v2133, 0.0
        %v2166 = vmax.f32 %v2134, 0.0
        %v2167 = vmax.f32 %v2135, 0.0
        %v2168 = vmax.f32 %v2136, 0.0
        %v2169 = vmax.f32 %v2137, 0.0
        %v2170 = vmax.f32 %v2138, 0.0
        %v2171 = vmax.f32 %v2139, 0.0
        %v2172 = vmax.f32 %v2140, 0.0
        %v2173 = vmax.f32 %v2141, 0.0
        %v2174 = vmax.f32 %v2142, 0.0
        %v2175 = vmax.f32 %v2143, 0.0
        %v2176 = vmax.f32 %v2144, 0.0
        %v2177 = vmax.f32 %v2145, 0.0
        %v2178 = vmax.f32 %v2146, 0.0
        %v2179 = vmax.f32 %v2147, 0.0
        %v2180 = vmax.f32 %v2148, 0.0
        %v2181 = vmax.f32 %v2149, 0.0
        %v2182 = vmax.f32 %v2150, 0.0
        %v2183 = vmax.f32 %v2151, 0.0
        %v2184 = vmax.f32 %v2152, 0.0
        %v2185 = vmax.f32 %v2153, 0.0
        %v2186 = vmax.f32 %v2154, 0.0
        %v2187 = vmax.f32 %v2155, 0.0
        %v2188 = vmax.f32 %v2156, 0.0
        %v2189 = vmax.f32 %v2157, 0.0
        %v2190 = vmax.f32 %v2158, 0.0
        %v2191 = vmax.f32 %v2159, 0.0
        %v2192 = vmax.f32 %v2160, 0.0
        %v2193 = vmax.f32 %v2161, 0.0
        %v2194 = vmax.f32 %v2162, 0.0
        %v2195 = vmax.f32 %v2163, 0.0
        %v2196 = vmax.f32 %v2164, 0.0
        %vm2229 = vcmask 1040384
        %v2230 = vrot.slane %v2165, 7
        %v2231 = vrot.slane %v2166, 7
        %v2232 = vsel %vm2229, %v2230, %v2231
        %v2233 = vrot.slane %v2167, 7
        %v2234 = vrot.slane %v2168, 7
        %v2235 = vsel %vm2229, %v2233, %v2234
        %v2236 = vrot.slane %v2169, 7
        %v2237 = vrot.slane %v2170, 7
        %v2238 = vsel %vm2229, %v2236, %v2237
        %v2239 = vrot.slane %v2171, 7
        %v2240 = vrot.slane %v2172, 7
        %v2241 = vsel %vm2229, %v2239, %v2240
        %v2242 = vrot.slane %v2173, 7
        %v2243 = vrot.slane %v2174, 7
        %v2244 = vsel %vm2229, %v2242, %v2243
        %v2245 = vrot.slane %v2175, 7
        %v2246 = vrot.slane %v2176, 7
        %v2247 = vsel %vm2229, %v2245, %v2246
        %v2248 = vrot.slane %v2177, 7
        %v2249 = vrot.slane %v2178, 7
        %v2250 = vsel %vm2229, %v2248, %v2249
        %v2251 = vrot.slane %v2179, 7
        %v2252 = vrot.slane %v2180, 7
        %v2253 = vsel %vm2229, %v2251, %v2252
        %v2254 = vrot.slane %v2181, 7
        %v2255 = vrot.slane %v2182, 7
        %v2256 = vsel %vm2229, %v2254, %v2255
        %v2257 = vrot.slane %v2183, 7
        %v2258 = vrot.slane %v2184, 7
        %v2259 = vsel %vm2229, %v2257, %v2258
        %v2260 = vrot.slane %v2185, 7
        %v2261 = vrot.slane %v2186, 7
        %v2262 = vsel %vm2229, %v2260, %v2261
        %v2263 = vrot.slane %v2187, 7
        %v2264 = vrot.slane %v2188, 7
        %v2265 = vsel %vm2229, %v2263, %v2264
        %v2266 = vrot.slane %v2189, 7
        %v2267 = vrot.slane %v2190, 7
        %v2268 = vsel %vm2229, %v2266, %v2267
        %v2269 = vrot.slane %v2191, 7
        %v2270 = vrot.slane %v2192, 7
        %v2271 = vsel %vm2229, %v2269, %v2270
        %v2272 = vrot.slane %v2193, 7
        %v2273 = vrot.slane %v2194, 7
        %v2274 = vsel %vm2229, %v2272, %v2273
        %v2275 = vrot.slane %v2195, 7
        %v2276 = vrot.slane %v2196, 7
        %v2277 = vsel %vm2229, %v2275, %v2276
        %v2326 = vsel %vm2229, 0.0, %v2230
        %v2327 = vsel %vm2229, 0.0, %v2233
        %v2328 = vsel %vm2229, 0.0, %v2236
        %v2329 = vsel %vm2229, 0.0, %v2239
        %v2330 = vsel %vm2229, 0.0, %v2242
        %v2331 = vsel %vm2229, 0.0, %v2245
        %v2332 = vsel %vm2229, 0.0, %v2248
        %v2333 = vsel %vm2229, 0.0, %v2251
        %v2334 = vsel %vm2229, 0.0, %v2254
        %v2335 = vsel %vm2229, 0.0, %v2257
        %v2336 = vsel %vm2229, 0.0, %v2260
        %v2337 = vsel %vm2229, 0.0, %v2263
        %v2338 = vsel %vm2229, 0.0, %v2266
        %v2339 = vsel %vm2229, 0.0, %v2269
        %v2340 = vsel %vm2229, 0.0, %v2272
        %v2341 = vsel %vm2229, 0.0, %v2275
        %v2342 = vsel %vm2229, %v2231, 0.0
        %v2343 = vsel %vm2229, %v2234, 0.0
        %v2344 = vsel %vm2229, %v2237, 0.0
        %v2345 = vsel %vm2229, %v2240, 0.0
        %v2346 = vsel %vm2229, %v2243, 0.0
        %v2347 = vsel %vm2229, %v2246, 0.0
        %v2348 = vsel %vm2229, %v2249, 0.0
        %v2349 = vsel %vm2229, %v2252, 0.0
        %v2350 = vsel %vm2229, %v2255, 0.0
        %v2351 = vsel %vm2229, %v2258, 0.0
        %v2352 = vsel %vm2229, %v2261, 0.0
        %v2353 = vsel %vm2229, %v2264, 0.0
        %v2354 = vsel %vm2229, %v2267, 0.0
        %v2355 = vsel %vm2229, %v2270, 0.0
        %v2356 = vsel %vm2229, %v2273, 0.0
        %v2357 = vsel %vm2229, %v2276, 0.0
        %v2358 = vmax.f32 %v2326, 0.0
        %v2359 = vmax.f32 %v2232, 0.0
        %v2360 = vmax.f32 %v2342, 0.0
        %v2361 = vmax.f32 %v2327, %v2328
        %v2362 = vmax.f32 %v2235, %v2238
        %v2363 = vmax.f32 %v2343, %v2344
        %v2364 = vmax.f32 %v2329, %v2330
        %v2365 = vmax.f32 %v2241, %v2244
        %v2366 = vmax.f32 %v2345, %v2346
        %v2367 = vmax.f32 %v2331, %v2332
        %v2368 = vmax.f32 %v2247, %v2250
        %v2369 = vmax.f32 %v2347, %v2348
        %v2370 = vmax.f32 %v2333, %v2334
        %v2371 = vmax.f32 %v2253, %v2256
        %v2372 = vmax.f32 %v2349, %v2350
        %v2373 = vmax.f32 %v2335, %v2336
        %v2374 = vmax.f32 %v2259, %v2262
        %v2375 = vmax.f32 %v2351, %v2352
        %v2376 = vmax.f32 %v2337, %v2338
        %v2377 = vmax.f32 %v2265, %v2268
        %v2378 = vmax.f32 %v2353, %v2354
        %v2379 = vmax.f32 %v2339, %v2340
        %v2380 = vmax.f32 %v2271, %v2274
        %v2381 = vmax.f32 %v2355, %v2356
        %v2382 = vmax.f32 %v2358, %v2327
        %v2383 = vmax.f32 %v2359, %v2235
        %v2384 = vmax.f32 %v2360, %v2343
        %v2385 = vmax.f32 %v2361, %v2329
        %v2386 = vmax.f32 %v2362, %v2241
        %v2387 = vmax.f32 %v2363, %v2345
        %v2388 = vmax.f32 %v2364, %v2331
        %v2389 = vmax.f32 %v2365, %v2247
        %v2390 = vmax.f32 %v2366, %v2347
        %v2391 = vmax.f32 %v2367, %v2333
        %v2392 = vmax.f32 %v2368, %v2253
        %v2393 = vmax.f32 %v2369, %v2349
        %v2394 = vmax.f32 %v2370, %v2335
        %v2395 = vmax.f32 %v2371, %v2259
        %v2396 = vmax.f32 %v2372, %v2351
        %v2397 = vmax.f32 %v2373, %v2337
        %v2398 = vmax.f32 %v2374, %v2265
        %v2399 = vmax.f32 %v2375, %v2353
        %v2400 = vmax.f32 %v2376, %v2339
        %v2401 = vmax.f32 %v2377, %v2271
        %v2402 = vmax.f32 %v2378, %v2355
        %v2403 = vmax.f32 %v2379, %v2341
        %v2404 = vmax.f32 %v2380, %v2277
        %v2405 = vmax.f32 %v2381, %v2357
        %vm2430 = vcmask 1046528
        %v2431 = vrot.slane %v2382, 1
        %v2432 = vrot.slane %v2383, 1
        %v2433 = vsel %vm2430, %v2431, %v2432
        %v2434 = vrot.slane %v2384, 1
        %v2435 = vsel %vm2430, %v2432, %v2434
        %v2436 = vrot.slane %v2385, 1
        %v2437 = vrot.slane %v2386, 1
        %v2438 = vsel %vm2430, %v2436, %v2437
        %v2439 = vrot.slane %v2387, 1
        %v2440 = vsel %vm2430, %v2437, %v2439
        %v2441 = vrot.slane %v2388, 1
        %v2442 = vrot.slane %v2389, 1
        %v2443 = vsel %vm2430, %v2441, %v2442
        %v2444 = vrot.slane %v2390, 1
        %v2445 = vsel %vm2430, %v2442, %v2444
        %v2446 = vrot.slane %v2391, 1
        %v2447 = vrot.slane %v2392, 1
        %v2448 = vsel %vm2430, %v2446, %v2447
        %v2449 = vrot.slane %v2393, 1
        %v2450 = vsel %vm2430, %v2447, %v2449
        %v2451 = vrot.slane %v2394, 1
        %v2452 = vrot.slane %v2395, 1
        %v2453 = vsel %vm2430, %v2451, %v2452
        %v2454 = vrot.slane %v2396, 1
        %v2455 = vsel %vm2430, %v2452, %v2454
        %v2456 = vrot.slane %v2397, 1
        %v2457 = vrot.slane %v2398, 1
        %v2458 = vsel %vm2430, %v2456, %v2457
        %v2459 = vrot.slane %v2399, 1
        %v2460 = vsel %vm2430, %v2457, %v2459
        %v2461 = vrot.slane %v2400, 1
        %v2462 = vrot.slane %v2401, 1
        %v2463 = vsel %vm2430, %v2461, %v2462
        %v2464 = vrot.slane %v2402, 1
        %v2465 = vsel %vm2430, %v2462, %v2464
        %v2466 = vrot.slane %v2403, 1
        %v2467 = vrot.slane %v2404, 1
        %v2468 = vsel %vm2430, %v2466, %v2467
        %v2469 = vrot.slane %v2405, 1
        %v2470 = vsel %vm2430, %v2467, %v2469
        %v2487 = vmax.f32 %v2382, %v2433
        %v2488 = vmax.f32 %v2383, %v2435
        %v2489 = vmax.f32 %v2385, %v2438
        %v2490 = vmax.f32 %v2386, %v2440
        %v2491 = vmax.f32 %v2388, %v2443
        %v2492 = vmax.f32 %v2389, %v2445
        %v2493 = vmax.f32 %v2391, %v2448
        %v2494 = vmax.f32 %v2392, %v2450
        %v2495 = vmax.f32 %v2394, %v2453
        %v2496 = vmax.f32 %v2395, %v2455
        %v2497 = vmax.f32 %v2397, %v2458
        %v2498 = vmax.f32 %v2398, %v2460
        %v2499 = vmax.f32 %v2400, %v2463
        %v2500 = vmax.f32 %v2401, %v2465
        %v2501 = vmax.f32 %v2403, %v2468
        %v2502 = vmax.f32 %v2404, %v2470
        %vm2503 = vcmask 1045504
        %v2504 = vrot.slane %v2382, 2
        %v2505 = vrot.slane %v2383, 2
        %v2506 = vsel %vm2503, %v2504, %v2505
        %v2507 = vrot.slane %v2384, 2
        %v2508 = vsel %vm2503, %v2505, %v2507
        %v2509 = vrot.slane %v2385, 2
        %v2510 = vrot.slane %v2386, 2
        %v2511 = vsel %vm2503, %v2509, %v2510
        %v2512 = vrot.slane %v2387, 2
        %v2513 = vsel %vm2503, %v2510, %v2512
        %v2514 = vrot.slane %v2388, 2
        %v2515 = vrot.slane %v2389, 2
        %v2516 = vsel %vm2503, %v2514, %v2515
        %v2517 = vrot.slane %v2390, 2
        %v2518 = vsel %vm2503, %v2515, %v2517
        %v2519 = vrot.slane %v2391, 2
        %v2520 = vrot.slane %v2392, 2
        %v2521 = vsel %vm2503, %v2519, %v2520
        %v2522 = vrot.slane %v2393, 2
        %v2523 = vsel %vm2503, %v2520, %v2522
        %v2524 = vrot.slane %v2394, 2
        %v2525 = vrot.slane %v2395, 2
        %v2526 = vsel %vm2503, %v2524, %v2525
        %v2527 = vrot.slane %v2396, 2
        %v2528 = vsel %vm2503, %v2525, %v2527
        %v2529 = vrot.slane %v2397, 2
        %v2530 = vrot.slane %v2398, 2
        %v2531 = vsel %vm2503, %v2529, %v2530
        %v2532 = vrot.slane %v2399, 2
        %v2533 = vsel %vm2503, %v2530, %v2532
        %v2534 = vrot.slane %v2400, 2
        %v2535 = vrot.slane %v2401, 2
        %v2536 = vsel %vm2503, %v2534, %v2535
        %v2537 = vrot.slane %v2402, 2
        %v2538 = vsel %vm2503, %v2535, %v2537
        %v2539 = vrot.slane %v2403, 2
        %v2540 = vrot.slane %v2404, 2
        %v2541 = vsel %vm2503, %v2539, %v2540
        %v2542 = vrot.slane %v2405, 2
        %v2543 = vsel %vm2503, %v2540, %v2542
        %v2560 = vmax.f32 %v2487, %v2506
        %v2561 = vmax.f32 %v2488, %v2508
        %v2562 = vmax.f32 %v2489, %v2511
        %v2563 = vmax.f32 %v2490, %v2513
        %v2564 = vmax.f32 %v2491, %v2516
        %v2565 = vmax.f32 %v2492, %v2518
        %v2566 = vmax.f32 %v2493, %v2521
        %v2567 = vmax.f32 %v2494, %v2523
        %v2568 = vmax.f32 %v2495, %v2526
        %v2569 = vmax.f32 %v2496, %v2528
        %v2570 = vmax.f32 %v2497, %v2531
        %v2571 = vmax.f32 %v2498, %v2533
        %v2572 = vmax.f32 %v2499, %v2536
        %v2573 = vmax.f32 %v2500, %v2538
        %v2574 = vmax.f32 %v2501, %v2541
        %v2575 = vmax.f32 %v2502, %v2543
        %v2584 = vrot.slane %v2560, 1
        %v2585 = vrot.slane %v2562, 1
        %v2586 = vrot.slane %v2564, 1
        %v2587 = vrot.slane %v2566, 1
        %v2588 = vrot.slane %v2568, 1
        %v2589 = vrot.slane %v2570, 1
        %v2590 = vrot.slane %v2572, 1
        %v2591 = vrot.slane %v2574, 1
        %v2600 = vrot.slane %v2560, 2
        %v2601 = vrot.slane %v2562, 2
        %v2602 = vrot.slane %v2564, 2
        %v2603 = vrot.slane %v2566, 2
        %v2604 = vrot.slane %v2568, 2
        %v2605 = vrot.slane %v2570, 2
        %v2606 = vrot.slane %v2572, 2
        %v2607 = vrot.slane %v2574, 2
        %v2616 = vrot.slane %v2560, 3
        %v2617 = vrot.slane %v2562, 3
        %v2618 = vrot.slane %v2564, 3
        %v2619 = vrot.slane %v2566, 3
        %v2620 = vrot.slane %v2568, 3
        %v2621 = vrot.slane %v2570, 3
        %v2622 = vrot.slane %v2572, 3
        %v2623 = vrot.slane %v2574, 3
        %v2640 = vrot.slane %v2561, 4
        %v2641 = vrot.slane %v2563, 4
        %v2642 = vrot.slane %v2565, 4
        %v2643 = vrot.slane %v2567, 4
        %v2644 = vrot.slane %v2569, 4
        %v2645 = vrot.slane %v2571, 4
        %v2646 = vrot.slane %v2573, 4
        %v2647 = vrot.slane %v2575, 4
        %v2656 = vrot.slane %v2561, 5
        %v2657 = vrot.slane %v2563, 5
        %v2658 = vrot.slane %v2565, 5
        %v2659 = vrot.slane %v2567, 5
        %v2660 = vrot.slane %v2569, 5
        %v2661 = vrot.slane %v2571, 5
        %v2662 = vrot.slane %v2573, 5
        %v2663 = vrot.slane %v2575, 5
        %v2672 = vrot.slane %v2561, 6
        %v2673 = vrot.slane %v2563, 6
        %v2674 = vrot.slane %v2565, 6
        %v2675 = vrot.slane %v2567, 6
        %v2676 = vrot.slane %v2569, 6
        %v2677 = vrot.slane %v2571, 6
        %v2678 = vrot.slane %v2573, 6
        %v2679 = vrot.slane %v2575, 6
        %v2688 = vrot.slane %v2561, 7
        %v2689 = vrot.slane %v2563, 7
        %v2690 = vrot.slane %v2565, 7
        %v2691 = vrot.slane %v2567, 7
        %v2692 = vrot.slane %v2569, 7
        %v2693 = vrot.slane %v2571, 7
        %v2694 = vrot.slane %v2573, 7
        %v2695 = vrot.slane %v2575, 7
        %v2704 = vsel %vm2229, %v2560, %v2584
        %v2705 = vsel %vm2229, %v2562, %v2585
        %v2706 = vsel %vm2229, %v2564, %v2586
        %v2707 = vsel %vm2229, %v2566, %v2587
        %v2708 = vsel %vm2229, %v2568, %v2588
        %v2709 = vsel %vm2229, %v2570, %v2589
        %v2710 = vsel %vm2229, %v2572, %v2590
        %v2711 = vsel %vm2229, %v2574, %v2591
        %vm2712 = vcmask 1041408
        %v2713 = vsel %vm2712, %v2704, %v2600
        %v2714 = vsel %vm2712, %v2705, %v2601
        %v2715 = vsel %vm2712, %v2706, %v2602
        %v2716 = vsel %vm2712, %v2707, %v2603
        %v2717 = vsel %vm2712, %v2708, %v2604
        %v2718 = vsel %vm2712, %v2709, %v2605
        %v2719 = vsel %vm2712, %v2710, %v2606
        %v2720 = vsel %vm2712, %v2711, %v2607
        %vm2721 = vcmask 1042432
        %v2722 = vsel %vm2721, %v2713, %v2616
        %v2723 = vsel %vm2721, %v2714, %v2617
        %v2724 = vsel %vm2721, %v2715, %v2618
        %v2725 = vsel %vm2721, %v2716, %v2619
        %v2726 = vsel %vm2721, %v2717, %v2620
        %v2727 = vsel %vm2721, %v2718, %v2621
        %v2728 = vsel %vm2721, %v2719, %v2622
        %v2729 = vsel %vm2721, %v2720, %v2623
        %vm2730 = vcmask 1043456
        %v2731 = vsel %vm2730, %v2722, %v2640
        %v2732 = vsel %vm2730, %v2723, %v2641
        %v2733 = vsel %vm2730, %v2724, %v2642
        %v2734 = vsel %vm2730, %v2725, %v2643
        %v2735 = vsel %vm2730, %v2726, %v2644
        %v2736 = vsel %vm2730, %v2727, %v2645
        %v2737 = vsel %vm2730, %v2728, %v2646
        %v2738 = vsel %vm2730, %v2729, %v2647
        %vm2739 = vcmask 1044480
        %v2740 = vsel %vm2739, %v2731, %v2656
        %v2741 = vsel %vm2739, %v2732, %v2657
        %v2742 = vsel %vm2739, %v2733, %v2658
        %v2743 = vsel %vm2739, %v2734, %v2659
        %v2744 = vsel %vm2739, %v2735, %v2660
        %v2745 = vsel %vm2739, %v2736, %v2661
        %v2746 = vsel %vm2739, %v2737, %v2662
        %v2747 = vsel %vm2739, %v2738, %v2663
        %v2748 = vsel %vm2503, %v2740, %v2672
        %v2749 = vsel %vm2503, %v2741, %v2673
        %v2750 = vsel %vm2503, %v2742, %v2674
        %v2751 = vsel %vm2503, %v2743, %v2675
        %v2752 = vsel %vm2503, %v2744, %v2676
        %v2753 = vsel %vm2503, %v2745, %v2677
        %v2754 = vsel %vm2503, %v2746, %v2678
        %v2755 = vsel %vm2503, %v2747, %v2679
        %v2756 = vsel %vm2430, %v2748, %v2688
        %v2757 = vsel %vm2430, %v2749, %v2689
        %v2758 = vsel %vm2430, %v2750, %v2690
        %v2759 = vsel %vm2430, %v2751, %v2691
        %v2760 = vsel %vm2430, %v2752, %v2692
        %v2761 = vsel %vm2430, %v2753, %v2693
        %v2762 = vsel %vm2430, %v2754, %v2694
        %v2763 = vsel %vm2430, %v2755, %v2695
        %v2772 = vrot.slane %v2756, 7
        %v2773 = vrot.slane %v2757, 7
        %v2774 = vrot.slane %v2758, 7
        %v2775 = vrot.slane %v2759, 7
        %v2776 = vrot.slane %v2760, 7
        %v2777 = vrot.slane %v2761, 7
        %v2778 = vrot.slane %v2762, 7
        %v2779 = vrot.slane %v2763, 7
        %v2788 = vsel %vm2229, 0.0, %v2772
        %v2789 = vsel %vm2229, 0.0, %v2773
        %v2790 = vsel %vm2229, 0.0, %v2774
        %v2791 = vsel %vm2229, 0.0, %v2775
        %v2792 = vsel %vm2229, 0.0, %v2776
        %v2793 = vsel %vm2229, 0.0, %v2777
        %v2794 = vsel %vm2229, 0.0, %v2778
        %v2795 = vsel %vm2229, 0.0, %v2779
        %v2796 = vsel %vm2229, %v2772, 0.0
        %v2797 = vsel %vm2229, %v2773, 0.0
        %v2798 = vsel %vm2229, %v2774, 0.0
        %v2799 = vsel %vm2229, %v2775, 0.0
        %v2800 = vsel %vm2229, %v2776, 0.0
        %v2801 = vsel %vm2229, %v2777, 0.0
        %v2802 = vsel %vm2229, %v2778, 0.0
        %v2803 = vsel %vm2229, %v2779, 0.0
        %v2804 = vld [vmem:[%s4] sm:$0xf]
        %v2805 = vld [vmem:[%s4 + $0x4] sm:$0xf]
        %v2806 = vld [vmem:[%s4 + $0x8] sm:$0xf]
        %v2807 = vld [vmem:[%s4 + $0xc] sm:$0xf]
        %v2808 = vld [vmem:[%s4 + $0x10] sm:$0xf]
        %v2809 = vld [vmem:[%s4 + $0x14] sm:$0xf]
        %v2810 = vld [vmem:[%s4 + $0x18] sm:$0xf]
        %v2811 = vld [vmem:[%s4 + $0x1c] sm:$0xf]
        %v2812 = vld [vmem:[%s4 + $0x20] sm:$0xf]
        %v2813 = vld [vmem:[%s4 + $0x24] sm:$0xf]
        %v2814 = vld [vmem:[%s4 + $0x28] sm:$0xf]
        %v2815 = vld [vmem:[%s4 + $0x2c] sm:$0xf]
        %v2816 = vld [vmem:[%s4 + $0x30] sm:$0xf]
        %v2817 = vld [vmem:[%s4 + $0x34] sm:$0xf]
        %v2818 = vld [vmem:[%s4 + $0x38] sm:$0xf]
        %v2819 = vld [vmem:[%s4 + $0x3c] sm:$0xf]
        %v2820 = vld [vmem:[%s4 + $0x40] sm:$0xf]
        %v2821 = vld [vmem:[%s4 + $0x44] sm:$0xf]
        %v2822 = vld [vmem:[%s4 + $0x48] sm:$0xf]
        %v2823 = vld [vmem:[%s4 + $0x4c] sm:$0xf]
        %v2824 = vld [vmem:[%s4 + $0x50] sm:$0xf]
        %v2825 = vld [vmem:[%s4 + $0x54] sm:$0xf]
        %v2826 = vld [vmem:[%s4 + $0x58] sm:$0xf]
        %v2827 = vld [vmem:[%s4 + $0x5c] sm:$0xf]
        %v2828 = vld [vmem:[%s4 + $0x60] sm:$0xf]
        %v2829 = vld [vmem:[%s4 + $0x64] sm:$0xf]
        %v2830 = vld [vmem:[%s4 + $0x68] sm:$0xf]
        %v2831 = vld [vmem:[%s4 + $0x6c] sm:$0xf]
        %v2832 = vld [vmem:[%s4 + $0x70] sm:$0xf]
        %v2833 = vld [vmem:[%s4 + $0x74] sm:$0xf]
        %v2834 = vld [vmem:[%s4 + $0x78] sm:$0xf]
        %v2835 = vld [vmem:[%s4 + $0x7c] sm:$0xf]
        %v2836 = vld [vmem:[%s4 + $0x80] sm:$0xf]
        %v2837 = vld [vmem:[%s4 + $0x84] sm:$0xf]
        %v2838 = vld [vmem:[%s4 + $0x88] sm:$0xf]
        %v2839 = vld [vmem:[%s4 + $0x8c] sm:$0xf]
        %v2840 = vld [vmem:[%s4 + $0x90] sm:$0xf]
        %v2841 = vld [vmem:[%s4 + $0x94] sm:$0xf]
        %v2842 = vld [vmem:[%s4 + $0x98] sm:$0xf]
        %v2843 = vld [vmem:[%s4 + $0x9c] sm:$0xf]
        %v2844 = vld [vmem:[%s4 + $0xa0] sm:$0xf]
        %v2845 = vld [vmem:[%s4 + $0xa4] sm:$0xf]
        %v2846 = vld [vmem:[%s4 + $0xa8] sm:$0xf]
        %v2847 = vld [vmem:[%s4 + $0xac] sm:$0xf]
        %v2848 = vld [vmem:[%s4 + $0xb0] sm:$0xf]
        %v2849 = vld [vmem:[%s4 + $0xb4] sm:$0xf]
        %v2850 = vld [vmem:[%s4 + $0xb8] sm:$0xf]
        %v2851 = vld [vmem:[%s4 + $0xbc] sm:$0xf]
        %v2852 = vld [vmem:[%s4 + $0xc0] sm:$0xf]
        %v2853 = vld [vmem:[%s4 + $0xc4] sm:$0xf]
        %v2854 = vld [vmem:[%s4 + $0xc8] sm:$0xf]
        %v2855 = vld [vmem:[%s4 + $0xcc] sm:$0xf]
        %v2856 = vld [vmem:[%s4 + $0xd0] sm:$0xf]
        %v2857 = vld [vmem:[%s4 + $0xd4] sm:$0xf]
        %v2858 = vld [vmem:[%s4 + $0xd8] sm:$0xf]
        %v2859 = vld [vmem:[%s4 + $0xdc] sm:$0xf]
        %v2860 = vld [vmem:[%s4 + $0xe0] sm:$0xf]
        %v2861 = vld [vmem:[%s4 + $0xe4] sm:$0xf]
        %v2862 = vld [vmem:[%s4 + $0xe8] sm:$0xf]
        %v2863 = vld [vmem:[%s4 + $0xec] sm:$0xf]
        %v2864 = vld [vmem:[%s4 + $0xf0] sm:$0xf]
        %v2865 = vld [vmem:[%s4 + $0xf4] sm:$0xf]
        %v2866 = vld [vmem:[%s4 + $0xf8] sm:$0xf]
        %v2867 = vld [vmem:[%s4 + $0xfc] sm:$0xf]
        %v2868 = vld [vmem:[%s4 + $0x100] sm:$0xf]
        %v2869 = vld [vmem:[%s4 + $0x104] sm:$0xf]
        %v2870 = vld [vmem:[%s4 + $0x108] sm:$0xf]
        %v2871 = vld [vmem:[%s4 + $0x10c] sm:$0xf]
        %v2872 = vld [vmem:[%s4 + $0x110] sm:$0xf]
        %v2873 = vld [vmem:[%s4 + $0x114] sm:$0xf]
        %v2874 = vld [vmem:[%s4 + $0x118] sm:$0xf]
        %v2875 = vld [vmem:[%s4 + $0x11c] sm:$0xf]
        %v2891 = vrot.slane 0.0, 1
        %v2892 = vsel %vm2430, %v2891, %v2891
        %v2893 = vrot.slane %v2788, 1
        %v2894 = vrot.slane %v2796, 1
        %v2895 = vsel %vm2430, %v2893, %v2894
        %v2896 = vrot.slane %v2789, 1
        %v2897 = vrot.slane %v2797, 1
        %v2898 = vsel %vm2430, %v2896, %v2897
        %v2899 = vrot.slane %v2790, 1
        %v2900 = vrot.slane %v2798, 1
        %v2901 = vsel %vm2430, %v2899, %v2900
        %v2902 = vrot.slane %v2791, 1
        %v2903 = vrot.slane %v2799, 1
        %v2904 = vsel %vm2430, %v2902, %v2903
        %v2905 = vrot.slane %v2792, 1
        %v2906 = vrot.slane %v2800, 1
        %v2907 = vsel %vm2430, %v2905, %v2906
        %v2908 = vrot.slane %v2793, 1
        %v2909 = vrot.slane %v2801, 1
        %v2910 = vsel %vm2430, %v2908, %v2909
        %v2911 = vrot.slane %v2794, 1
        %v2912 = vrot.slane %v2802, 1
        %v2913 = vsel %vm2430, %v2911, %v2912
        %2914 = vrot.lane.b32.xlu0 %v2892, 64
        %v2915 = vpop.permute.xlu0 %2914
        %2916 = vrot.lane.b32.xlu0 %v2895, 64
        %v2917 = vpop.permute.xlu0 %2916
        %2918 = vrot.lane.b32.xlu0 %v2898, 64
        %v2919 = vpop.permute.xlu0 %2918
        %2920 = vrot.lane.b32.xlu0 %v2901, 64
        %v2921 = vpop.permute.xlu0 %2920
        %2922 = vrot.lane.b32.xlu0 %v2904, 64
        %v2923 = vpop.permute.xlu0 %2922
        %2924 = vrot.lane.b32.xlu0 %v2907, 64
        %v2925 = vpop.permute.xlu0 %2924
        %2926 = vrot.lane.b32.xlu0 %v2910, 64
        %v2927 = vpop.permute.xlu0 %2926
        %2928 = vrot.lane.b32.xlu0 %v2913, 64
        %v2929 = vpop.permute.xlu0 %2928
        %v2938 = vrot.slane 0.0, 2
        %v2939 = vsel %vm2503, %v2938, %v2938
        %v2940 = vrot.slane %v2788, 2
        %v2941 = vrot.slane %v2796, 2
        %v2942 = vsel %vm2503, %v2940, %v2941
        %v2943 = vrot.slane %v2789, 2
        %v2944 = vrot.slane %v2797, 2
        %v2945 = vsel %vm2503, %v2943, %v2944
        %v2946 = vrot.slane %v2790, 2
        %v2947 = vrot.slane %v2798, 2
        %v2948 = vsel %vm2503, %v2946, %v2947
        %v2949 = vrot.slane %v2791, 2
        %v2950 = vrot.slane %v2799, 2
        %v2951 = vsel %vm2503, %v2949, %v2950
        %v2952 = vrot.slane %v2792, 2
        %v2953 = vrot.slane %v2800, 2
        %v2954 = vsel %vm2503, %v2952, %v2953
        %v2955 = vrot.slane %v2793, 2
        %v2956 = vrot.slane %v2801, 2
        %v2957 = vsel %vm2503, %v2955, %v2956
        %v2958 = vrot.slane %v2794, 2
        %v2959 = vrot.slane %v2802, 2
        %v2960 = vsel %vm2503, %v2958, %v2959
        %2970 = vrot.lane.b32.xlu0 %v2788, 64
        %v2971 = vpop.permute.xlu0 %2970
        %2972 = vrot.lane.b32.xlu0 %v2789, 64
        %v2973 = vpop.permute.xlu0 %2972
        %2974 = vrot.lane.b32.xlu0 %v2790, 64
        %v2975 = vpop.permute.xlu0 %2974
        %2976 = vrot.lane.b32.xlu0 %v2791, 64
        %v2977 = vpop.permute.xlu0 %2976
        %2978 = vrot.lane.b32.xlu0 %v2792, 64
        %v2979 = vpop.permute.xlu0 %2978
        %2980 = vrot.lane.b32.xlu0 %v2793, 64
        %v2981 = vpop.permute.xlu0 %2980
        %2982 = vrot.lane.b32.xlu0 %v2794, 64
        %v2983 = vpop.permute.xlu0 %2982
        %2984 = vrot.lane.b32.xlu0 %v2795, 64
        %v2985 = vpop.permute.xlu0 %2984
        %v2995 = vrot.slane %v2795, 1
        %v2996 = vrot.slane %v2803, 1
        %v2997 = vsel %vm2430, %v2995, %v2996
        %v3006 = vrot.slane %v2795, 2
        %v3007 = vrot.slane %v2803, 2
        %v3008 = vsel %vm2503, %v3006, %v3007
        %3009 = vrot.lane.b32.xlu0 %v2942, 64
        %v3010 = vpop.permute.xlu0 %3009
        %3011 = vrot.lane.b32.xlu0 %v2945, 64
        %v3012 = vpop.permute.xlu0 %3011
        %3013 = vrot.lane.b32.xlu0 %v2948, 64
        %v3014 = vpop.permute.xlu0 %3013
        %3015 = vrot.lane.b32.xlu0 %v2951, 64
        %v3016 = vpop.permute.xlu0 %3015
        %3017 = vrot.lane.b32.xlu0 %v2954, 64
        %v3018 = vpop.permute.xlu0 %3017
        %3019 = vrot.lane.b32.xlu0 %v2957, 64
        %v3020 = vpop.permute.xlu0 %3019
        %3021 = vrot.lane.b32.xlu0 %v2960, 64
        %v3022 = vpop.permute.xlu0 %3021
        %3023 = vrot.lane.b32.xlu0 %v3008, 64
        %v3024 = vpop.permute.xlu0 %3023
        %3033 = vrot.lane.b32.xlu0 %v2997, 64
        %v3034 = vpop.permute.xlu0 %3033
        %v3037 = vsel %vm1652, 0.0, %v2915
        %v3038 = vsel %vm1652, %v2788, %v2917
        %v3039 = vsel %vm1652, %v2789, %v2919
        %v3040 = vsel %vm1652, %v2790, %v2921
        %v3041 = vsel %vm1652, %v2791, %v2923
        %v3042 = vsel %vm1652, %v2792, %v2925
        %v3043 = vsel %vm1652, %v2793, %v2927
        %v3044 = vsel %vm1652, %v2794, %v2929
        %v3045 = vsel %vm1652, %v2939, %v2971
        %v3046 = vsel %vm1652, %v2942, %v2973
        %v3047 = vsel %vm1652, %v2945, %v2975
        %v3048 = vsel %vm1652, %v2948, %v2977
        %v3049 = vsel %vm1652, %v2951, %v2979
        %v3050 = vsel %vm1652, %v2954, %v2981
        %v3051 = vsel %vm1652, %v2957, %v2983
        %v3052 = vsel %vm1652, %v2960, %v2985
        %v3053 = vsel %vm1652, %v2895, %v3010
        %v3054 = vsel %vm1652, %v2898, %v3012
        %v3055 = vsel %vm1652, %v2901, %v3014
        %v3056 = vsel %vm1652, %v2904, %v3016
        %v3057 = vsel %vm1652, %v2907, %v3018
        %v3058 = vsel %vm1652, %v2910, %v3020
        %v3059 = vsel %vm1652, %v2913, %v3022
        %v3060 = vsel %vm1652, %v2997, %v3024
        %v3061 = vsel %vm1652, %v2795, %v3034
        %v3062 = vpack.c.bf16 %v3038, %v3037
        %v3063 = vpack.c.bf16 %v3046, %v3045
        %v3064 = vpack.c.bf16 %v3054, %v3053
        %v3065 = vpack.c.bf16 %v3040, %v3039
        %v3066 = vpack.c.bf16 %v2948, %v2945
        %v3067 = vpack.c.bf16 %v3048, %v3047
        %v3068 = vpack.c.bf16 %v3056, %v3055
        %v3069 = vpack.c.bf16 %v3042, %v3041
        %v3070 = vpack.c.bf16 %v2954, %v2951
        %v3071 = vpack.c.bf16 %v3050, %v3049
        %v3072 = vpack.c.bf16 %v3058, %v3057
        %v3073 = vpack.c.bf16 %v3044, %v3043
        %v3074 = vpack.c.bf16 %v2960, %v2957
        %v3075 = vpack.c.bf16 %v3052, %v3051
        %v3076 = vpack.c.bf16 %v3060, %v3059
        %v3077 = vpack.c.bf16 %v3037, %v3061
        %v3078 = vpack.c.bf16 %v2939, %v3008
        %v3151 = vunpack.c.l.b16 %v2804
        %v3152 = vunpack.c.l.b16 %v2805
        %v3153 = vunpack.c.l.b16 %v2806
        %v3154 = vunpack.c.l.b16 %v2807
        %v3155 = vunpack.c.l.b16 %v2808
        %v3156 = vunpack.c.l.b16 %v2809
        %v3157 = vunpack.c.l.b16 %v2810
        %v3158 = vunpack.c.l.b16 %v2811
        %v3159 = vunpack.c.l.b16 %v2812
        %v3160 = vunpack.c.l.b16 %v2813
        %v3161 = vunpack.c.l.b16 %v2814
        %v3162 = vunpack.c.l.b16 %v2815
        %v3163 = vunpack.c.l.b16 %v2816
        %v3164 = vunpack.c.l.b16 %v2817
        %v3165 = vunpack.c.l.b16 %v2818
        %v3166 = vunpack.c.l.b16 %v2819
        %v3167 = vunpack.c.l.b16 %v2820
        %v3168 = vunpack.c.l.b16 %v2821
        %v3169 = vunpack.c.l.b16 %v2822
        %v3170 = vunpack.c.l.b16 %v2823
        %v3171 = vunpack.c.l.b16 %v2824
        %v3172 = vunpack.c.l.b16 %v2825
        %v3173 = vunpack.c.l.b16 %v2826
        %v3174 = vunpack.c.l.b16 %v2827
        %v3175 = vunpack.c.l.b16 %v2828
        %v3176 = vunpack.c.l.b16 %v2829
        %v3177 = vunpack.c.l.b16 %v2830
        %v3178 = vunpack.c.l.b16 %v2831
        %v3179 = vunpack.c.l.b16 %v2832
        %v3180 = vunpack.c.l.b16 %v2833
        %v3181 = vunpack.c.l.b16 %v2834
        %v3182 = vunpack.c.l.b16 %v2835
        %v3183 = vunpack.c.l.b16 %v2836
        %v3184 = vunpack.c.l.b16 %v2837
        %v3185 = vunpack.c.l.b16 %v2838
        %v3186 = vunpack.c.l.b16 %v2839
        %v3187 = vunpack.c.l.b16 %v2840
        %v3188 = vunpack.c.l.b16 %v2841
        %v3189 = vunpack.c.l.b16 %v2842
        %v3190 = vunpack.c.l.b16 %v2843
        %v3191 = vunpack.c.l.b16 %v2844
        %v3192 = vunpack.c.l.b16 %v2845
        %v3193 = vunpack.c.l.b16 %v2846
        %v3194 = vunpack.c.l.b16 %v2847
        %v3195 = vunpack.c.l.b16 %v2848
        %v3196 = vunpack.c.l.b16 %v2849
        %v3197 = vunpack.c.l.b16 %v2850
        %v3198 = vunpack.c.l.b16 %v2851
        %v3199 = vunpack.c.l.b16 %v2852
        %v3200 = vunpack.c.l.b16 %v2853
        %v3201 = vunpack.c.l.b16 %v2854
        %v3202 = vunpack.c.l.b16 %v2855
        %v3203 = vunpack.c.l.b16 %v2856
        %v3204 = vunpack.c.l.b16 %v2857
        %v3205 = vunpack.c.l.b16 %v2858
        %v3206 = vunpack.c.l.b16 %v2859
        %v3207 = vunpack.c.l.b16 %v2860
        %v3208 = vunpack.c.l.b16 %v2861
        %v3209 = vunpack.c.l.b16 %v2862
        %v3210 = vunpack.c.l.b16 %v2863
        %v3211 = vunpack.c.l.b16 %v2864
        %v3212 = vunpack.c.l.b16 %v2865
        %v3213 = vunpack.c.l.b16 %v2866
        %v3214 = vunpack.c.l.b16 %v2867
        %v3215 = vunpack.c.l.b16 %v2868
        %v3216 = vunpack.c.l.b16 %v2869
        %v3217 = vunpack.c.l.b16 %v2870
        %v3218 = vunpack.c.l.b16 %v2871
        %v3219 = vunpack.c.l.b16 %v2872
        %v3220 = vunpack.c.l.b16 %v2873
        %v3221 = vunpack.c.l.b16 %v2874
        %v3222 = vunpack.c.l.b16 %v2875
        %v3223 = vpack.c.b16 %v3152, %v3151
        %v3224 = vpack.c.b16 %v3154, %v3153
        %v3225 = vpack.c.b16 %v3156, %v3155
        %v3226 = vpack.c.b16 %v3158, %v3157
        %v3227 = vpack.c.b16 %v3160, %v3159
        %v3228 = vpack.c.b16 %v3162, %v3161
        %v3229 = vpack.c.b16 %v3164, %v3163
        %v3230 = vpack.c.b16 %v3166, %v3165
        %v3231 = vpack.c.b16 %v3168, %v3167
        %v3232 = vpack.c.b16 %v3170, %v3169
        %v3233 = vpack.c.b16 %v3172, %v3171
        %v3234 = vpack.c.b16 %v3174, %v3173
        %v3235 = vpack.c.b16 %v3176, %v3175
        %v3236 = vpack.c.b16 %v3178, %v3177
        %v3237 = vpack.c.b16 %v3180, %v3179
        %v3238 = vpack.c.b16 %v3182, %v3181
        %v3239 = vpack.c.b16 %v3184, %v3183
        %v3240 = vpack.c.b16 %v3186, %v3185
        %v3241 = vpack.c.b16 %v3188, %v3187
        %v3242 = vpack.c.b16 %v3190, %v3189
        %v3243 = vpack.c.b16 %v3192, %v3191
        %v3244 = vpack.c.b16 %v3194, %v3193
        %v3245 = vpack.c.b16 %v3196, %v3195
        %v3246 = vpack.c.b16 %v3198, %v3197
        %v3247 = vpack.c.b16 %v3200, %v3199
        %v3248 = vpack.c.b16 %v3202, %v3201
        %v3249 = vpack.c.b16 %v3204, %v3203
        %v3250 = vpack.c.b16 %v3206, %v3205
        %v3251 = vpack.c.b16 %v3208, %v3207
        %v3252 = vpack.c.b16 %v3210, %v3209
        %v3253 = vpack.c.b16 %v3212, %v3211
        %v3254 = vpack.c.b16 %v3214, %v3213
        %v3255 = vpack.c.b16 %v3216, %v3215
        %v3256 = vpack.c.b16 %v3218, %v3217
        %v3257 = vpack.c.b16 %v3220, %v3219
        %v3258 = vpack.c.b16 %v3222, %v3221
        %v3296 = vsel %vm1652, %v3066, 0
        %v3299 = vsel %vm1652, %v3070, 0
        %v3302 = vsel %vm1652, %v3074, 0
        %v3305 = vsel %vm1652, %v3078, 0
        %3307 = vmatprep.subr.bf16.mxu0 0
        %3308 = vmatpush1.bf16.msra.mxu0 %v3223
        %3309 = vmatprep.subr.bf16.mxu0 0
        %3310 = vmatpush1.bf16.msra.mxu0 %v3224
        %3311 = vmatprep.subr.bf16.mxu0 0
        %3312 = vmatpush1.bf16.msra.mxu0 %v3225
        %3313 = vmatprep.subr.bf16.mxu0 0
        %3314 = vmatpush1.bf16.msra.mxu0 %v3226
        %3315 = vmatprep.subr.bf16.mxu0 0
        %3316 = vmatpush1.bf16.msra.mxu0 %v3227
        %3317 = vmatprep.subr.bf16.mxu0 0
        %3318 = vmatpush1.bf16.msra.mxu0 %v3228
        %3319 = vmatprep.subr.bf16.mxu0 0
        %3320 = vmatpush1.bf16.msra.mxu0 %v3229
        %3321 = vmatprep.subr.bf16.mxu0 0
        %3322 = vmatpush1.bf16.msra.mxu0 %v3230
        %3323 = vmatprep.subr.bf16.mxu0 0
        %3324 = vmatpush1.bf16.msra.mxu0 %v3231
        %3325 = vmatprep.subr.bf16.mxu0 0
        %3326 = vmatpush1.bf16.msra.mxu0 %v3232
        %3327 = vmatprep.subr.bf16.mxu0 0
        %3328 = vmatpush1.bf16.msra.mxu0 %v3233
        %3329 = vmatprep.subr.bf16.mxu0 0
        %3330 = vmatpush1.bf16.msra.mxu0 %v3234
        %3331 = vmatprep.subr.bf16.mxu0 0
        %3332 = vmatpush1.bf16.msra.mxu0 %v3235
        %3333 = vmatprep.subr.bf16.mxu0 0
        %3334 = vmatpush1.bf16.msra.mxu0 %v3236
        %3335 = vmatprep.subr.bf16.mxu0 0
        %3336 = vmatpush1.bf16.msra.mxu0 %v3237
        %3337 = vmatprep.subr.bf16.mxu0 0
        %3338 = vmatpush1.bf16.msra.mxu0 %v3238
        %3339 = vmatprep.mubr.bf16.mxu0 %v3063
        %3340 = vmatmul.mubr.bf16.gmra.mrb[0].mxu0 %v3062
        %v3341 = vpop.f32.mrb[0].mxu0
        %v3342 = vadd.f32 0.0, %v3341
        %v3343 = vpop.f32.mrb[0].mxu0
        %v3344 = vpop.f32.mrb[0].mxu0
        %v3345 = vadd.f32 0.0, %v3344
        %v3346 = vpop.f32.mrb[0].mxu0
        %3347 = vmatprep.mubr.bf16.mxu0 %v3067
        %3348 = vmatmul.mubr.bf16.gmra.mrb[0].mxu0 %v3065
        %v3349 = vpop.f32.mrb[0].mxu0
        %v3350 = vadd.f32 0.0, %v3349
        %v3351 = vpop.f32.mrb[0].mxu0
        %v3352 = vpop.f32.mrb[0].mxu0
        %v3353 = vadd.f32 0.0, %v3352
        %v3354 = vpop.f32.mrb[0].mxu0
        %3355 = vmatprep.mubr.bf16.mxu0 %v3071
        %3356 = vmatmul.mubr.bf16.gmra.mrb[0].mxu0 %v3069
        %v3357 = vpop.f32.mrb[0].mxu0
        %v3358 = vadd.f32 0.0, %v3357
        %v3359 = vpop.f32.mrb[0].mxu0
        %v3360 = vpop.f32.mrb[0].mxu0
        %v3361 = vadd.f32 0.0, %v3360
        %v3362 = vpop.f32.mrb[0].mxu0
        %3363 = vmatprep.mubr.bf16.mxu0 %v3075
        %3364 = vmatmul.mubr.bf16.gmra.mrb[0].mxu0 %v3073
        %v3365 = vpop.f32.mrb[0].mxu0
        %v3366 = vadd.f32 0.0, %v3365
        %v3367 = vpop.f32.mrb[0].mxu0
        %v3368 = vpop.f32.mrb[0].mxu0
        %v3369 = vadd.f32 0.0, %v3368
        %v3370 = vpop.f32.mrb[0].mxu0
        %3371 = vdwg.mxu0
        %3372 = vmatprep.subr.bf16.mxu0 0
        %3373 = vmatpush1.bf16.msra.mxu0 %v3239
        %3374 = vmatprep.subr.bf16.mxu0 0
        %3375 = vmatpush1.bf16.msra.mxu0 %v3240
        %3376 = vmatprep.subr.bf16.mxu0 0
        %3377 = vmatpush1.bf16.msra.mxu0 %v3241
        %3378 = vmatprep.subr.bf16.mxu0 0
        %3379 = vmatpush1.bf16.msra.mxu0 %v3242
        %3380 = vmatprep.subr.bf16.mxu0 0
        %3381 = vmatpush1.bf16.msra.mxu0 %v3243
        %3382 = vmatprep.subr.bf16.mxu0 0
        %3383 = vmatpush1.bf16.msra.mxu0 %v3244
        %3384 = vmatprep.subr.bf16.mxu0 0
        %3385 = vmatpush1.bf16.msra.mxu0 %v3245
        %3386 = vmatprep.subr.bf16.mxu0 0
        %3387 = vmatpush1.bf16.msra.mxu0 %v3246
        %3388 = vmatprep.subr.bf16.mxu0 0
        %3389 = vmatpush1.bf16.msra.mxu0 %v3247
        %3390 = vmatprep.subr.bf16.mxu0 0
        %3391 = vmatpush1.bf16.msra.mxu0 %v3248
        %3392 = vmatprep.subr.bf16.mxu0 0
        %3393 = vmatpush1.bf16.msra.mxu0 %v3249
        %3394 = vmatprep.subr.bf16.mxu0 0
        %3395 = vmatpush1.bf16.msra.mxu0 %v3250
        %3396 = vmatprep.subr.bf16.mxu0 0
        %3397 = vmatpush1.bf16.msra.mxu0 %v3251
        %3398 = vmatprep.subr.bf16.mxu0 0
        %3399 = vmatpush1.bf16.msra.mxu0 %v3252
        %3400 = vmatprep.subr.bf16.mxu0 0
        %3401 = vmatpush1.bf16.msra.mxu0 %v3253
        %3402 = vmatprep.subr.bf16.mxu0 0
        %3403 = vmatpush1.bf16.msra.mxu0 %v3254
        %3404 = vmatprep.mubr.bf16.mxu0 %v3065
        %3405 = vmatmul.mubr.bf16.gmra.mrb[0].mxu0 %v3064
        %v3406 = vpop.f32.mrb[0].mxu0
        %v3407 = vadd.f32 %v3342, %v3406
        %v3408 = vpop.f32.mrb[0].mxu0
        %v3409 = vpop.f32.mrb[0].mxu0
        %v3410 = vadd.f32 %v3345, %v3409
        %v3411 = vpop.f32.mrb[0].mxu0
        %3412 = vmatprep.mubr.bf16.mxu0 %v3069
        %3413 = vmatmul.mubr.bf16.gmra.mrb[0].mxu0 %v3068
        %v3414 = vpop.f32.mrb[0].mxu0
        %v3415 = vadd.f32 %v3350, %v3414
        %v3416 = vpop.f32.mrb[0].mxu0
        %v3417 = vpop.f32.mrb[0].mxu0
        %v3418 = vadd.f32 %v3353, %v3417
        %v3419 = vpop.f32.mrb[0].mxu0
        %3420 = vmatprep.mubr.bf16.mxu0 %v3073
        %3421 = vmatmul.mubr.bf16.gmra.mrb[0].mxu0 %v3072
        %v3422 = vpop.f32.mrb[0].mxu0
        %v3423 = vadd.f32 %v3358, %v3422
        %v3424 = vpop.f32.mrb[0].mxu0
        %v3425 = vpop.f32.mrb[0].mxu0
        %v3426 = vadd.f32 %v3361, %v3425
        %v3427 = vpop.f32.mrb[0].mxu0
        %3428 = vmatprep.mubr.bf16.mxu0 %v3077
        %3429 = vmatmul.mubr.bf16.gmra.mrb[0].mxu0 %v3076
        %v3430 = vpop.f32.mrb[0].mxu0
        %v3431 = vadd.f32 %v3366, %v3430
        %v3432 = vpop.f32.mrb[0].mxu0
        %v3433 = vpop.f32.mrb[0].mxu0
        %v3434 = vadd.f32 %v3369, %v3433
        %v3435 = vpop.f32.mrb[0].mxu0
        %3436 = vdwg.mxu0
        %3437 = vmatprep.subr.bf16.mxu0 0
        %3438 = vmatpush1.bf16.msra.mxu0 %v3255
        %3439 = vmatprep.subr.bf16.mxu0 0
        %3440 = vmatpush1.bf16.msra.mxu0 %v3256
        %3441 = vmatprep.subr.bf16.mxu0 0
        %3442 = vmatpush1.bf16.msra.mxu0 %v3257
        %3443 = vmatprep.subr.bf16.mxu0 0
        %3444 = vmatpush1.bf16.msra.mxu0 %v3258
        %3445 = vmatprep.subr.bf16.mxu0 0
        %3446 = vmatpush1.bf16.msra.mxu0 0
        %3447 = vmatprep.subr.bf16.mxu0 0
        %3448 = vmatpush1.bf16.msra.mxu0 0
        %3449 = vmatprep.subr.bf16.mxu0 0
        %3450 = vmatpush1.bf16.msra.mxu0 0
        %3451 = vmatprep.subr.bf16.mxu0 0
        %3452 = vmatpush1.bf16.msra.mxu0 0
        %3453 = vmatprep.subr.bf16.mxu0 0
        %3454 = vmatpush1.bf16.msra.mxu0 0
        %3455 = vmatprep.subr.bf16.mxu0 0
        %3456 = vmatpush1.bf16.msra.mxu0 0
        %3457 = vmatprep.subr.bf16.mxu0 0
        %3458 = vmatpush1.bf16.msra.mxu0 0
        %3459 = vmatprep.subr.bf16.mxu0 0
        %3460 = vmatpush1.bf16.msra.mxu0 0
        %3461 = vmatprep.subr.bf16.mxu0 0
        %3462 = vmatpush1.bf16.msra.mxu0 0
        %3463 = vmatprep.subr.bf16.mxu0 0
        %3464 = vmatpush1.bf16.msra.mxu0 0
        %3465 = vmatprep.subr.bf16.mxu0 0
        %3466 = vmatpush1.bf16.msra.mxu0 0
        %3467 = vmatprep.subr.bf16.mxu0 0
        %3468 = vmatpush1.bf16.msra.mxu0 0
        %3469 = vmatprep.mubr.bf16.mxu0 0
        %3470 = vmatmul.mubr.bf16.gmra.mrb[0].mxu0 %v3296
        %v3471 = vpop.f32.mrb[0].mxu0
        %v3472 = vadd.f32 %v3407, %v3471
        %v3473 = vpop.f32.mrb[0].mxu0
        %v3474 = vpop.f32.mrb[0].mxu0
        %v3475 = vadd.f32 %v3410, %v3474
        %v3476 = vpop.f32.mrb[0].mxu0
        %3477 = vmatprep.mubr.bf16.mxu0 0
        %3478 = vmatmul.mubr.bf16.gmra.mrb[0].mxu0 %v3299
        %v3479 = vpop.f32.mrb[0].mxu0
        %v3480 = vadd.f32 %v3415, %v3479
        %v3481 = vpop.f32.mrb[0].mxu0
        %v3482 = vpop.f32.mrb[0].mxu0
        %v3483 = vadd.f32 %v3418, %v3482
        %v3484 = vpop.f32.mrb[0].mxu0
        %3485 = vmatprep.mubr.bf16.mxu0 0
        %3486 = vmatmul.mubr.bf16.gmra.mrb[0].mxu0 %v3302
        %v3487 = vpop.f32.mrb[0].mxu0
        %v3488 = vadd.f32 %v3423, %v3487
        %v3489 = vpop.f32.mrb[0].mxu0
        %v3490 = vpop.f32.mrb[0].mxu0
        %v3491 = vadd.f32 %v3426, %v3490
        %v3492 = vpop.f32.mrb[0].mxu0
        %3493 = vmatprep.mubr.bf16.mxu0 0
        %3494 = vmatmul.mubr.bf16.gmra.mrb[0].mxu0 %v3305
        %v3495 = vpop.f32.mrb[0].mxu0
        %v3496 = vadd.f32 %v3431, %v3495
        %v3497 = vpop.f32.mrb[0].mxu0
        %v3498 = vpop.f32.mrb[0].mxu0
        %v3499 = vadd.f32 %v3434, %v3498
        %v3500 = vpop.f32.mrb[0].mxu0
        %3501 = vdwg.mxu0
        %v3502 = vld [vmem:[%s5] sm:$0x1]
        %v3504 = vlaneseq
        %v3505 = vshrl.u32 %v3504, 7
        %v3506 = vsub.s32 0, %v3505
        %v3507 = vrot.slane %v3502, %v3506
        %v3509 = vmul.f32 %v3472, %v3507
        %v3510 = vmul.f32 %v3475, %v3507
        %v3511 = vmul.f32 %v3480, %v3507
        %v3512 = vmul.f32 %v3483, %v3507
        %v3513 = vmul.f32 %v3488, %v3507
        %v3514 = vmul.f32 %v3491, %v3507
        %v3515 = vmul.f32 %v3496, %v3507
        %v3516 = vmul.f32 %v3499, %v3507
        %v3517 = vld [vmem:[%s6] sm:$0x1]
        %v3519 = vlaneseq
        %v3520 = vshrl.u32 %v3519, 7
        %v3521 = vsub.s32 0, %v3520
        %v3522 = vrot.slane %v3517, %v3521
        %v3524 = vadd.f32 %v3509, %v3522
        %v3525 = vadd.f32 %v3510, %v3522
        %v3526 = vadd.f32 %v3511, %v3522
        %v3527 = vadd.f32 %v3512, %v3522
        %v3528 = vadd.f32 %v3513, %v3522
        %v3529 = vadd.f32 %v3514, %v3522
        %v3530 = vadd.f32 %v3515, %v3522
        %v3531 = vadd.f32 %v3516, %v3522
        %v3532 = vmax.f32 %v3524, 0.0
        %v3533 = vmax.f32 %v3525, 0.0
        %v3534 = vmax.f32 %v3526, 0.0
        %v3535 = vmax.f32 %v3527, 0.0
        %v3536 = vmax.f32 %v3528, 0.0
        %v3537 = vmax.f32 %v3529, 0.0
        %v3538 = vmax.f32 %v3530, 0.0
        %v3539 = vmax.f32 %v3531, 0.0
        %v3548 = vrot.slane %v3532, 7
        %v3549 = vrot.slane %v3533, 7
        %v3550 = vrot.slane %v3534, 7
        %v3551 = vrot.slane %v3535, 7
        %v3552 = vrot.slane %v3536, 7
        %v3553 = vrot.slane %v3537, 7
        %v3554 = vrot.slane %v3538, 7
        %v3555 = vrot.slane %v3539, 7
        %v3564 = vsel %vm2229, 0.0, %v3548
        %v3565 = vsel %vm2229, 0.0, %v3549
        %v3566 = vsel %vm2229, 0.0, %v3550
        %v3567 = vsel %vm2229, 0.0, %v3551
        %v3568 = vsel %vm2229, 0.0, %v3552
        %v3569 = vsel %vm2229, 0.0, %v3553
        %v3570 = vsel %vm2229, 0.0, %v3554
        %v3571 = vsel %vm2229, 0.0, %v3555
        %v3572 = vsel %vm2229, %v3548, 0.0
        %v3573 = vsel %vm2229, %v3549, 0.0
        %v3574 = vsel %vm2229, %v3550, 0.0
        %v3575 = vsel %vm2229, %v3551, 0.0
        %v3576 = vsel %vm2229, %v3552, 0.0
        %v3577 = vsel %vm2229, %v3553, 0.0
        %v3578 = vsel %vm2229, %v3554, 0.0
        %v3579 = vsel %vm2229, %v3555, 0.0
        %v3580 = vld [vmem:[%s7] sm:$0xf]
        %v3581 = vld [vmem:[%s7 + $0x4] sm:$0xf]
        %v3582 = vld [vmem:[%s7 + $0x8] sm:$0xf]
        %v3583 = vld [vmem:[%s7 + $0xc] sm:$0xf]
        %v3584 = vld [vmem:[%s7 + $0x10] sm:$0xf]
        %v3585 = vld [vmem:[%s7 + $0x14] sm:$0xf]
        %v3586 = vld [vmem:[%s7 + $0x18] sm:$0xf]
        %v3587 = vld [vmem:[%s7 + $0x1c] sm:$0xf]
        %v3588 = vld [vmem:[%s7 + $0x20] sm:$0xf]
        %v3589 = vld [vmem:[%s7 + $0x24] sm:$0xf]
        %v3590 = vld [vmem:[%s7 + $0x28] sm:$0xf]
        %v3591 = vld [vmem:[%s7 + $0x2c] sm:$0xf]
        %v3592 = vld [vmem:[%s7 + $0x30] sm:$0xf]
        %v3593 = vld [vmem:[%s7 + $0x34] sm:$0xf]
        %v3594 = vld [vmem:[%s7 + $0x38] sm:$0xf]
        %v3595 = vld [vmem:[%s7 + $0x3c] sm:$0xf]
        %v3596 = vld [vmem:[%s7 + $0x40] sm:$0xf]
        %v3597 = vld [vmem:[%s7 + $0x44] sm:$0xf]
        %v3598 = vld [vmem:[%s7 + $0x48] sm:$0xf]
        %v3599 = vld [vmem:[%s7 + $0x4c] sm:$0xf]
        %v3600 = vld [vmem:[%s7 + $0x50] sm:$0xf]
        %v3601 = vld [vmem:[%s7 + $0x54] sm:$0xf]
        %v3602 = vld [vmem:[%s7 + $0x58] sm:$0xf]
        %v3603 = vld [vmem:[%s7 + $0x5c] sm:$0xf]
        %v3604 = vld [vmem:[%s7 + $0x60] sm:$0xf]
        %v3605 = vld [vmem:[%s7 + $0x64] sm:$0xf]
        %v3606 = vld [vmem:[%s7 + $0x68] sm:$0xf]
        %v3607 = vld [vmem:[%s7 + $0x6c] sm:$0xf]
        %v3608 = vld [vmem:[%s7 + $0x70] sm:$0xf]
        %v3609 = vld [vmem:[%s7 + $0x74] sm:$0xf]
        %v3610 = vld [vmem:[%s7 + $0x78] sm:$0xf]
        %v3611 = vld [vmem:[%s7 + $0x7c] sm:$0xf]
        %v3612 = vld [vmem:[%s7 + $0x80] sm:$0xf]
        %v3613 = vld [vmem:[%s7 + $0x84] sm:$0xf]
        %v3614 = vld [vmem:[%s7 + $0x88] sm:$0xf]
        %v3615 = vld [vmem:[%s7 + $0x8c] sm:$0xf]
        %v3616 = vld [vmem:[%s7 + $0x90] sm:$0xf]
        %v3617 = vld [vmem:[%s7 + $0x94] sm:$0xf]
        %v3618 = vld [vmem:[%s7 + $0x98] sm:$0xf]
        %v3619 = vld [vmem:[%s7 + $0x9c] sm:$0xf]
        %v3620 = vld [vmem:[%s7 + $0xa0] sm:$0xf]
        %v3621 = vld [vmem:[%s7 + $0xa4] sm:$0xf]
        %v3622 = vld [vmem:[%s7 + $0xa8] sm:$0xf]
        %v3623 = vld [vmem:[%s7 + $0xac] sm:$0xf]
        %v3624 = vld [vmem:[%s7 + $0xb0] sm:$0xf]
        %v3625 = vld [vmem:[%s7 + $0xb4] sm:$0xf]
        %v3626 = vld [vmem:[%s7 + $0xb8] sm:$0xf]
        %v3627 = vld [vmem:[%s7 + $0xbc] sm:$0xf]
        %v3628 = vld [vmem:[%s7 + $0xc0] sm:$0xf]
        %v3629 = vld [vmem:[%s7 + $0xc4] sm:$0xf]
        %v3630 = vld [vmem:[%s7 + $0xc8] sm:$0xf]
        %v3631 = vld [vmem:[%s7 + $0xcc] sm:$0xf]
        %v3632 = vld [vmem:[%s7 + $0xd0] sm:$0xf]
        %v3633 = vld [vmem:[%s7 + $0xd4] sm:$0xf]
        %v3634 = vld [vmem:[%s7 + $0xd8] sm:$0xf]
        %v3635 = vld [vmem:[%s7 + $0xdc] sm:$0xf]
        %v3636 = vld [vmem:[%s7 + $0xe0] sm:$0xf]
        %v3637 = vld [vmem:[%s7 + $0xe4] sm:$0xf]
        %v3638 = vld [vmem:[%s7 + $0xe8] sm:$0xf]
        %v3639 = vld [vmem:[%s7 + $0xec] sm:$0xf]
        %v3640 = vld [vmem:[%s7 + $0xf0] sm:$0xf]
        %v3641 = vld [vmem:[%s7 + $0xf4] sm:$0xf]
        %v3642 = vld [vmem:[%s7 + $0xf8] sm:$0xf]
        %v3643 = vld [vmem:[%s7 + $0xfc] sm:$0xf]
        %v3644 = vld [vmem:[%s7 + $0x100] sm:$0xf]
        %v3645 = vld [vmem:[%s7 + $0x104] sm:$0xf]
        %v3646 = vld [vmem:[%s7 + $0x108] sm:$0xf]
        %v3647 = vld [vmem:[%s7 + $0x10c] sm:$0xf]
        %v3648 = vld [vmem:[%s7 + $0x110] sm:$0xf]
        %v3649 = vld [vmem:[%s7 + $0x114] sm:$0xf]
        %v3650 = vld [vmem:[%s7 + $0x118] sm:$0xf]
        %v3651 = vld [vmem:[%s7 + $0x11c] sm:$0xf]
        %v3666 = vrot.slane %v3564, 1
        %v3667 = vrot.slane %v3572, 1
        %v3668 = vsel %vm2430, %v3666, %v3667
        %v3669 = vrot.slane %v3565, 1
        %v3670 = vrot.slane %v3573, 1
        %v3671 = vsel %vm2430, %v3669, %v3670
        %v3672 = vrot.slane %v3566, 1
        %v3673 = vrot.slane %v3574, 1
        %v3674 = vsel %vm2430, %v3672, %v3673
        %v3675 = vrot.slane %v3567, 1
        %v3676 = vrot.slane %v3575, 1
        %v3677 = vsel %vm2430, %v3675, %v3676
        %v3678 = vrot.slane %v3568, 1
        %v3679 = vrot.slane %v3576, 1
        %v3680 = vsel %vm2430, %v3678, %v3679
        %v3681 = vrot.slane %v3569, 1
        %v3682 = vrot.slane %v3577, 1
        %v3683 = vsel %vm2430, %v3681, %v3682
        %v3684 = vrot.slane %v3570, 1
        %v3685 = vrot.slane %v3578, 1
        %v3686 = vsel %vm2430, %v3684, %v3685
        %3687 = vrot.lane.b32.xlu0 %v3668, 64
        %v3688 = vpop.permute.xlu0 %3687
        %3689 = vrot.lane.b32.xlu0 %v3671, 64
        %v3690 = vpop.permute.xlu0 %3689
        %3691 = vrot.lane.b32.xlu0 %v3674, 64
        %v3692 = vpop.permute.xlu0 %3691
        %3693 = vrot.lane.b32.xlu0 %v3677, 64
        %v3694 = vpop.permute.xlu0 %3693
        %3695 = vrot.lane.b32.xlu0 %v3680, 64
        %v3696 = vpop.permute.xlu0 %3695
        %3697 = vrot.lane.b32.xlu0 %v3683, 64
        %v3698 = vpop.permute.xlu0 %3697
        %3699 = vrot.lane.b32.xlu0 %v3686, 64
        %v3700 = vpop.permute.xlu0 %3699
        %v3708 = vrot.slane %v3564, 2
        %v3709 = vrot.slane %v3572, 2
        %v3710 = vsel %vm2503, %v3708, %v3709
        %v3711 = vrot.slane %v3565, 2
        %v3712 = vrot.slane %v3573, 2
        %v3713 = vsel %vm2503, %v3711, %v3712
        %v3714 = vrot.slane %v3566, 2
        %v3715 = vrot.slane %v3574, 2
        %v3716 = vsel %vm2503, %v3714, %v3715
        %v3717 = vrot.slane %v3567, 2
        %v3718 = vrot.slane %v3575, 2
        %v3719 = vsel %vm2503, %v3717, %v3718
        %v3720 = vrot.slane %v3568, 2
        %v3721 = vrot.slane %v3576, 2
        %v3722 = vsel %vm2503, %v3720, %v3721
        %v3723 = vrot.slane %v3569, 2
        %v3724 = vrot.slane %v3577, 2
        %v3725 = vsel %vm2503, %v3723, %v3724
        %v3726 = vrot.slane %v3570, 2
        %v3727 = vrot.slane %v3578, 2
        %v3728 = vsel %vm2503, %v3726, %v3727
        %3737 = vrot.lane.b32.xlu0 %v3564, 64
        %v3738 = vpop.permute.xlu0 %3737
        %3739 = vrot.lane.b32.xlu0 %v3565, 64
        %v3740 = vpop.permute.xlu0 %3739
        %3741 = vrot.lane.b32.xlu0 %v3566, 64
        %v3742 = vpop.permute.xlu0 %3741
        %3743 = vrot.lane.b32.xlu0 %v3567, 64
        %v3744 = vpop.permute.xlu0 %3743
        %3745 = vrot.lane.b32.xlu0 %v3568, 64
        %v3746 = vpop.permute.xlu0 %3745
        %3747 = vrot.lane.b32.xlu0 %v3569, 64
        %v3748 = vpop.permute.xlu0 %3747
        %3749 = vrot.lane.b32.xlu0 %v3570, 64
        %v3750 = vpop.permute.xlu0 %3749
        %3751 = vrot.lane.b32.xlu0 %v3571, 64
        %v3752 = vpop.permute.xlu0 %3751
        %v3762 = vrot.slane %v3571, 1
        %v3763 = vrot.slane %v3579, 1
        %v3764 = vsel %vm2430, %v3762, %v3763
        %v3773 = vrot.slane %v3571, 2
        %v3774 = vrot.slane %v3579, 2
        %v3775 = vsel %vm2503, %v3773, %v3774
        %3776 = vrot.lane.b32.xlu0 %v3710, 64
        %v3777 = vpop.permute.xlu0 %3776
        %3778 = vrot.lane.b32.xlu0 %v3713, 64
        %v3779 = vpop.permute.xlu0 %3778
        %3780 = vrot.lane.b32.xlu0 %v3716, 64
        %v3781 = vpop.permute.xlu0 %3780
        %3782 = vrot.lane.b32.xlu0 %v3719, 64
        %v3783 = vpop.permute.xlu0 %3782
        %3784 = vrot.lane.b32.xlu0 %v3722, 64
        %v3785 = vpop.permute.xlu0 %3784
        %3786 = vrot.lane.b32.xlu0 %v3725, 64
        %v3787 = vpop.permute.xlu0 %3786
        %3788 = vrot.lane.b32.xlu0 %v3728, 64
        %v3789 = vpop.permute.xlu0 %3788
        %3790 = vrot.lane.b32.xlu0 %v3775, 64
        %v3791 = vpop.permute.xlu0 %3790
        %3800 = vrot.lane.b32.xlu0 %v3764, 64
        %v3801 = vpop.permute.xlu0 %3800
        %v3804 = vsel %vm1652, %v3564, %v3688
        %v3805 = vsel %vm1652, %v3565, %v3690
        %v3806 = vsel %vm1652, %v3566, %v3692
        %v3807 = vsel %vm1652, %v3567, %v3694
        %v3808 = vsel %vm1652, %v3568, %v3696
        %v3809 = vsel %vm1652, %v3569, %v3698
        %v3810 = vsel %vm1652, %v3570, %v3700
        %v3811 = vsel %vm1652, %v2939, %v3738
        %v3812 = vsel %vm1652, %v3710, %v3740
        %v3813 = vsel %vm1652, %v3713, %v3742
        %v3814 = vsel %vm1652, %v3716, %v3744
        %v3815 = vsel %vm1652, %v3719, %v3746
        %v3816 = vsel %vm1652, %v3722, %v3748
        %v3817 = vsel %vm1652, %v3725, %v3750
        %v3818 = vsel %vm1652, %v3728, %v3752
        %v3819 = vsel %vm1652, %v3668, %v3777
        %v3820 = vsel %vm1652, %v3671, %v3779
        %v3821 = vsel %vm1652, %v3674, %v3781
        %v3822 = vsel %vm1652, %v3677, %v3783
        %v3823 = vsel %vm1652, %v3680, %v3785
        %v3824 = vsel %vm1652, %v3683, %v3787
        %v3825 = vsel %vm1652, %v3686, %v3789
        %v3826 = vsel %vm1652, %v3764, %v3791
        %v3827 = vsel %vm1652, %v3571, %v3801
        %v3828 = vpack.c.bf16 %v3804, %v3037
        %v3829 = vpack.c.bf16 %v3812, %v3811
        %v3830 = vpack.c.bf16 %v3820, %v3819
        %v3831 = vpack.c.bf16 %v3806, %v3805
        %v3832 = vpack.c.bf16 %v3716, %v3713
        %v3833 = vpack.c.bf16 %v3814, %v3813
        %v3834 = vpack.c.bf16 %v3822, %v3821
        %v3835 = vpack.c.bf16 %v3808, %v3807
        %v3836 = vpack.c.bf16 %v3722, %v3719
        %v3837 = vpack.c.bf16 %v3816, %v3815
        %v3838 = vpack.c.bf16 %v3824, %v3823
        %v3839 = vpack.c.bf16 %v3810, %v3809
        %v3840 = vpack.c.bf16 %v3728, %v3725
        %v3841 = vpack.c.bf16 %v3818, %v3817
        %v3842 = vpack.c.bf16 %v3826, %v3825
        %v3843 = vpack.c.bf16 %v3037, %v3827
        %v3844 = vpack.c.bf16 %v2939, %v3775
        %v3917 = vunpack.c.l.b16 %v3580
        %v3918 = vunpack.c.l.b16 %v3581
        %v3919 = vunpack.c.l.b16 %v3582
        %v3920 = vunpack.c.l.b16 %v3583
        %v3921 = vunpack.c.l.b16 %v3584
        %v3922 = vunpack.c.l.b16 %v3585
        %v3923 = vunpack.c.l.b16 %v3586
        %v3924 = vunpack.c.l.b16 %v3587
        %v3925 = vunpack.c.l.b16 %v3588
        %v3926 = vunpack.c.l.b16 %v3589
        %v3927 = vunpack.c.l.b16 %v3590
        %v3928 = vunpack.c.l.b16 %v3591
        %v3929 = vunpack.c.l.b16 %v3592
        %v3930 = vunpack.c.l.b16 %v3593
        %v3931 = vunpack.c.l.b16 %v3594
        %v3932 = vunpack.c.l.b16 %v3595
        %v3933 = vunpack.c.l.b16 %v3596
        %v3934 = vunpack.c.l.b16 %v3597
        %v3935 = vunpack.c.l.b16 %v3598
        %v3936 = vunpack.c.l.b16 %v3599
        %v3937 = vunpack.c.l.b16 %v3600
        %v3938 = vunpack.c.l.b16 %v3601
        %v3939 = vunpack.c.l.b16 %v3602
        %v3940 = vunpack.c.l.b16 %v3603
        %v3941 = vunpack.c.l.b16 %v3604
        %v3942 = vunpack.c.l.b16 %v3605
        %v3943 = vunpack.c.l.b16 %v3606
        %v3944 = vunpack.c.l.b16 %v3607
        %v3945 = vunpack.c.l.b16 %v3608
        %v3946 = vunpack.c.l.b16 %v3609
        %v3947 = vunpack.c.l.b16 %v3610
        %v3948 = vunpack.c.l.b16 %v3611
        %v3949 = vunpack.c.l.b16 %v3612
        %v3950 = vunpack.c.l.b16 %v3613
        %v3951 = vunpack.c.l.b16 %v3614
        %v3952 = vunpack.c.l.b16 %v3615
        %v3953 = vunpack.c.l.b16 %v3616
        %v3954 = vunpack.c.l.b16 %v3617
        %v3955 = vunpack.c.l.b16 %v3618
        %v3956 = vunpack.c.l.b16 %v3619
        %v3957 = vunpack.c.l.b16 %v3620
        %v3958 = vunpack.c.l.b16 %v3621
        %v3959 = vunpack.c.l.b16 %v3622
        %v3960 = vunpack.c.l.b16 %v3623
        %v3961 = vunpack.c.l.b16 %v3624
        %v3962 = vunpack.c.l.b16 %v3625
        %v3963 = vunpack.c.l.b16 %v3626
        %v3964 = vunpack.c.l.b16 %v3627
        %v3965 = vunpack.c.l.b16 %v3628
        %v3966 = vunpack.c.l.b16 %v3629
        %v3967 = vunpack.c.l.b16 %v3630
        %v3968 = vunpack.c.l.b16 %v3631
        %v3969 = vunpack.c.l.b16 %v3632
        %v3970 = vunpack.c.l.b16 %v3633
        %v3971 = vunpack.c.l.b16 %v3634
        %v3972 = vunpack.c.l.b16 %v3635
        %v3973 = vunpack.c.l.b16 %v3636
        %v3974 = vunpack.c.l.b16 %v3637
        %v3975 = vunpack.c.l.b16 %v3638
        %v3976 = vunpack.c.l.b16 %v3639
        %v3977 = vunpack.c.l.b16 %v3640
        %v3978 = vunpack.c.l.b16 %v3641
        %v3979 = vunpack.c.l.b16 %v3642
        %v3980 = vunpack.c.l.b16 %v3643
        %v3981 = vunpack.c.l.b16 %v3644
        %v3982 = vunpack.c.l.b16 %v3645
        %v3983 = vunpack.c.l.b16 %v3646
        %v3984 = vunpack.c.l.b16 %v3647
        %v3985 = vunpack.c.l.b16 %v3648
        %v3986 = vunpack.c.l.b16 %v3649
        %v3987 = vunpack.c.l.b16 %v3650
        %v3988 = vunpack.c.l.b16 %v3651
        %v3989 = vpack.c.b16 %v3918, %v3917
        %v3990 = vpack.c.b16 %v3920, %v3919
        %v3991 = vpack.c.b16 %v3922, %v3921
        %v3992 = vpack.c.b16 %v3924, %v3923
        %v3993 = vpack.c.b16 %v3926, %v3925
        %v3994 = vpack.c.b16 %v3928, %v3927
        %v3995 = vpack.c.b16 %v3930, %v3929
        %v3996 = vpack.c.b16 %v3932, %v3931
        %v3997 = vpack.c.b16 %v3934, %v3933
        %v3998 = vpack.c.b16 %v3936, %v3935
        %v3999 = vpack.c.b16 %v3938, %v3937
        %v4000 = vpack.c.b16 %v3940, %v3939
        %v4001 = vpack.c.b16 %v3942, %v3941
        %v4002 = vpack.c.b16 %v3944, %v3943
        %v4003 = vpack.c.b16 %v3946, %v3945
        %v4004 = vpack.c.b16 %v3948, %v3947
        %v4005 = vpack.c.b16 %v3950, %v3949
        %v4006 = vpack.c.b16 %v3952, %v3951
        %v4007 = vpack.c.b16 %v3954, %v3953
        %v4008 = vpack.c.b16 %v3956, %v3955
        %v4009 = vpack.c.b16 %v3958, %v3957
        %v4010 = vpack.c.b16 %v3960, %v3959
        %v4011 = vpack.c.b16 %v3962, %v3961
        %v4012 = vpack.c.b16 %v3964, %v3963
        %v4013 = vpack.c.b16 %v3966, %v3965
        %v4014 = vpack.c.b16 %v3968, %v3967
        %v4015 = vpack.c.b16 %v3970, %v3969
        %v4016 = vpack.c.b16 %v3972, %v3971
        %v4017 = vpack.c.b16 %v3974, %v3973
        %v4018 = vpack.c.b16 %v3976, %v3975
        %v4019 = vpack.c.b16 %v3978, %v3977
        %v4020 = vpack.c.b16 %v3980, %v3979
        %v4021 = vpack.c.b16 %v3982, %v3981
        %v4022 = vpack.c.b16 %v3984, %v3983
        %v4023 = vpack.c.b16 %v3986, %v3985
        %v4024 = vpack.c.b16 %v3988, %v3987
        %v4062 = vsel %vm1652, %v3832, 0
        %v4065 = vsel %vm1652, %v3836, 0
        %v4068 = vsel %vm1652, %v3840, 0
        %v4071 = vsel %vm1652, %v3844, 0
        %4073 = vmatprep.subr.bf16.mxu0 0
        %4074 = vmatpush1.bf16.msra.mxu0 %v3989
        %4075 = vmatprep.subr.bf16.mxu0 0
        %4076 = vmatpush1.bf16.msra.mxu0 %v3990
        %4077 = vmatprep.subr.bf16.mxu0 0
        %4078 = vmatpush1.bf16.msra.mxu0 %v3991
        %4079 = vmatprep.subr.bf16.mxu0 0
        %4080 = vmatpush1.bf16.msra.mxu0 %v3992
        %4081 = vmatprep.subr.bf16.mxu0 0
        %4082 = vmatpush1.bf16.msra.mxu0 %v3993
        %4083 = vmatprep.subr.bf16.mxu0 0
        %4084 = vmatpush1.bf16.msra.mxu0 %v3994
        %4085 = vmatprep.subr.bf16.mxu0 0
        %4086 = vmatpush1.bf16.msra.mxu0 %v3995
        %4087 = vmatprep.subr.bf16.mxu0 0
        %4088 = vmatpush1.bf16.msra.mxu0 %v3996
        %4089 = vmatprep.subr.bf16.mxu0 0
        %4090 = vmatpush1.bf16.msra.mxu0 %v3997
        %4091 = vmatprep.subr.bf16.mxu0 0
        %4092 = vmatpush1.bf16.msra.mxu0 %v3998
        %4093 = vmatprep.subr.bf16.mxu0 0
        %4094 = vmatpush1.bf16.msra.mxu0 %v3999
        %4095 = vmatprep.subr.bf16.mxu0 0
        %4096 = vmatpush1.bf16.msra.mxu0 %v4000
        %4097 = vmatprep.subr.bf16.mxu0 0
        %4098 = vmatpush1.bf16.msra.mxu0 %v4001
        %4099 = vmatprep.subr.bf16.mxu0 0
        %4100 = vmatpush1.bf16.msra.mxu0 %v4002
        %4101 = vmatprep.subr.bf16.mxu0 0
        %4102 = vmatpush1.bf16.msra.mxu0 %v4003
        %4103 = vmatprep.subr.bf16.mxu0 0
        %4104 = vmatpush1.bf16.msra.mxu0 %v4004
        %4105 = vmatprep.mubr.bf16.mxu0 %v3829
        %4106 = vmatmul.mubr.bf16.gmra.mrb[0].mxu0 %v3828
        %v4107 = vpop.f32.mrb[0].mxu0
        %v4108 = vadd.f32 0.0, %v4107
        %v4109 = vpop.f32.mrb[0].mxu0
        %v4110 = vpop.f32.mrb[0].mxu0
        %v4111 = vadd.f32 0.0, %v4110
        %v4112 = vpop.f32.mrb[0].mxu0
        %4113 = vmatprep.mubr.bf16.mxu0 %v3833
        %4114 = vmatmul.mubr.bf16.gmra.mrb[0].mxu0 %v3831
        %v4115 = vpop.f32.mrb[0].mxu0
        %v4116 = vadd.f32 0.0, %v4115
        %v4117 = vpop.f32.mrb[0].mxu0
        %v4118 = vpop.f32.mrb[0].mxu0
        %v4119 = vadd.f32 0.0, %v4118
        %v4120 = vpop.f32.mrb[0].mxu0
        %4121 = vmatprep.mubr.bf16.mxu0 %v3837
        %4122 = vmatmul.mubr.bf16.gmra.mrb[0].mxu0 %v3835
        %v4123 = vpop.f32.mrb[0].mxu0
        %v4124 = vadd.f32 0.0, %v4123
        %v4125 = vpop.f32.mrb[0].mxu0
        %v4126 = vpop.f32.mrb[0].mxu0
        %v4127 = vadd.f32 0.0, %v4126
        %v4128 = vpop.f32.mrb[0].mxu0
        %4129 = vmatprep.mubr.bf16.mxu0 %v3841
        %4130 = vmatmul.mubr.bf16.gmra.mrb[0].mxu0 %v3839
        %v4131 = vpop.f32.mrb[0].mxu0
        %v4132 = vadd.f32 0.0, %v4131
        %v4133 = vpop.f32.mrb[0].mxu0
        %v4134 = vpop.f32.mrb[0].mxu0
        %v4135 = vadd.f32 0.0, %v4134
        %v4136 = vpop.f32.mrb[0].mxu0
        %4137 = vdwg.mxu0
        %4138 = vmatprep.subr.bf16.mxu0 0
        %4139 = vmatpush1.bf16.msra.mxu0 %v4005
        %4140 = vmatprep.subr.bf16.mxu0 0
        %4141 = vmatpush1.bf16.msra.mxu0 %v4006
        %4142 = vmatprep.subr.bf16.mxu0 0
        %4143 = vmatpush1.bf16.msra.mxu0 %v4007
        %4144 = vmatprep.subr.bf16.mxu0 0
        %4145 = vmatpush1.bf16.msra.mxu0 %v4008
        %4146 = vmatprep.subr.bf16.mxu0 0
        %4147 = vmatpush1.bf16.msra.mxu0 %v4009
        %4148 = vmatprep.subr.bf16.mxu0 0
        %4149 = vmatpush1.bf16.msra.mxu0 %v4010
        %4150 = vmatprep.subr.bf16.mxu0 0
        %4151 = vmatpush1.bf16.msra.mxu0 %v4011
        %4152 = vmatprep.subr.bf16.mxu0 0
        %4153 = vmatpush1.bf16.msra.mxu0 %v4012
        %4154 = vmatprep.subr.bf16.mxu0 0
        %4155 = vmatpush1.bf16.msra.mxu0 %v4013
        %4156 = vmatprep.subr.bf16.mxu0 0
        %4157 = vmatpush1.bf16.msra.mxu0 %v4014
        %4158 = vmatprep.subr.bf16.mxu0 0
        %4159 = vmatpush1.bf16.msra.mxu0 %v4015
        %4160 = vmatprep.subr.bf16.mxu0 0
        %4161 = vmatpush1.bf16.msra.mxu0 %v4016
        %4162 = vmatprep.subr.bf16.mxu0 0
        %4163 = vmatpush1.bf16.msra.mxu0 %v4017
        %4164 = vmatprep.subr.bf16.mxu0 0
        %4165 = vmatpush1.bf16.msra.mxu0 %v4018
        %4166 = vmatprep.subr.bf16.mxu0 0
        %4167 = vmatpush1.bf16.msra.mxu0 %v4019
        %4168 = vmatprep.subr.bf16.mxu0 0
        %4169 = vmatpush1.bf16.msra.mxu0 %v4020
        %4170 = vmatprep.mubr.bf16.mxu0 %v3831
        %4171 = vmatmul.mubr.bf16.gmra.mrb[0].mxu0 %v3830
        %v4172 = vpop.f32.mrb[0].mxu0
        %v4173 = vadd.f32 %v4108, %v4172
        %v4174 = vpop.f32.mrb[0].mxu0
        %v4175 = vpop.f32.mrb[0].mxu0
        %v4176 = vadd.f32 %v4111, %v4175
        %v4177 = vpop.f32.mrb[0].mxu0
        %4178 = vmatprep.mubr.bf16.mxu0 %v3835
        %4179 = vmatmul.mubr.bf16.gmra.mrb[0].mxu0 %v3834
        %v4180 = vpop.f32.mrb[0].mxu0
        %v4181 = vadd.f32 %v4116, %v4180
        %v4182 = vpop.f32.mrb[0].mxu0
        %v4183 = vpop.f32.mrb[0].mxu0
        %v4184 = vadd.f32 %v4119, %v4183
        %v4185 = vpop.f32.mrb[0].mxu0
        %4186 = vmatprep.mubr.bf16.mxu0 %v3839
        %4187 = vmatmul.mubr.bf16.gmra.mrb[0].mxu0 %v3838
        %v4188 = vpop.f32.mrb[0].mxu0
        %v4189 = vadd.f32 %v4124, %v4188
        %v4190 = vpop.f32.mrb[0].mxu0
        %v4191 = vpop.f32.mrb[0].mxu0
        %v4192 = vadd.f32 %v4127, %v4191
        %v4193 = vpop.f32.mrb[0].mxu0
        %4194 = vmatprep.mubr.bf16.mxu0 %v3843
        %4195 = vmatmul.mubr.bf16.gmra.mrb[0].mxu0 %v3842
        %v4196 = vpop.f32.mrb[0].mxu0
        %v4197 = vadd.f32 %v4132, %v4196
        %v4198 = vpop.f32.mrb[0].mxu0
        %v4199 = vpop.f32.mrb[0].mxu0
        %v4200 = vadd.f32 %v4135, %v4199
        %v4201 = vpop.f32.mrb[0].mxu0
        %4202 = vdwg.mxu0
        %4203 = vmatprep.subr.bf16.mxu0 0
        %4204 = vmatpush1.bf16.msra.mxu0 %v4021
        %4205 = vmatprep.subr.bf16.mxu0 0
        %4206 = vmatpush1.bf16.msra.mxu0 %v4022
        %4207 = vmatprep.subr.bf16.mxu0 0
        %4208 = vmatpush1.bf16.msra.mxu0 %v4023
        %4209 = vmatprep.subr.bf16.mxu0 0
        %4210 = vmatpush1.bf16.msra.mxu0 %v4024
        %4211 = vmatprep.subr.bf16.mxu0 0
        %4212 = vmatpush1.bf16.msra.mxu0 0
        %4213 = vmatprep.subr.bf16.mxu0 0
        %4214 = vmatpush1.bf16.msra.mxu0 0
        %4215 = vmatprep.subr.bf16.mxu0 0
        %4216 = vmatpush1.bf16.msra.mxu0 0
        %4217 = vmatprep.subr.bf16.mxu0 0
        %4218 = vmatpush1.bf16.msra.mxu0 0
        %4219 = vmatprep.subr.bf16.mxu0 0
        %4220 = vmatpush1.bf16.msra.mxu0 0
        %4221 = vmatprep.subr.bf16.mxu0 0
        %4222 = vmatpush1.bf16.msra.mxu0 0
        %4223 = vmatprep.subr.bf16.mxu0 0
        %4224 = vmatpush1.bf16.msra.mxu0 0
        %4225 = vmatprep.subr.bf16.mxu0 0
        %4226 = vmatpush1.bf16.msra.mxu0 0
        %4227 = vmatprep.subr.bf16.mxu0 0
        %4228 = vmatpush1.bf16.msra.mxu0 0
        %4229 = vmatprep.subr.bf16.mxu0 0
        %4230 = vmatpush1.bf16.msra.mxu0 0
        %4231 = vmatprep.subr.bf16.mxu0 0
        %4232 = vmatpush1.bf16.msra.mxu0 0
        %4233 = vmatprep.subr.bf16.mxu0 0
        %4234 = vmatpush1.bf16.msra.mxu0 0
        %4235 = vmatprep.mubr.bf16.mxu0 0
        %4236 = vmatmul.mubr.bf16.gmra.mrb[0].mxu0 %v4062
        %v4237 = vpop.f32.mrb[0].mxu0
        %v4238 = vadd.f32 %v4173, %v4237
        %v4239 = vpop.f32.mrb[0].mxu0
        %v4240 = vpop.f32.mrb[0].mxu0
        %v4241 = vadd.f32 %v4176, %v4240
        %v4242 = vpop.f32.mrb[0].mxu0
        %4243 = vmatprep.mubr.bf16.mxu0 0
        %4244 = vmatmul.mubr.bf16.gmra.mrb[0].mxu0 %v4065
        %v4245 = vpop.f32.mrb[0].mxu0
        %v4246 = vadd.f32 %v4181, %v4245
        %v4247 = vpop.f32.mrb[0].mxu0
        %v4248 = vpop.f32.mrb[0].mxu0
        %v4249 = vadd.f32 %v4184, %v4248
        %v4250 = vpop.f32.mrb[0].mxu0
        %4251 = vmatprep.mubr.bf16.mxu0 0
        %4252 = vmatmul.mubr.bf16.gmra.mrb[0].mxu0 %v4068
        %v4253 = vpop.f32.mrb[0].mxu0
        %v4254 = vadd.f32 %v4189, %v4253
        %v4255 = vpop.f32.mrb[0].mxu0
        %v4256 = vpop.f32.mrb[0].mxu0
        %v4257 = vadd.f32 %v4192, %v4256
        %v4258 = vpop.f32.mrb[0].mxu0
        %4259 = vmatprep.mubr.bf16.mxu0 0
        %4260 = vmatmul.mubr.bf16.gmra.mrb[0].mxu0 %v4071
        %v4261 = vpop.f32.mrb[0].mxu0
        %v4262 = vadd.f32 %v4197, %v4261
        %v4263 = vpop.f32.mrb[0].mxu0
        %v4264 = vpop.f32.mrb[0].mxu0
        %v4265 = vadd.f32 %v4200, %v4264
        %v4266 = vpop.f32.mrb[0].mxu0
        %4267 = vdwg.mxu0
        %v4268 = vld [vmem:[%s8] sm:$0x1]
        %v4270 = vlaneseq
        %v4271 = vshrl.u32 %v4270, 7
        %v4272 = vsub.s32 0, %v4271
        %v4273 = vrot.slane %v4268, %v4272
        %v4275 = vmul.f32 %v4238, %v4273
        %v4276 = vmul.f32 %v4241, %v4273
        %v4277 = vmul.f32 %v4246, %v4273
        %v4278 = vmul.f32 %v4249, %v4273
        %v4279 = vmul.f32 %v4254, %v4273
        %v4280 = vmul.f32 %v4257, %v4273
        %v4281 = vmul.f32 %v4262, %v4273
        %v4282 = vmul.f32 %v4265, %v4273
        %v4283 = vld [vmem:[%s9] sm:$0x1]
        %v4285 = vlaneseq
        %v4286 = vshrl.u32 %v4285, 7
        %v4287 = vsub.s32 0, %v4286
        %v4288 = vrot.slane %v4283, %v4287
        %v4290 = vadd.f32 %v4275, %v4288
        %v4291 = vadd.f32 %v4276, %v4288
        %v4292 = vadd.f32 %v4277, %v4288
        %v4293 = vadd.f32 %v4278, %v4288
        %v4294 = vadd.f32 %v4279, %v4288
        %v4295 = vadd.f32 %v4280, %v4288
        %v4296 = vadd.f32 %v4281, %v4288
        %v4297 = vadd.f32 %v4282, %v4288
        %v4298 = vadd.f32 %v4290, %v2756
        %v4299 = vadd.f32 %v4291, %v2757
        %v4300 = vadd.f32 %v4292, %v2758
        %v4301 = vadd.f32 %v4293, %v2759
        %v4302 = vadd.f32 %v4294, %v2760
        %v4303 = vadd.f32 %v4295, %v2761
        %v4304 = vadd.f32 %v4296, %v2762
        %v4305 = vadd.f32 %v4297, %v2763
        %v4306 = vmax.f32 %v4298, 0.0
        %v4307 = vmax.f32 %v4299, 0.0
        %v4308 = vmax.f32 %v4300, 0.0
        %v4309 = vmax.f32 %v4301, 0.0
        %v4310 = vmax.f32 %v4302, 0.0
        %v4311 = vmax.f32 %v4303, 0.0
        %v4312 = vmax.f32 %v4304, 0.0
        %v4313 = vmax.f32 %v4305, 0.0
        %v4322 = vrot.slane %v4306, 7
        %v4323 = vrot.slane %v4307, 7
        %v4324 = vrot.slane %v4308, 7
        %v4325 = vrot.slane %v4309, 7
        %v4326 = vrot.slane %v4310, 7
        %v4327 = vrot.slane %v4311, 7
        %v4328 = vrot.slane %v4312, 7
        %v4329 = vrot.slane %v4313, 7
        %v4338 = vsel %vm2229, 0.0, %v4322
        %v4339 = vsel %vm2229, 0.0, %v4323
        %v4340 = vsel %vm2229, 0.0, %v4324
        %v4341 = vsel %vm2229, 0.0, %v4325
        %v4342 = vsel %vm2229, 0.0, %v4326
        %v4343 = vsel %vm2229, 0.0, %v4327
        %v4344 = vsel %vm2229, 0.0, %v4328
        %v4345 = vsel %vm2229, 0.0, %v4329
        %v4346 = vsel %vm2229, %v4322, 0.0
        %v4347 = vsel %vm2229, %v4323, 0.0
        %v4348 = vsel %vm2229, %v4324, 0.0
        %v4349 = vsel %vm2229, %v4325, 0.0
        %v4350 = vsel %vm2229, %v4326, 0.0
        %v4351 = vsel %vm2229, %v4327, 0.0
        %v4352 = vsel %vm2229, %v4328, 0.0
        %v4353 = vsel %vm2229, %v4329, 0.0
        %v4354 = vld [vmem:[%s10] sm:$0xf]
        %v4355 = vld [vmem:[%s10 + $0x4] sm:$0xf]
        %v4356 = vld [vmem:[%s10 + $0x8] sm:$0xf]
        %v4357 = vld [vmem:[%s10 + $0xc] sm:$0xf]
        %v4358 = vld [vmem:[%s10 + $0x10] sm:$0xf]
        %v4359 = vld [vmem:[%s10 + $0x14] sm:$0xf]
        %v4360 = vld [vmem:[%s10 + $0x18] sm:$0xf]
        %v4361 = vld [vmem:[%s10 + $0x1c] sm:$0xf]
        %v4362 = vld [vmem:[%s10 + $0x20] sm:$0xf]
        %v4363 = vld [vmem:[%s10 + $0x24] sm:$0xf]
        %v4364 = vld [vmem:[%s10 + $0x28] sm:$0xf]
        %v4365 = vld [vmem:[%s10 + $0x2c] sm:$0xf]
        %v4366 = vld [vmem:[%s10 + $0x30] sm:$0xf]
        %v4367 = vld [vmem:[%s10 + $0x34] sm:$0xf]
        %v4368 = vld [vmem:[%s10 + $0x38] sm:$0xf]
        %v4369 = vld [vmem:[%s10 + $0x3c] sm:$0xf]
        %v4370 = vld [vmem:[%s10 + $0x40] sm:$0xf]
        %v4371 = vld [vmem:[%s10 + $0x44] sm:$0xf]
        %v4372 = vld [vmem:[%s10 + $0x48] sm:$0xf]
        %v4373 = vld [vmem:[%s10 + $0x4c] sm:$0xf]
        %v4374 = vld [vmem:[%s10 + $0x50] sm:$0xf]
        %v4375 = vld [vmem:[%s10 + $0x54] sm:$0xf]
        %v4376 = vld [vmem:[%s10 + $0x58] sm:$0xf]
        %v4377 = vld [vmem:[%s10 + $0x5c] sm:$0xf]
        %v4378 = vld [vmem:[%s10 + $0x60] sm:$0xf]
        %v4379 = vld [vmem:[%s10 + $0x64] sm:$0xf]
        %v4380 = vld [vmem:[%s10 + $0x68] sm:$0xf]
        %v4381 = vld [vmem:[%s10 + $0x6c] sm:$0xf]
        %v4382 = vld [vmem:[%s10 + $0x70] sm:$0xf]
        %v4383 = vld [vmem:[%s10 + $0x74] sm:$0xf]
        %v4384 = vld [vmem:[%s10 + $0x78] sm:$0xf]
        %v4385 = vld [vmem:[%s10 + $0x7c] sm:$0xf]
        %v4386 = vld [vmem:[%s10 + $0x80] sm:$0xf]
        %v4387 = vld [vmem:[%s10 + $0x84] sm:$0xf]
        %v4388 = vld [vmem:[%s10 + $0x88] sm:$0xf]
        %v4389 = vld [vmem:[%s10 + $0x8c] sm:$0xf]
        %v4390 = vld [vmem:[%s10 + $0x90] sm:$0xf]
        %v4391 = vld [vmem:[%s10 + $0x94] sm:$0xf]
        %v4392 = vld [vmem:[%s10 + $0x98] sm:$0xf]
        %v4393 = vld [vmem:[%s10 + $0x9c] sm:$0xf]
        %v4394 = vld [vmem:[%s10 + $0xa0] sm:$0xf]
        %v4395 = vld [vmem:[%s10 + $0xa4] sm:$0xf]
        %v4396 = vld [vmem:[%s10 + $0xa8] sm:$0xf]
        %v4397 = vld [vmem:[%s10 + $0xac] sm:$0xf]
        %v4398 = vld [vmem:[%s10 + $0xb0] sm:$0xf]
        %v4399 = vld [vmem:[%s10 + $0xb4] sm:$0xf]
        %v4400 = vld [vmem:[%s10 + $0xb8] sm:$0xf]
        %v4401 = vld [vmem:[%s10 + $0xbc] sm:$0xf]
        %v4402 = vld [vmem:[%s10 + $0xc0] sm:$0xf]
        %v4403 = vld [vmem:[%s10 + $0xc4] sm:$0xf]
        %v4404 = vld [vmem:[%s10 + $0xc8] sm:$0xf]
        %v4405 = vld [vmem:[%s10 + $0xcc] sm:$0xf]
        %v4406 = vld [vmem:[%s10 + $0xd0] sm:$0xf]
        %v4407 = vld [vmem:[%s10 + $0xd4] sm:$0xf]
        %v4408 = vld [vmem:[%s10 + $0xd8] sm:$0xf]
        %v4409 = vld [vmem:[%s10 + $0xdc] sm:$0xf]
        %v4410 = vld [vmem:[%s10 + $0xe0] sm:$0xf]
        %v4411 = vld [vmem:[%s10 + $0xe4] sm:$0xf]
        %v4412 = vld [vmem:[%s10 + $0xe8] sm:$0xf]
        %v4413 = vld [vmem:[%s10 + $0xec] sm:$0xf]
        %v4414 = vld [vmem:[%s10 + $0xf0] sm:$0xf]
        %v4415 = vld [vmem:[%s10 + $0xf4] sm:$0xf]
        %v4416 = vld [vmem:[%s10 + $0xf8] sm:$0xf]
        %v4417 = vld [vmem:[%s10 + $0xfc] sm:$0xf]
        %v4418 = vld [vmem:[%s10 + $0x100] sm:$0xf]
        %v4419 = vld [vmem:[%s10 + $0x104] sm:$0xf]
        %v4420 = vld [vmem:[%s10 + $0x108] sm:$0xf]
        %v4421 = vld [vmem:[%s10 + $0x10c] sm:$0xf]
        %v4422 = vld [vmem:[%s10 + $0x110] sm:$0xf]
        %v4423 = vld [vmem:[%s10 + $0x114] sm:$0xf]
        %v4424 = vld [vmem:[%s10 + $0x118] sm:$0xf]
        %v4425 = vld [vmem:[%s10 + $0x11c] sm:$0xf]
        %v4440 = vrot.slane %v4338, 1
        %v4441 = vrot.slane %v4346, 1
        %v4442 = vsel %vm2430, %v4440, %v4441
        %v4443 = vrot.slane %v4339, 1
        %v4444 = vrot.slane %v4347, 1
        %v4445 = vsel %vm2430, %v4443, %v4444
        %v4446 = vrot.slane %v4340, 1
        %v4447 = vrot.slane %v4348, 1
        %v4448 = vsel %vm2430, %v4446, %v4447
        %v4449 = vrot.slane %v4341, 1
        %v4450 = vrot.slane %v4349, 1
        %v4451 = vsel %vm2430, %v4449, %v4450
        %v4452 = vrot.slane %v4342, 1
        %v4453 = vrot.slane %v4350, 1
        %v4454 = vsel %vm2430, %v4452, %v4453
        %v4455 = vrot.slane %v4343, 1
        %v4456 = vrot.slane %v4351, 1
        %v4457 = vsel %vm2430, %v4455, %v4456
        %v4458 = vrot.slane %v4344, 1
        %v4459 = vrot.slane %v4352, 1
        %v4460 = vsel %vm2430, %v4458, %v4459
        %4461 = vrot.lane.b32.xlu0 %v4442, 64
        %v4462 = vpop.permute.xlu0 %4461
        %4463 = vrot.lane.b32.xlu0 %v4445, 64
        %v4464 = vpop.permute.xlu0 %4463
        %4465 = vrot.lane.b32.xlu0 %v4448, 64
        %v4466 = vpop.permute.xlu0 %4465
        %4467 = vrot.lane.b32.xlu0 %v4451, 64
        %v4468 = vpop.permute.xlu0 %4467
        %4469 = vrot.lane.b32.xlu0 %v4454, 64
        %v4470 = vpop.permute.xlu0 %4469
        %4471 = vrot.lane.b32.xlu0 %v4457, 64
        %v4472 = vpop.permute.xlu0 %4471
        %4473 = vrot.lane.b32.xlu0 %v4460, 64
        %v4474 = vpop.permute.xlu0 %4473
        %v4482 = vrot.slane %v4338, 2
        %v4483 = vrot.slane %v4346, 2
        %v4484 = vsel %vm2503, %v4482, %v4483
        %v4485 = vrot.slane %v4339, 2
        %v4486 = vrot.slane %v4347, 2
        %v4487 = vsel %vm2503, %v4485, %v4486
        %v4488 = vrot.slane %v4340, 2
        %v4489 = vrot.slane %v4348, 2
        %v4490 = vsel %vm2503, %v4488, %v4489
        %v4491 = vrot.slane %v4341, 2
        %v4492 = vrot.slane %v4349, 2
        %v4493 = vsel %vm2503, %v4491, %v4492
        %v4494 = vrot.slane %v4342, 2
        %v4495 = vrot.slane %v4350, 2
        %v4496 = vsel %vm2503, %v4494, %v4495
        %v4497 = vrot.slane %v4343, 2
        %v4498 = vrot.slane %v4351, 2
        %v4499 = vsel %vm2503, %v4497, %v4498
        %v4500 = vrot.slane %v4344, 2
        %v4501 = vrot.slane %v4352, 2
        %v4502 = vsel %vm2503, %v4500, %v4501
        %4511 = vrot.lane.b32.xlu0 %v4338, 64
        %v4512 = vpop.permute.xlu0 %4511
        %4513 = vrot.lane.b32.xlu0 %v4339, 64
        %v4514 = vpop.permute.xlu0 %4513
        %4515 = vrot.lane.b32.xlu0 %v4340, 64
        %v4516 = vpop.permute.xlu0 %4515
        %4517 = vrot.lane.b32.xlu0 %v4341, 64
        %v4518 = vpop.permute.xlu0 %4517
        %4519 = vrot.lane.b32.xlu0 %v4342, 64
        %v4520 = vpop.permute.xlu0 %4519
        %4521 = vrot.lane.b32.xlu0 %v4343, 64
        %v4522 = vpop.permute.xlu0 %4521
        %4523 = vrot.lane.b32.xlu0 %v4344, 64
        %v4524 = vpop.permute.xlu0 %4523
        %4525 = vrot.lane.b32.xlu0 %v4345, 64
        %v4526 = vpop.permute.xlu0 %4525
        %v4536 = vrot.slane %v4345, 1
        %v4537 = vrot.slane %v4353, 1
        %v4538 = vsel %vm2430, %v4536, %v4537
        %v4547 = vrot.slane %v4345, 2
        %v4548 = vrot.slane %v4353, 2
        %v4549 = vsel %vm2503, %v4547, %v4548
        %4550 = vrot.lane.b32.xlu0 %v4484, 64
        %v4551 = vpop.permute.xlu0 %4550
        %4552 = vrot.lane.b32.xlu0 %v4487, 64
        %v4553 = vpop.permute.xlu0 %4552
        %4554 = vrot.lane.b32.xlu0 %v4490, 64
        %v4555 = vpop.permute.xlu0 %4554
        %4556 = vrot.lane.b32.xlu0 %v4493, 64
        %v4557 = vpop.permute.xlu0 %4556
        %4558 = vrot.lane.b32.xlu0 %v4496, 64
        %v4559 = vpop.permute.xlu0 %4558
        %4560 = vrot.lane.b32.xlu0 %v4499, 64
        %v4561 = vpop.permute.xlu0 %4560
        %4562 = vrot.lane.b32.xlu0 %v4502, 64
        %v4563 = vpop.permute.xlu0 %4562
        %4564 = vrot.lane.b32.xlu0 %v4549, 64
        %v4565 = vpop.permute.xlu0 %4564
        %4574 = vrot.lane.b32.xlu0 %v4538, 64
        %v4575 = vpop.permute.xlu0 %4574
        %v4578 = vsel %vm1652, %v4338, %v4462
        %v4579 = vsel %vm1652, %v4339, %v4464
        %v4580 = vsel %vm1652, %v4340, %v4466
        %v4581 = vsel %vm1652, %v4341, %v4468
        %v4582 = vsel %vm1652, %v4342, %v4470
        %v4583 = vsel %vm1652, %v4343, %v4472
        %v4584 = vsel %vm1652, %v4344, %v4474
        %v4585 = vsel %vm1652, %v2939, %v4512
        %v4586 = vsel %vm1652, %v4484, %v4514
        %v4587 = vsel %vm1652, %v4487, %v4516
        %v4588 = vsel %vm1652, %v4490, %v4518
        %v4589 = vsel %vm1652, %v4493, %v4520
        %v4590 = vsel %vm1652, %v4496, %v4522
        %v4591 = vsel %vm1652, %v4499, %v4524
        %v4592 = vsel %vm1652, %v4502, %v4526
        %v4593 = vsel %vm1652, %v4442, %v4551
        %v4594 = vsel %vm1652, %v4445, %v4553
        %v4595 = vsel %vm1652, %v4448, %v4555
        %v4596 = vsel %vm1652, %v4451, %v4557
        %v4597 = vsel %vm1652, %v4454, %v4559
        %v4598 = vsel %vm1652, %v4457, %v4561
        %v4599 = vsel %vm1652, %v4460, %v4563
        %v4600 = vsel %vm1652, %v4538, %v4565
        %v4601 = vsel %vm1652, %v4345, %v4575
        %v4602 = vpack.c.bf16 %v4578, %v3037
        %v4603 = vpack.c.bf16 %v4586, %v4585
        %v4604 = vpack.c.bf16 %v4594, %v4593
        %v4605 = vpack.c.bf16 %v4580, %v4579
        %v4606 = vpack.c.bf16 %v4490, %v4487
        %v4607 = vpack.c.bf16 %v4588, %v4587
        %v4608 = vpack.c.bf16 %v4596, %v4595
        %v4609 = vpack.c.bf16 %v4582, %v4581
        %v4610 = vpack.c.bf16 %v4496, %v4493
        %v4611 = vpack.c.bf16 %v4590, %v4589
        %v4612 = vpack.c.bf16 %v4598, %v4597
        %v4613 = vpack.c.bf16 %v4584, %v4583
        %v4614 = vpack.c.bf16 %v4502, %v4499
        %v4615 = vpack.c.bf16 %v4592, %v4591
        %v4616 = vpack.c.bf16 %v4600, %v4599
        %v4617 = vpack.c.bf16 %v3037, %v4601
        %v4618 = vpack.c.bf16 %v2939, %v4549
        %v4691 = vunpack.c.l.b16 %v4354
        %v4692 = vunpack.c.l.b16 %v4355
        %v4693 = vunpack.c.l.b16 %v4356
        %v4694 = vunpack.c.l.b16 %v4357
        %v4695 = vunpack.c.l.b16 %v4358
        %v4696 = vunpack.c.l.b16 %v4359
        %v4697 = vunpack.c.l.b16 %v4360
        %v4698 = vunpack.c.l.b16 %v4361
        %v4699 = vunpack.c.l.b16 %v4362
        %v4700 = vunpack.c.l.b16 %v4363
        %v4701 = vunpack.c.l.b16 %v4364
        %v4702 = vunpack.c.l.b16 %v4365
        %v4703 = vunpack.c.l.b16 %v4366
        %v4704 = vunpack.c.l.b16 %v4367
        %v4705 = vunpack.c.l.b16 %v4368
        %v4706 = vunpack.c.l.b16 %v4369
        %v4707 = vunpack.c.l.b16 %v4370
        %v4708 = vunpack.c.l.b16 %v4371
        %v4709 = vunpack.c.l.b16 %v4372
        %v4710 = vunpack.c.l.b16 %v4373
        %v4711 = vunpack.c.l.b16 %v4374
        %v4712 = vunpack.c.l.b16 %v4375
        %v4713 = vunpack.c.l.b16 %v4376
        %v4714 = vunpack.c.l.b16 %v4377
        %v4715 = vunpack.c.l.b16 %v4378
        %v4716 = vunpack.c.l.b16 %v4379
        %v4717 = vunpack.c.l.b16 %v4380
        %v4718 = vunpack.c.l.b16 %v4381
        %v4719 = vunpack.c.l.b16 %v4382
        %v4720 = vunpack.c.l.b16 %v4383
        %v4721 = vunpack.c.l.b16 %v4384
        %v4722 = vunpack.c.l.b16 %v4385
        %v4723 = vunpack.c.l.b16 %v4386
        %v4724 = vunpack.c.l.b16 %v4387
        %v4725 = vunpack.c.l.b16 %v4388
        %v4726 = vunpack.c.l.b16 %v4389
        %v4727 = vunpack.c.l.b16 %v4390
        %v4728 = vunpack.c.l.b16 %v4391
        %v4729 = vunpack.c.l.b16 %v4392
        %v4730 = vunpack.c.l.b16 %v4393
        %v4731 = vunpack.c.l.b16 %v4394
        %v4732 = vunpack.c.l.b16 %v4395
        %v4733 = vunpack.c.l.b16 %v4396
        %v4734 = vunpack.c.l.b16 %v4397
        %v4735 = vunpack.c.l.b16 %v4398
        %v4736 = vunpack.c.l.b16 %v4399
        %v4737 = vunpack.c.l.b16 %v4400
        %v4738 = vunpack.c.l.b16 %v4401
        %v4739 = vunpack.c.l.b16 %v4402
        %v4740 = vunpack.c.l.b16 %v4403
        %v4741 = vunpack.c.l.b16 %v4404
        %v4742 = vunpack.c.l.b16 %v4405
        %v4743 = vunpack.c.l.b16 %v4406
        %v4744 = vunpack.c.l.b16 %v4407
        %v4745 = vunpack.c.l.b16 %v4408
        %v4746 = vunpack.c.l.b16 %v4409
        %v4747 = vunpack.c.l.b16 %v4410
        %v4748 = vunpack.c.l.b16 %v4411
        %v4749 = vunpack.c.l.b16 %v4412
        %v4750 = vunpack.c.l.b16 %v4413
        %v4751 = vunpack.c.l.b16 %v4414
        %v4752 = vunpack.c.l.b16 %v4415
        %v4753 = vunpack.c.l.b16 %v4416
        %v4754 = vunpack.c.l.b16 %v4417
        %v4755 = vunpack.c.l.b16 %v4418
        %v4756 = vunpack.c.l.b16 %v4419
        %v4757 = vunpack.c.l.b16 %v4420
        %v4758 = vunpack.c.l.b16 %v4421
        %v4759 = vunpack.c.l.b16 %v4422
        %v4760 = vunpack.c.l.b16 %v4423
        %v4761 = vunpack.c.l.b16 %v4424
        %v4762 = vunpack.c.l.b16 %v4425
        %v4763 = vpack.c.b16 %v4692, %v4691
        %v4764 = vpack.c.b16 %v4694, %v4693
        %v4765 = vpack.c.b16 %v4696, %v4695
        %v4766 = vpack.c.b16 %v4698, %v4697
        %v4767 = vpack.c.b16 %v4700, %v4699
        %v4768 = vpack.c.b16 %v4702, %v4701
        %v4769 = vpack.c.b16 %v4704, %v4703
        %v4770 = vpack.c.b16 %v4706, %v4705
        %v4771 = vpack.c.b16 %v4708, %v4707
        %v4772 = vpack.c.b16 %v4710, %v4709
        %v4773 = vpack.c.b16 %v4712, %v4711
        %v4774 = vpack.c.b16 %v4714, %v4713
        %v4775 = vpack.c.b16 %v4716, %v4715
        %v4776 = vpack.c.b16 %v4718, %v4717
        %v4777 = vpack.c.b16 %v4720, %v4719
        %v4778 = vpack.c.b16 %v4722, %v4721
        %v4779 = vpack.c.b16 %v4724, %v4723
        %v4780 = vpack.c.b16 %v4726, %v4725
        %v4781 = vpack.c.b16 %v4728, %v4727
        %v4782 = vpack.c.b16 %v4730, %v4729
        %v4783 = vpack.c.b16 %v4732, %v4731
        %v4784 = vpack.c.b16 %v4734, %v4733
        %v4785 = vpack.c.b16 %v4736, %v4735
        %v4786 = vpack.c.b16 %v4738, %v4737
        %v4787 = vpack.c.b16 %v4740, %v4739
        %v4788 = vpack.c.b16 %v4742, %v4741
        %v4789 = vpack.c.b16 %v4744, %v4743
        %v4790 = vpack.c.b16 %v4746, %v4745
        %v4791 = vpack.c.b16 %v4748, %v4747
        %v4792 = vpack.c.b16 %v4750, %v4749
        %v4793 = vpack.c.b16 %v4752, %v4751
        %v4794 = vpack.c.b16 %v4754, %v4753
        %v4795 = vpack.c.b16 %v4756, %v4755
        %v4796 = vpack.c.b16 %v4758, %v4757
        %v4797 = vpack.c.b16 %v4760, %v4759
        %v4798 = vpack.c.b16 %v4762, %v4761
        %v4836 = vsel %vm1652, %v4606, 0
        %v4839 = vsel %vm1652, %v4610, 0
        %v4842 = vsel %vm1652, %v4614, 0
        %v4845 = vsel %vm1652, %v4618, 0
        %4847 = vmatprep.subr.bf16.mxu0 0
        %4848 = vmatpush1.bf16.msra.mxu0 %v4763
        %4849 = vmatprep.subr.bf16.mxu0 0
        %4850 = vmatpush1.bf16.msra.mxu0 %v4764
        %4851 = vmatprep.subr.bf16.mxu0 0
        %4852 = vmatpush1.bf16.msra.mxu0 %v4765
        %4853 = vmatprep.subr.bf16.mxu0 0
        %4854 = vmatpush1.bf16.msra.mxu0 %v4766
        %4855 = vmatprep.subr.bf16.mxu0 0
        %4856 = vmatpush1.bf16.msra.mxu0 %v4767
        %4857 = vmatprep.subr.bf16.mxu0 0
        %4858 = vmatpush1.bf16.msra.mxu0 %v4768
        %4859 = vmatprep.subr.bf16.mxu0 0
        %4860 = vmatpush1.bf16.msra.mxu0 %v4769
        %4861 = vmatprep.subr.bf16.mxu0 0
        %4862 = vmatpush1.bf16.msra.mxu0 %v4770
        %4863 = vmatprep.subr.bf16.mxu0 0
        %4864 = vmatpush1.bf16.msra.mxu0 %v4771
        %4865 = vmatprep.subr.bf16.mxu0 0
        %4866 = vmatpush1.bf16.msra.mxu0 %v4772
        %4867 = vmatprep.subr.bf16.mxu0 0
        %4868 = vmatpush1.bf16.msra.mxu0 %v4773
        %4869 = vmatprep.subr.bf16.mxu0 0
        %4870 = vmatpush1.bf16.msra.mxu0 %v4774
        %4871 = vmatprep.subr.bf16.mxu0 0
        %4872 = vmatpush1.bf16.msra.mxu0 %v4775
        %4873 = vmatprep.subr.bf16.mxu0 0
        %4874 = vmatpush1.bf16.msra.mxu0 %v4776
        %4875 = vmatprep.subr.bf16.mxu0 0
        %4876 = vmatpush1.bf16.msra.mxu0 %v4777
        %4877 = vmatprep.subr.bf16.mxu0 0
        %4878 = vmatpush1.bf16.msra.mxu0 %v4778
        %4879 = vmatprep.mubr.bf16.mxu0 %v4603
        %4880 = vmatmul.mubr.bf16.gmra.mrb[0].mxu0 %v4602
        %v4881 = vpop.f32.mrb[0].mxu0
        %v4882 = vadd.f32 0.0, %v4881
        %v4883 = vpop.f32.mrb[0].mxu0
        %v4884 = vpop.f32.mrb[0].mxu0
        %v4885 = vpop.f32.mrb[0].mxu0
        %4886 = vmatprep.mubr.bf16.mxu0 %v4607
        %4887 = vmatmul.mubr.bf16.gmra.mrb[0].mxu0 %v4605
        %v4888 = vpop.f32.mrb[0].mxu0
        %v4889 = vadd.f32 0.0, %v4888
        %v4890 = vpop.f32.mrb[0].mxu0
        %v4891 = vpop.f32.mrb[0].mxu0
        %v4892 = vpop.f32.mrb[0].mxu0
        %4893 = vmatprep.mubr.bf16.mxu0 %v4611
        %4894 = vmatmul.mubr.bf16.gmra.mrb[0].mxu0 %v4609
        %v4895 = vpop.f32.mrb[0].mxu0
        %v4896 = vadd.f32 0.0, %v4895
        %v4897 = vpop.f32.mrb[0].mxu0
        %v4898 = vpop.f32.mrb[0].mxu0
        %v4899 = vpop.f32.mrb[0].mxu0
        %4900 = vmatprep.mubr.bf16.mxu0 %v4615
        %4901 = vmatmul.mubr.bf16.gmra.mrb[0].mxu0 %v4613
        %v4902 = vpop.f32.mrb[0].mxu0
        %v4903 = vadd.f32 0.0, %v4902
        %v4904 = vpop.f32.mrb[0].mxu0
        %v4905 = vpop.f32.mrb[0].mxu0
        %v4906 = vpop.f32.mrb[0].mxu0
        %4907 = vdwg.mxu0
        %4908 = vmatprep.subr.bf16.mxu0 0
        %4909 = vmatpush1.bf16.msra.mxu0 %v4779
        %4910 = vmatprep.subr.bf16.mxu0 0
        %4911 = vmatpush1.bf16.msra.mxu0 %v4780
        %4912 = vmatprep.subr.bf16.mxu0 0
        %4913 = vmatpush1.bf16.msra.mxu0 %v4781
        %4914 = vmatprep.subr.bf16.mxu0 0
        %4915 = vmatpush1.bf16.msra.mxu0 %v4782
        %4916 = vmatprep.subr.bf16.mxu0 0
        %4917 = vmatpush1.bf16.msra.mxu0 %v4783
        %4918 = vmatprep.subr.bf16.mxu0 0
        %4919 = vmatpush1.bf16.msra.mxu0 %v4784
        %4920 = vmatprep.subr.bf16.mxu0 0
        %4921 = vmatpush1.bf16.msra.mxu0 %v4785
        %4922 = vmatprep.subr.bf16.mxu0 0
        %4923 = vmatpush1.bf16.msra.mxu0 %v4786
        %4924 = vmatprep.subr.bf16.mxu0 0
        %4925 = vmatpush1.bf16.msra.mxu0 %v4787
        %4926 = vmatprep.subr.bf16.mxu0 0
        %4927 = vmatpush1.bf16.msra.mxu0 %v4788
        %4928 = vmatprep.subr.bf16.mxu0 0
        %4929 = vmatpush1.bf16.msra.mxu0 %v4789
        %4930 = vmatprep.subr.bf16.mxu0 0
        %4931 = vmatpush1.bf16.msra.mxu0 %v4790
        %4932 = vmatprep.subr.bf16.mxu0 0
        %4933 = vmatpush1.bf16.msra.mxu0 %v4791
        %4934 = vmatprep.subr.bf16.mxu0 0
        %4935 = vmatpush1.bf16.msra.mxu0 %v4792
        %4936 = vmatprep.subr.bf16.mxu0 0
        %4937 = vmatpush1.bf16.msra.mxu0 %v4793
        %4938 = vmatprep.subr.bf16.mxu0 0
        %4939 = vmatpush1.bf16.msra.mxu0 %v4794
        %4940 = vmatprep.mubr.bf16.mxu0 %v4605
        %4941 = vmatmul.mubr.bf16.gmra.mrb[0].mxu0 %v4604
        %v4942 = vpop.f32.mrb[0].mxu0
        %v4943 = vadd.f32 %v4882, %v4942
        %v4944 = vpop.f32.mrb[0].mxu0
        %v4945 = vpop.f32.mrb[0].mxu0
        %v4946 = vpop.f32.mrb[0].mxu0
        %4947 = vmatprep.mubr.bf16.mxu0 %v4609
        %4948 = vmatmul.mubr.bf16.gmra.mrb[0].mxu0 %v4608
        %v4949 = vpop.f32.mrb[0].mxu0
        %v4950 = vadd.f32 %v4889, %v4949
        %v4951 = vpop.f32.mrb[0].mxu0
        %v4952 = vpop.f32.mrb[0].mxu0
        %v4953 = vpop.f32.mrb[0].mxu0
        %4954 = vmatprep.mubr.bf16.mxu0 %v4613
        %4955 = vmatmul.mubr.bf16.gmra.mrb[0].mxu0 %v4612
        %v4956 = vpop.f32.mrb[0].mxu0
        %v4957 = vadd.f32 %v4896, %v4956
        %v4958 = vpop.f32.mrb[0].mxu0
        %v4959 = vpop.f32.mrb[0].mxu0
        %v4960 = vpop.f32.mrb[0].mxu0
        %4961 = vmatprep.mubr.bf16.mxu0 %v4617
        %4962 = vmatmul.mubr.bf16.gmra.mrb[0].mxu0 %v4616
        %v4963 = vpop.f32.mrb[0].mxu0
        %v4964 = vadd.f32 %v4903, %v4963
        %v4965 = vpop.f32.mrb[0].mxu0
        %v4966 = vpop.f32.mrb[0].mxu0
        %v4967 = vpop.f32.mrb[0].mxu0
        %4968 = vdwg.mxu0
        %4969 = vmatprep.subr.bf16.mxu0 0
        %4970 = vmatpush1.bf16.msra.mxu0 %v4795
        %4971 = vmatprep.subr.bf16.mxu0 0
        %4972 = vmatpush1.bf16.msra.mxu0 %v4796
        %4973 = vmatprep.subr.bf16.mxu0 0
        %4974 = vmatpush1.bf16.msra.mxu0 %v4797
        %4975 = vmatprep.subr.bf16.mxu0 0
        %4976 = vmatpush1.bf16.msra.mxu0 %v4798
        %4977 = vmatprep.subr.bf16.mxu0 0
        %4978 = vmatpush1.bf16.msra.mxu0 0
        %4979 = vmatprep.subr.bf16.mxu0 0
        %4980 = vmatpush1.bf16.msra.mxu0 0
        %4981 = vmatprep.subr.bf16.mxu0 0
        %4982 = vmatpush1.bf16.msra.mxu0 0
        %4983 = vmatprep.subr.bf16.mxu0 0
        %4984 = vmatpush1.bf16.msra.mxu0 0
        %4985 = vmatprep.subr.bf16.mxu0 0
        %4986 = vmatpush1.bf16.msra.mxu0 0
        %4987 = vmatprep.subr.bf16.mxu0 0
        %4988 = vmatpush1.bf16.msra.mxu0 0
        %4989 = vmatprep.subr.bf16.mxu0 0
        %4990 = vmatpush1.bf16.msra.mxu0 0
        %4991 = vmatprep.subr.bf16.mxu0 0
        %4992 = vmatpush1.bf16.msra.mxu0 0
        %4993 = vmatprep.subr.bf16.mxu0 0
        %4994 = vmatpush1.bf16.msra.mxu0 0
        %4995 = vmatprep.subr.bf16.mxu0 0
        %4996 = vmatpush1.bf16.msra.mxu0 0
        %4997 = vmatprep.subr.bf16.mxu0 0
        %4998 = vmatpush1.bf16.msra.mxu0 0
        %4999 = vmatprep.subr.bf16.mxu0 0
        %5000 = vmatpush1.bf16.msra.mxu0 0
        %5001 = vmatprep.mubr.bf16.mxu0 0
        %5002 = vmatmul.mubr.bf16.gmra.mrb[0].mxu0 %v4836
        %v5003 = vpop.f32.mrb[0].mxu0
        %v5004 = vadd.f32 %v4943, %v5003
        %v5005 = vpop.f32.mrb[0].mxu0
        %v5006 = vpop.f32.mrb[0].mxu0
        %v5007 = vpop.f32.mrb[0].mxu0
        %5008 = vmatprep.mubr.bf16.mxu0 0
        %5009 = vmatmul.mubr.bf16.gmra.mrb[0].mxu0 %v4839
        %v5010 = vpop.f32.mrb[0].mxu0
        %v5011 = vadd.f32 %v4950, %v5010
        %v5012 = vpop.f32.mrb[0].mxu0
        %v5013 = vpop.f32.mrb[0].mxu0
        %v5014 = vpop.f32.mrb[0].mxu0
        %5015 = vmatprep.mubr.bf16.mxu0 0
        %5016 = vmatmul.mubr.bf16.gmra.mrb[0].mxu0 %v4842
        %v5017 = vpop.f32.mrb[0].mxu0
        %v5018 = vadd.f32 %v4957, %v5017
        %v5019 = vpop.f32.mrb[0].mxu0
        %v5020 = vpop.f32.mrb[0].mxu0
        %v5021 = vpop.f32.mrb[0].mxu0
        %5022 = vmatprep.mubr.bf16.mxu0 0
        %5023 = vmatmul.mubr.bf16.gmra.mrb[0].mxu0 %v4845
        %v5024 = vpop.f32.mrb[0].mxu0
        %v5025 = vadd.f32 %v4964, %v5024
        %v5026 = vpop.f32.mrb[0].mxu0
        %v5027 = vpop.f32.mrb[0].mxu0
        %v5028 = vpop.f32.mrb[0].mxu0
        %5029 = vdwg.mxu0
        %v5034 = vrot.slane %v5004, 1
        %v5035 = vrot.slane %v5011, 1
        %v5036 = vrot.slane %v5018, 1
        %v5037 = vrot.slane %v5025, 1
        %v5042 = vrot.slane %v5004, 2
        %v5043 = vrot.slane %v5011, 2
        %v5044 = vrot.slane %v5018, 2
        %v5045 = vrot.slane %v5025, 2
        %v5050 = vrot.slane %v5004, 3
        %v5051 = vrot.slane %v5011, 3
        %v5052 = vrot.slane %v5018, 3
        %v5053 = vrot.slane %v5025, 3
        %v5058 = vsel %vm2229, %v5004, %v5034
        %v5059 = vsel %vm2229, %v5011, %v5035
        %v5060 = vsel %vm2229, %v5018, %v5036
        %v5061 = vsel %vm2229, %v5025, %v5037
        %v5062 = vsel %vm2712, %v5058, %v5042
        %v5063 = vsel %vm2712, %v5059, %v5043
        %v5064 = vsel %vm2712, %v5060, %v5044
        %v5065 = vsel %vm2712, %v5061, %v5045
        %v5066 = vsel %vm2721, %v5062, %v5050
        %v5067 = vsel %vm2721, %v5063, %v5051
        %v5068 = vsel %vm2721, %v5064, %v5052
        %v5069 = vsel %vm2721, %v5065, %v5053
        %v5070 = vld [vmem:[%s11] sm:$0x1]
        %v5072 = vlaneseq
        %v5073 = vshrl.u32 %v5072, 7
        %v5074 = vsub.s32 0, %v5073
        %v5075 = vrot.slane %v5070, %v5074
        %v5077 = vmul.f32 %v5066, %v5075
        %v5078 = vmul.f32 %v5067, %v5075
        %v5079 = vmul.f32 %v5068, %v5075
        %v5080 = vmul.f32 %v5069, %v5075
        %v5081 = vld [vmem:[%s12] sm:$0x1]
        %v5083 = vlaneseq
        %v5084 = vshrl.u32 %v5083, 7
        %v5085 = vsub.s32 0, %v5084
        %v5086 = vrot.slane %v5081, %v5085
        %v5088 = vadd.f32 %v5077, %v5086
        %v5089 = vadd.f32 %v5078, %v5086
        %v5090 = vadd.f32 %v5079, %v5086
        %v5091 = vadd.f32 %v5080, %v5086
        %v5092 = vmax.f32 %v5088, 0.0
        %v5093 = vmax.f32 %v5089, 0.0
        %v5094 = vmax.f32 %v5090, 0.0
        %v5095 = vmax.f32 %v5091, 0.0
        %v5100 = vrot.slane %v5092, 7
        %v5101 = vrot.slane %v5093, 7
        %v5102 = vrot.slane %v5094, 7
        %v5103 = vrot.slane %v5095, 7
        %v5108 = vsel %vm2229, 0.0, %v5100
        %v5109 = vsel %vm2229, 0.0, %v5101
        %v5110 = vsel %vm2229, 0.0, %v5102
        %v5111 = vsel %vm2229, 0.0, %v5103
        %v5112 = vsel %vm2739, %v5108, 0.0
        %v5113 = vsel %vm2739, %v5109, 0.0
        %v5114 = vsel %vm2739, %v5110, 0.0
        %v5115 = vsel %vm2739, %v5111, 0.0
        %v5116 = vld [vmem:[%s13] sm:$0xf]
        %v5117 = vld [vmem:[%s13 + $0x4] sm:$0xf]
        %v5118 = vld [vmem:[%s13 + $0x8] sm:$0xf]
        %v5119 = vld [vmem:[%s13 + $0xc] sm:$0xf]
        %v5120 = vld [vmem:[%s13 + $0x10] sm:$0xf]
        %v5121 = vld [vmem:[%s13 + $0x14] sm:$0xf]
        %v5122 = vld [vmem:[%s13 + $0x18] sm:$0xf]
        %v5123 = vld [vmem:[%s13 + $0x1c] sm:$0xf]
        %v5124 = vld [vmem:[%s13 + $0x20] sm:$0xf]
        %v5125 = vld [vmem:[%s13 + $0x24] sm:$0xf]
        %v5126 = vld [vmem:[%s13 + $0x28] sm:$0xf]
        %v5127 = vld [vmem:[%s13 + $0x2c] sm:$0xf]
        %v5128 = vld [vmem:[%s13 + $0x30] sm:$0xf]
        %v5129 = vld [vmem:[%s13 + $0x34] sm:$0xf]
        %v5130 = vld [vmem:[%s13 + $0x38] sm:$0xf]
        %v5131 = vld [vmem:[%s13 + $0x3c] sm:$0xf]
        %v5132 = vld [vmem:[%s13 + $0x40] sm:$0xf]
        %v5133 = vld [vmem:[%s13 + $0x44] sm:$0xf]
        %v5134 = vld [vmem:[%s13 + $0x48] sm:$0xf]
        %v5135 = vld [vmem:[%s13 + $0x4c] sm:$0xf]
        %v5136 = vld [vmem:[%s13 + $0x50] sm:$0xf]
        %v5137 = vld [vmem:[%s13 + $0x54] sm:$0xf]
        %v5138 = vld [vmem:[%s13 + $0x58] sm:$0xf]
        %v5139 = vld [vmem:[%s13 + $0x5c] sm:$0xf]
        %v5140 = vld [vmem:[%s13 + $0x60] sm:$0xf]
        %v5141 = vld [vmem:[%s13 + $0x64] sm:$0xf]
        %v5142 = vld [vmem:[%s13 + $0x68] sm:$0xf]
        %v5143 = vld [vmem:[%s13 + $0x6c] sm:$0xf]
        %v5144 = vld [vmem:[%s13 + $0x70] sm:$0xf]
        %v5145 = vld [vmem:[%s13 + $0x74] sm:$0xf]
        %v5146 = vld [vmem:[%s13 + $0x78] sm:$0xf]
        %v5147 = vld [vmem:[%s13 + $0x7c] sm:$0xf]
        %v5148 = vld [vmem:[%s13 + $0x80] sm:$0xf]
        %v5149 = vld [vmem:[%s13 + $0x84] sm:$0xf]
        %v5150 = vld [vmem:[%s13 + $0x88] sm:$0xf]
        %v5151 = vld [vmem:[%s13 + $0x8c] sm:$0xf]
        %v5152 = vld [vmem:[%s13 + $0x90] sm:$0xf]
        %v5153 = vld [vmem:[%s13 + $0x94] sm:$0xf]
        %v5154 = vld [vmem:[%s13 + $0x98] sm:$0xf]
        %v5155 = vld [vmem:[%s13 + $0x9c] sm:$0xf]
        %v5156 = vld [vmem:[%s13 + $0xa0] sm:$0xf]
        %v5157 = vld [vmem:[%s13 + $0xa4] sm:$0xf]
        %v5158 = vld [vmem:[%s13 + $0xa8] sm:$0xf]
        %v5159 = vld [vmem:[%s13 + $0xac] sm:$0xf]
        %v5160 = vld [vmem:[%s13 + $0xb0] sm:$0xf]
        %v5161 = vld [vmem:[%s13 + $0xb4] sm:$0xf]
        %v5162 = vld [vmem:[%s13 + $0xb8] sm:$0xf]
        %v5163 = vld [vmem:[%s13 + $0xbc] sm:$0xf]
        %v5164 = vld [vmem:[%s13 + $0xc0] sm:$0xf]
        %v5165 = vld [vmem:[%s13 + $0xc4] sm:$0xf]
        %v5166 = vld [vmem:[%s13 + $0xc8] sm:$0xf]
        %v5167 = vld [vmem:[%s13 + $0xcc] sm:$0xf]
        %v5168 = vld [vmem:[%s13 + $0xd0] sm:$0xf]
        %v5169 = vld [vmem:[%s13 + $0xd4] sm:$0xf]
        %v5170 = vld [vmem:[%s13 + $0xd8] sm:$0xf]
        %v5171 = vld [vmem:[%s13 + $0xdc] sm:$0xf]
        %v5172 = vld [vmem:[%s13 + $0xe0] sm:$0xf]
        %v5173 = vld [vmem:[%s13 + $0xe4] sm:$0xf]
        %v5174 = vld [vmem:[%s13 + $0xe8] sm:$0xf]
        %v5175 = vld [vmem:[%s13 + $0xec] sm:$0xf]
        %v5176 = vld [vmem:[%s13 + $0xf0] sm:$0xf]
        %v5177 = vld [vmem:[%s13 + $0xf4] sm:$0xf]
        %v5178 = vld [vmem:[%s13 + $0xf8] sm:$0xf]
        %v5179 = vld [vmem:[%s13 + $0xfc] sm:$0xf]
        %v5180 = vld [vmem:[%s13 + $0x100] sm:$0xf]
        %v5181 = vld [vmem:[%s13 + $0x104] sm:$0xf]
        %v5182 = vld [vmem:[%s13 + $0x108] sm:$0xf]
        %v5183 = vld [vmem:[%s13 + $0x10c] sm:$0xf]
        %v5184 = vld [vmem:[%s13 + $0x110] sm:$0xf]
        %v5185 = vld [vmem:[%s13 + $0x114] sm:$0xf]
        %v5186 = vld [vmem:[%s13 + $0x118] sm:$0xf]
        %v5187 = vld [vmem:[%s13 + $0x11c] sm:$0xf]
        %v5188 = vld [vmem:[%s13 + $0x120] sm:$0xf]
        %v5189 = vld [vmem:[%s13 + $0x124] sm:$0xf]
        %v5190 = vld [vmem:[%s13 + $0x128] sm:$0xf]
        %v5191 = vld [vmem:[%s13 + $0x12c] sm:$0xf]
        %v5192 = vld [vmem:[%s13 + $0x130] sm:$0xf]
        %v5193 = vld [vmem:[%s13 + $0x134] sm:$0xf]
        %v5194 = vld [vmem:[%s13 + $0x138] sm:$0xf]
        %v5195 = vld [vmem:[%s13 + $0x13c] sm:$0xf]
        %v5196 = vld [vmem:[%s13 + $0x140] sm:$0xf]
        %v5197 = vld [vmem:[%s13 + $0x144] sm:$0xf]
        %v5198 = vld [vmem:[%s13 + $0x148] sm:$0xf]
        %v5199 = vld [vmem:[%s13 + $0x14c] sm:$0xf]
        %v5200 = vld [vmem:[%s13 + $0x150] sm:$0xf]
        %v5201 = vld [vmem:[%s13 + $0x154] sm:$0xf]
        %v5202 = vld [vmem:[%s13 + $0x158] sm:$0xf]
        %v5203 = vld [vmem:[%s13 + $0x15c] sm:$0xf]
        %v5204 = vld [vmem:[%s13 + $0x160] sm:$0xf]
        %v5205 = vld [vmem:[%s13 + $0x164] sm:$0xf]
        %v5206 = vld [vmem:[%s13 + $0x168] sm:$0xf]
        %v5207 = vld [vmem:[%s13 + $0x16c] sm:$0xf]
        %v5208 = vld [vmem:[%s13 + $0x170] sm:$0xf]
        %v5209 = vld [vmem:[%s13 + $0x174] sm:$0xf]
        %v5210 = vld [vmem:[%s13 + $0x178] sm:$0xf]
        %v5211 = vld [vmem:[%s13 + $0x17c] sm:$0xf]
        %v5212 = vld [vmem:[%s13 + $0x180] sm:$0xf]
        %v5213 = vld [vmem:[%s13 + $0x184] sm:$0xf]
        %v5214 = vld [vmem:[%s13 + $0x188] sm:$0xf]
        %v5215 = vld [vmem:[%s13 + $0x18c] sm:$0xf]
        %v5216 = vld [vmem:[%s13 + $0x190] sm:$0xf]
        %v5217 = vld [vmem:[%s13 + $0x194] sm:$0xf]
        %v5218 = vld [vmem:[%s13 + $0x198] sm:$0xf]
        %v5219 = vld [vmem:[%s13 + $0x19c] sm:$0xf]
        %v5220 = vld [vmem:[%s13 + $0x1a0] sm:$0xf]
        %v5221 = vld [vmem:[%s13 + $0x1a4] sm:$0xf]
        %v5222 = vld [vmem:[%s13 + $0x1a8] sm:$0xf]
        %v5223 = vld [vmem:[%s13 + $0x1ac] sm:$0xf]
        %v5224 = vld [vmem:[%s13 + $0x1b0] sm:$0xf]
        %v5225 = vld [vmem:[%s13 + $0x1b4] sm:$0xf]
        %v5226 = vld [vmem:[%s13 + $0x1b8] sm:$0xf]
        %v5227 = vld [vmem:[%s13 + $0x1bc] sm:$0xf]
        %v5228 = vld [vmem:[%s13 + $0x1c0] sm:$0xf]
        %v5229 = vld [vmem:[%s13 + $0x1c4] sm:$0xf]
        %v5230 = vld [vmem:[%s13 + $0x1c8] sm:$0xf]
        %v5231 = vld [vmem:[%s13 + $0x1cc] sm:$0xf]
        %v5232 = vld [vmem:[%s13 + $0x1d0] sm:$0xf]
        %v5233 = vld [vmem:[%s13 + $0x1d4] sm:$0xf]
        %v5234 = vld [vmem:[%s13 + $0x1d8] sm:$0xf]
        %v5235 = vld [vmem:[%s13 + $0x1dc] sm:$0xf]
        %v5236 = vld [vmem:[%s13 + $0x1e0] sm:$0xf]
        %v5237 = vld [vmem:[%s13 + $0x1e4] sm:$0xf]
        %v5238 = vld [vmem:[%s13 + $0x1e8] sm:$0xf]
        %v5239 = vld [vmem:[%s13 + $0x1ec] sm:$0xf]
        %v5240 = vld [vmem:[%s13 + $0x1f0] sm:$0xf]
        %v5241 = vld [vmem:[%s13 + $0x1f4] sm:$0xf]
        %v5242 = vld [vmem:[%s13 + $0x1f8] sm:$0xf]
        %v5243 = vld [vmem:[%s13 + $0x1fc] sm:$0xf]
        %v5244 = vld [vmem:[%s13 + $0x200] sm:$0xf]
        %v5245 = vld [vmem:[%s13 + $0x204] sm:$0xf]
        %v5246 = vld [vmem:[%s13 + $0x208] sm:$0xf]
        %v5247 = vld [vmem:[%s13 + $0x20c] sm:$0xf]
        %v5248 = vld [vmem:[%s13 + $0x210] sm:$0xf]
        %v5249 = vld [vmem:[%s13 + $0x214] sm:$0xf]
        %v5250 = vld [vmem:[%s13 + $0x218] sm:$0xf]
        %v5251 = vld [vmem:[%s13 + $0x21c] sm:$0xf]
        %v5252 = vld [vmem:[%s13 + $0x220] sm:$0xf]
        %v5253 = vld [vmem:[%s13 + $0x224] sm:$0xf]
        %v5254 = vld [vmem:[%s13 + $0x228] sm:$0xf]
        %v5255 = vld [vmem:[%s13 + $0x22c] sm:$0xf]
        %v5256 = vld [vmem:[%s13 + $0x230] sm:$0xf]
        %v5257 = vld [vmem:[%s13 + $0x234] sm:$0xf]
        %v5258 = vld [vmem:[%s13 + $0x238] sm:$0xf]
        %v5259 = vld [vmem:[%s13 + $0x23c] sm:$0xf]
        %v5263 = vrot.slane %v5112, 1
        %v5264 = vsel %vm2430, %v5263, %v2891
        %v5265 = vrot.slane %v5113, 1
        %v5266 = vsel %vm2430, %v5265, %v2891
        %v5267 = vrot.slane %v5114, 1
        %v5268 = vsel %vm2430, %v5267, %v2891
        %v5273 = vrot.slane %v5112, 2
        %v5274 = vsel %vm2503, %v5273, %v2938
        %v5275 = vrot.slane %v5113, 2
        %v5276 = vsel %vm2503, %v5275, %v2938
        %v5277 = vrot.slane %v5114, 2
        %v5278 = vsel %vm2503, %v5277, %v2938
        %v5283 = vrot.slane %v5115, 1
        %v5284 = vsel %vm2430, %v5283, %v2891
        %v5286 = vrot.slane %v5115, 2
        %v5287 = vsel %vm2503, %v5286, %v2938
        %v5289 = vpack.c.bf16 %v5112, 0.0
        %v5290 = vpack.c.bf16 %v5264, %v2892
        %v5291 = vpack.c.bf16 %v5274, %v2939
        %v5292 = vpack.c.bf16 %v5113, %v5112
        %v5293 = vpack.c.bf16 %v5266, %v5264
        %v5294 = vpack.c.bf16 %v5276, %v5274
        %v5295 = vpack.c.bf16 %v5114, %v5113
        %v5296 = vpack.c.bf16 %v5268, %v5266
        %v5297 = vpack.c.bf16 %v5278, %v5276
        %v5298 = vpack.c.bf16 %v5115, %v5114
        %v5299 = vpack.c.bf16 %v5284, %v5268
        %v5300 = vpack.c.bf16 %v5287, %v5278
        %v5301 = vpack.c.bf16 0.0, %v5115
        %v5302 = vpack.c.bf16 %v2892, %v5284
        %v5303 = vpack.c.bf16 %v2939, %v5287
        %v5448 = vunpack.c.l.b16 %v5116
        %v5449 = vunpack.c.l.b16 %v5117
        %v5450 = vunpack.c.l.b16 %v5118
        %v5451 = vunpack.c.l.b16 %v5119
        %v5452 = vunpack.c.l.b16 %v5120
        %v5453 = vunpack.c.l.b16 %v5121
        %v5454 = vunpack.c.l.b16 %v5122
        %v5455 = vunpack.c.l.b16 %v5123
        %v5456 = vunpack.c.l.b16 %v5124
        %v5457 = vunpack.c.l.b16 %v5125
        %v5458 = vunpack.c.l.b16 %v5126
        %v5459 = vunpack.c.l.b16 %v5127
        %v5460 = vunpack.c.l.b16 %v5128
        %v5461 = vunpack.c.l.b16 %v5129
        %v5462 = vunpack.c.l.b16 %v5130
        %v5463 = vunpack.c.l.b16 %v5131
        %v5464 = vunpack.c.l.b16 %v5132
        %v5465 = vunpack.c.l.b16 %v5133
        %v5466 = vunpack.c.l.b16 %v5134
        %v5467 = vunpack.c.l.b16 %v5135
        %v5468 = vunpack.c.l.b16 %v5136
        %v5469 = vunpack.c.l.b16 %v5137
        %v5470 = vunpack.c.l.b16 %v5138
        %v5471 = vunpack.c.l.b16 %v5139
        %v5472 = vunpack.c.l.b16 %v5140
        %v5473 = vunpack.c.l.b16 %v5141
        %v5474 = vunpack.c.l.b16 %v5142
        %v5475 = vunpack.c.l.b16 %v5143
        %v5476 = vunpack.c.l.b16 %v5144
        %v5477 = vunpack.c.l.b16 %v5145
        %v5478 = vunpack.c.l.b16 %v5146
        %v5479 = vunpack.c.l.b16 %v5147
        %v5480 = vunpack.c.l.b16 %v5148
        %v5481 = vunpack.c.l.b16 %v5149
        %v5482 = vunpack.c.l.b16 %v5150
        %v5483 = vunpack.c.l.b16 %v5151
        %v5484 = vunpack.c.l.b16 %v5152
        %v5485 = vunpack.c.l.b16 %v5153
        %v5486 = vunpack.c.l.b16 %v5154
        %v5487 = vunpack.c.l.b16 %v5155
        %v5488 = vunpack.c.l.b16 %v5156
        %v5489 = vunpack.c.l.b16 %v5157
        %v5490 = vunpack.c.l.b16 %v5158
        %v5491 = vunpack.c.l.b16 %v5159
        %v5492 = vunpack.c.l.b16 %v5160
        %v5493 = vunpack.c.l.b16 %v5161
        %v5494 = vunpack.c.l.b16 %v5162
        %v5495 = vunpack.c.l.b16 %v5163
        %v5496 = vunpack.c.l.b16 %v5164
        %v5497 = vunpack.c.l.b16 %v5165
        %v5498 = vunpack.c.l.b16 %v5166
        %v5499 = vunpack.c.l.b16 %v5167
        %v5500 = vunpack.c.l.b16 %v5168
        %v5501 = vunpack.c.l.b16 %v5169
        %v5502 = vunpack.c.l.b16 %v5170
        %v5503 = vunpack.c.l.b16 %v5171
        %v5504 = vunpack.c.l.b16 %v5172
        %v5505 = vunpack.c.l.b16 %v5173
        %v5506 = vunpack.c.l.b16 %v5174
        %v5507 = vunpack.c.l.b16 %v5175
        %v5508 = vunpack.c.l.b16 %v5176
        %v5509 = vunpack.c.l.b16 %v5177
        %v5510 = vunpack.c.l.b16 %v5178
        %v5511 = vunpack.c.l.b16 %v5179
        %v5512 = vunpack.c.l.b16 %v5180
        %v5513 = vunpack.c.l.b16 %v5181
        %v5514 = vunpack.c.l.b16 %v5182
        %v5515 = vunpack.c.l.b16 %v5183
        %v5516 = vunpack.c.l.b16 %v5184
        %v5517 = vunpack.c.l.b16 %v5185
        %v5518 = vunpack.c.l.b16 %v5186
        %v5519 = vunpack.c.l.b16 %v5187
        %v5520 = vunpack.c.l.b16 %v5188
        %v5521 = vunpack.c.l.b16 %v5189
        %v5522 = vunpack.c.l.b16 %v5190
        %v5523 = vunpack.c.l.b16 %v5191
        %v5524 = vunpack.c.l.b16 %v5192
        %v5525 = vunpack.c.l.b16 %v5193
        %v5526 = vunpack.c.l.b16 %v5194
        %v5527 = vunpack.c.l.b16 %v5195
        %v5528 = vunpack.c.l.b16 %v5196
        %v5529 = vunpack.c.l.b16 %v5197
        %v5530 = vunpack.c.l.b16 %v5198
        %v5531 = vunpack.c.l.b16 %v5199
        %v5532 = vunpack.c.l.b16 %v5200
        %v5533 = vunpack.c.l.b16 %v5201
        %v5534 = vunpack.c.l.b16 %v5202
        %v5535 = vunpack.c.l.b16 %v5203
        %v5536 = vunpack.c.l.b16 %v5204
        %v5537 = vunpack.c.l.b16 %v5205
        %v5538 = vunpack.c.l.b16 %v5206
        %v5539 = vunpack.c.l.b16 %v5207
        %v5540 = vunpack.c.l.b16 %v5208
        %v5541 = vunpack.c.l.b16 %v5209
        %v5542 = vunpack.c.l.b16 %v5210
        %v5543 = vunpack.c.l.b16 %v5211
        %v5544 = vunpack.c.l.b16 %v5212
        %v5545 = vunpack.c.l.b16 %v5213
        %v5546 = vunpack.c.l.b16 %v5214
        %v5547 = vunpack.c.l.b16 %v5215
        %v5548 = vunpack.c.l.b16 %v5216
        %v5549 = vunpack.c.l.b16 %v5217
        %v5550 = vunpack.c.l.b16 %v5218
        %v5551 = vunpack.c.l.b16 %v5219
        %v5552 = vunpack.c.l.b16 %v5220
        %v5553 = vunpack.c.l.b16 %v5221
        %v5554 = vunpack.c.l.b16 %v5222
        %v5555 = vunpack.c.l.b16 %v5223
        %v5556 = vunpack.c.l.b16 %v5224
        %v5557 = vunpack.c.l.b16 %v5225
        %v5558 = vunpack.c.l.b16 %v5226
        %v5559 = vunpack.c.l.b16 %v5227
        %v5560 = vunpack.c.l.b16 %v5228
        %v5561 = vunpack.c.l.b16 %v5229
        %v5562 = vunpack.c.l.b16 %v5230
        %v5563 = vunpack.c.l.b16 %v5231
        %v5564 = vunpack.c.l.b16 %v5232
        %v5565 = vunpack.c.l.b16 %v5233
        %v5566 = vunpack.c.l.b16 %v5234
        %v5567 = vunpack.c.l.b16 %v5235
        %v5568 = vunpack.c.l.b16 %v5236
        %v5569 = vunpack.c.l.b16 %v5237
        %v5570 = vunpack.c.l.b16 %v5238
        %v5571 = vunpack.c.l.b16 %v5239
        %v5572 = vunpack.c.l.b16 %v5240
        %v5573 = vunpack.c.l.b16 %v5241
        %v5574 = vunpack.c.l.b16 %v5242
        %v5575 = vunpack.c.l.b16 %v5243
        %v5576 = vunpack.c.l.b16 %v5244
        %v5577 = vunpack.c.l.b16 %v5245
        %v5578 = vunpack.c.l.b16 %v5246
        %v5579 = vunpack.c.l.b16 %v5247
        %v5580 = vunpack.c.l.b16 %v5248
        %v5581 = vunpack.c.l.b16 %v5249
        %v5582 = vunpack.c.l.b16 %v5250
        %v5583 = vunpack.c.l.b16 %v5251
        %v5584 = vunpack.c.l.b16 %v5252
        %v5585 = vunpack.c.l.b16 %v5253
        %v5586 = vunpack.c.l.b16 %v5254
        %v5587 = vunpack.c.l.b16 %v5255
        %v5588 = vunpack.c.l.b16 %v5256
        %v5589 = vunpack.c.l.b16 %v5257
        %v5590 = vunpack.c.l.b16 %v5258
        %v5591 = vunpack.c.l.b16 %v5259
        %v5592 = vpack.c.b16 %v5449, %v5448
        %v5593 = vpack.c.b16 %v5451, %v5450
        %v5594 = vpack.c.b16 %v5453, %v5452
        %v5595 = vpack.c.b16 %v5455, %v5454
        %v5596 = vpack.c.b16 %v5457, %v5456
        %v5597 = vpack.c.b16 %v5459, %v5458
        %v5598 = vpack.c.b16 %v5461, %v5460
        %v5599 = vpack.c.b16 %v5463, %v5462
        %v5600 = vpack.c.b16 %v5465, %v5464
        %v5601 = vpack.c.b16 %v5467, %v5466
        %v5602 = vpack.c.b16 %v5469, %v5468
        %v5603 = vpack.c.b16 %v5471, %v5470
        %v5604 = vpack.c.b16 %v5473, %v5472
        %v5605 = vpack.c.b16 %v5475, %v5474
        %v5606 = vpack.c.b16 %v5477, %v5476
        %v5607 = vpack.c.b16 %v5479, %v5478
        %v5608 = vpack.c.b16 %v5481, %v5480
        %v5609 = vpack.c.b16 %v5483, %v5482
        %v5610 = vpack.c.b16 %v5485, %v5484
        %v5611 = vpack.c.b16 %v5487, %v5486
        %v5612 = vpack.c.b16 %v5489, %v5488
        %v5613 = vpack.c.b16 %v5491, %v5490
        %v5614 = vpack.c.b16 %v5493, %v5492
        %v5615 = vpack.c.b16 %v5495, %v5494
        %v5616 = vpack.c.b16 %v5497, %v5496
        %v5617 = vpack.c.b16 %v5499, %v5498
        %v5618 = vpack.c.b16 %v5501, %v5500
        %v5619 = vpack.c.b16 %v5503, %v5502
        %v5620 = vpack.c.b16 %v5505, %v5504
        %v5621 = vpack.c.b16 %v5507, %v5506
        %v5622 = vpack.c.b16 %v5509, %v5508
        %v5623 = vpack.c.b16 %v5511, %v5510
        %v5624 = vpack.c.b16 %v5513, %v5512
        %v5625 = vpack.c.b16 %v5515, %v5514
        %v5626 = vpack.c.b16 %v5517, %v5516
        %v5627 = vpack.c.b16 %v5519, %v5518
        %v5628 = vpack.c.b16 %v5521, %v5520
        %v5629 = vpack.c.b16 %v5523, %v5522
        %v5630 = vpack.c.b16 %v5525, %v5524
        %v5631 = vpack.c.b16 %v5527, %v5526
        %v5632 = vpack.c.b16 %v5529, %v5528
        %v5633 = vpack.c.b16 %v5531, %v5530
        %v5634 = vpack.c.b16 %v5533, %v5532
        %v5635 = vpack.c.b16 %v5535, %v5534
        %v5636 = vpack.c.b16 %v5537, %v5536
        %v5637 = vpack.c.b16 %v5539, %v5538
        %v5638 = vpack.c.b16 %v5541, %v5540
        %v5639 = vpack.c.b16 %v5543, %v5542
        %v5640 = vpack.c.b16 %v5545, %v5544
        %v5641 = vpack.c.b16 %v5547, %v5546
        %v5642 = vpack.c.b16 %v5549, %v5548
        %v5643 = vpack.c.b16 %v5551, %v5550
        %v5644 = vpack.c.b16 %v5553, %v5552
        %v5645 = vpack.c.b16 %v5555, %v5554
        %v5646 = vpack.c.b16 %v5557, %v5556
        %v5647 = vpack.c.b16 %v5559, %v5558
        %v5648 = vpack.c.b16 %v5561, %v5560
        %v5649 = vpack.c.b16 %v5563, %v5562
        %v5650 = vpack.c.b16 %v5565, %v5564
        %v5651 = vpack.c.b16 %v5567, %v5566
        %v5652 = vpack.c.b16 %v5569, %v5568
        %v5653 = vpack.c.b16 %v5571, %v5570
        %v5654 = vpack.c.b16 %v5573, %v5572
        %v5655 = vpack.c.b16 %v5575, %v5574
        %v5656 = vpack.c.b16 %v5577, %v5576
        %v5657 = vpack.c.b16 %v5579, %v5578
        %v5658 = vpack.c.b16 %v5581, %v5580
        %v5659 = vpack.c.b16 %v5583, %v5582
        %v5660 = vpack.c.b16 %v5585, %v5584
        %v5661 = vpack.c.b16 %v5587, %v5586
        %v5662 = vpack.c.b16 %v5589, %v5588
        %v5663 = vpack.c.b16 %v5591, %v5590
        %5736 = vmatprep.subr.bf16.mxu0 0
        %5737 = vmatpush1.bf16.msra.mxu0 %v5592
        %5738 = vmatprep.subr.bf16.mxu0 0
        %5739 = vmatpush1.bf16.msra.mxu0 %v5593
        %5740 = vmatprep.subr.bf16.mxu0 0
        %5741 = vmatpush1.bf16.msra.mxu0 %v5594
        %5742 = vmatprep.subr.bf16.mxu0 0
        %5743 = vmatpush1.bf16.msra.mxu0 %v5595
        %5744 = vmatprep.subr.bf16.mxu0 0
        %5745 = vmatpush1.bf16.msra.mxu0 %v5596
        %5746 = vmatprep.subr.bf16.mxu0 0
        %5747 = vmatpush1.bf16.msra.mxu0 %v5597
        %5748 = vmatprep.subr.bf16.mxu0 0
        %5749 = vmatpush1.bf16.msra.mxu0 %v5598
        %5750 = vmatprep.subr.bf16.mxu0 0
        %5751 = vmatpush1.bf16.msra.mxu0 %v5599
        %5752 = vmatprep.subr.bf16.mxu0 0
        %5753 = vmatpush1.bf16.msra.mxu0 %v5600
        %5754 = vmatprep.subr.bf16.mxu0 0
        %5755 = vmatpush1.bf16.msra.mxu0 %v5601
        %5756 = vmatprep.subr.bf16.mxu0 0
        %5757 = vmatpush1.bf16.msra.mxu0 %v5602
        %5758 = vmatprep.subr.bf16.mxu0 0
        %5759 = vmatpush1.bf16.msra.mxu0 %v5603
        %5760 = vmatprep.subr.bf16.mxu0 0
        %5761 = vmatpush1.bf16.msra.mxu0 %v5604
        %5762 = vmatprep.subr.bf16.mxu0 0
        %5763 = vmatpush1.bf16.msra.mxu0 %v5605
        %5764 = vmatprep.subr.bf16.mxu0 0
        %5765 = vmatpush1.bf16.msra.mxu0 %v5606
        %5766 = vmatprep.subr.bf16.mxu0 0
        %5767 = vmatpush1.bf16.msra.mxu0 %v5607
        %5768 = vmatprep.mubr.bf16.mxu0 %v5290
        %5769 = vmatmul.mubr.bf16.gmra.mrb[0].mxu0 %v5289
        %v5770 = vpop.f32.mrb[0].mxu0
        %v5771 = vadd.f32 0.0, %v5770
        %v5772 = vpop.f32.mrb[0].mxu0
        %v5773 = vpop.f32.mrb[0].mxu0
        %v5774 = vadd.f32 0.0, %v5773
        %v5775 = vpop.f32.mrb[0].mxu0
        %5776 = vmatprep.mubr.bf16.mxu0 %v5296
        %5777 = vmatmul.mubr.bf16.gmra.mrb[0].mxu0 %v5295
        %v5778 = vpop.f32.mrb[0].mxu0
        %v5779 = vadd.f32 0.0, %v5778
        %v5780 = vpop.f32.mrb[0].mxu0
        %v5781 = vpop.f32.mrb[0].mxu0
        %v5782 = vadd.f32 0.0, %v5781
        %v5783 = vpop.f32.mrb[0].mxu0
        %5784 = vdwg.mxu0
        %5785 = vmatprep.subr.bf16.mxu0 0
        %5786 = vmatpush1.bf16.msra.mxu0 %v5608
        %5787 = vmatprep.subr.bf16.mxu0 0
        %5788 = vmatpush1.bf16.msra.mxu0 %v5609
        %5789 = vmatprep.subr.bf16.mxu0 0
        %5790 = vmatpush1.bf16.msra.mxu0 %v5610
        %5791 = vmatprep.subr.bf16.mxu0 0
        %5792 = vmatpush1.bf16.msra.mxu0 %v5611
        %5793 = vmatprep.subr.bf16.mxu0 0
        %5794 = vmatpush1.bf16.msra.mxu0 %v5612
        %5795 = vmatprep.subr.bf16.mxu0 0
        %5796 = vmatpush1.bf16.msra.mxu0 %v5613
        %5797 = vmatprep.subr.bf16.mxu0 0
        %5798 = vmatpush1.bf16.msra.mxu0 %v5614
        %5799 = vmatprep.subr.bf16.mxu0 0
        %5800 = vmatpush1.bf16.msra.mxu0 %v5615
        %5801 = vmatprep.subr.bf16.mxu0 0
        %5802 = vmatpush1.bf16.msra.mxu0 %v5616
        %5803 = vmatprep.subr.bf16.mxu0 0
        %5804 = vmatpush1.bf16.msra.mxu0 %v5617
        %5805 = vmatprep.subr.bf16.mxu0 0
        %5806 = vmatpush1.bf16.msra.mxu0 %v5618
        %5807 = vmatprep.subr.bf16.mxu0 0
        %5808 = vmatpush1.bf16.msra.mxu0 %v5619
        %5809 = vmatprep.subr.bf16.mxu0 0
        %5810 = vmatpush1.bf16.msra.mxu0 %v5620
        %5811 = vmatprep.subr.bf16.mxu0 0
        %5812 = vmatpush1.bf16.msra.mxu0 %v5621
        %5813 = vmatprep.subr.bf16.mxu0 0
        %5814 = vmatpush1.bf16.msra.mxu0 %v5622
        %5815 = vmatprep.subr.bf16.mxu0 0
        %5816 = vmatpush1.bf16.msra.mxu0 %v5623
        %5817 = vmatprep.mubr.bf16.mxu0 %v5292
        %5818 = vmatmul.mubr.bf16.gmra.mrb[0].mxu0 %v5291
        %v5819 = vpop.f32.mrb[0].mxu0
        %v5820 = vadd.f32 %v5771, %v5819
        %v5821 = vpop.f32.mrb[0].mxu0
        %v5822 = vpop.f32.mrb[0].mxu0
        %v5823 = vadd.f32 %v5774, %v5822
        %v5824 = vpop.f32.mrb[0].mxu0
        %5825 = vmatprep.mubr.bf16.mxu0 %v5298
        %5826 = vmatmul.mubr.bf16.gmra.mrb[0].mxu0 %v5297
        %v5827 = vpop.f32.mrb[0].mxu0
        %v5828 = vadd.f32 %v5779, %v5827
        %v5829 = vpop.f32.mrb[0].mxu0
        %v5830 = vpop.f32.mrb[0].mxu0
        %v5831 = vadd.f32 %v5782, %v5830
        %v5832 = vpop.f32.mrb[0].mxu0
        %5833 = vdwg.mxu0
        %5834 = vmatprep.subr.bf16.mxu0 0
        %5835 = vmatpush1.bf16.msra.mxu0 %v5624
        %5836 = vmatprep.subr.bf16.mxu0 0
        %5837 = vmatpush1.bf16.msra.mxu0 %v5625
        %5838 = vmatprep.subr.bf16.mxu0 0
        %5839 = vmatpush1.bf16.msra.mxu0 %v5626
        %5840 = vmatprep.subr.bf16.mxu0 0
        %5841 = vmatpush1.bf16.msra.mxu0 %v5627
        %5842 = vmatprep.subr.bf16.mxu0 0
        %5843 = vmatpush1.bf16.msra.mxu0 %v5628
        %5844 = vmatprep.subr.bf16.mxu0 0
        %5845 = vmatpush1.bf16.msra.mxu0 %v5629
        %5846 = vmatprep.subr.bf16.mxu0 0
        %5847 = vmatpush1.bf16.msra.mxu0 %v5630
        %5848 = vmatprep.subr.bf16.mxu0 0
        %5849 = vmatpush1.bf16.msra.mxu0 %v5631
        %5850 = vmatprep.subr.bf16.mxu0 0
        %5851 = vmatpush1.bf16.msra.mxu0 %v5632
        %5852 = vmatprep.subr.bf16.mxu0 0
        %5853 = vmatpush1.bf16.msra.mxu0 %v5633
        %5854 = vmatprep.subr.bf16.mxu0 0
        %5855 = vmatpush1.bf16.msra.mxu0 %v5634
        %5856 = vmatprep.subr.bf16.mxu0 0
        %5857 = vmatpush1.bf16.msra.mxu0 %v5635
        %5858 = vmatprep.subr.bf16.mxu0 0
        %5859 = vmatpush1.bf16.msra.mxu0 %v5636
        %5860 = vmatprep.subr.bf16.mxu0 0
        %5861 = vmatpush1.bf16.msra.mxu0 %v5637
        %5862 = vmatprep.subr.bf16.mxu0 0
        %5863 = vmatpush1.bf16.msra.mxu0 %v5638
        %5864 = vmatprep.subr.bf16.mxu0 0
        %5865 = vmatpush1.bf16.msra.mxu0 %v5639
        %5866 = vmatprep.mubr.bf16.mxu0 %v5294
        %5867 = vmatmul.mubr.bf16.gmra.mrb[0].mxu0 %v5293
        %v5868 = vpop.f32.mrb[0].mxu0
        %v5869 = vadd.f32 %v5820, %v5868
        %v5870 = vpop.f32.mrb[0].mxu0
        %v5871 = vpop.f32.mrb[0].mxu0
        %v5872 = vadd.f32 %v5823, %v5871
        %v5873 = vpop.f32.mrb[0].mxu0
        %5874 = vmatprep.mubr.bf16.mxu0 %v5300
        %5875 = vmatmul.mubr.bf16.gmra.mrb[0].mxu0 %v5299
        %v5876 = vpop.f32.mrb[0].mxu0
        %v5877 = vadd.f32 %v5828, %v5876
        %v5878 = vpop.f32.mrb[0].mxu0
        %v5879 = vpop.f32.mrb[0].mxu0
        %v5880 = vadd.f32 %v5831, %v5879
        %v5881 = vpop.f32.mrb[0].mxu0
        %5882 = vdwg.mxu0
        %5883 = vmatprep.subr.bf16.mxu0 0
        %5884 = vmatpush1.bf16.msra.mxu0 %v5640
        %5885 = vmatprep.subr.bf16.mxu0 0
        %5886 = vmatpush1.bf16.msra.mxu0 %v5641
        %5887 = vmatprep.subr.bf16.mxu0 0
        %5888 = vmatpush1.bf16.msra.mxu0 %v5642
        %5889 = vmatprep.subr.bf16.mxu0 0
        %5890 = vmatpush1.bf16.msra.mxu0 %v5643
        %5891 = vmatprep.subr.bf16.mxu0 0
        %5892 = vmatpush1.bf16.msra.mxu0 %v5644
        %5893 = vmatprep.subr.bf16.mxu0 0
        %5894 = vmatpush1.bf16.msra.mxu0 %v5645
        %5895 = vmatprep.subr.bf16.mxu0 0
        %5896 = vmatpush1.bf16.msra.mxu0 %v5646
        %5897 = vmatprep.subr.bf16.mxu0 0
        %5898 = vmatpush1.bf16.msra.mxu0 %v5647
        %5899 = vmatprep.subr.bf16.mxu0 0
        %5900 = vmatpush1.bf16.msra.mxu0 %v5648
        %5901 = vmatprep.subr.bf16.mxu0 0
        %5902 = vmatpush1.bf16.msra.mxu0 %v5649
        %5903 = vmatprep.subr.bf16.mxu0 0
        %5904 = vmatpush1.bf16.msra.mxu0 %v5650
        %5905 = vmatprep.subr.bf16.mxu0 0
        %5906 = vmatpush1.bf16.msra.mxu0 %v5651
        %5907 = vmatprep.subr.bf16.mxu0 0
        %5908 = vmatpush1.bf16.msra.mxu0 %v5652
        %5909 = vmatprep.subr.bf16.mxu0 0
        %5910 = vmatpush1.bf16.msra.mxu0 %v5653
        %5911 = vmatprep.subr.bf16.mxu0 0
        %5912 = vmatpush1.bf16.msra.mxu0 %v5654
        %5913 = vmatprep.subr.bf16.mxu0 0
        %5914 = vmatpush1.bf16.msra.mxu0 %v5655
        %5915 = vmatprep.mubr.bf16.mxu0 %v5296
        %5916 = vmatmul.mubr.bf16.gmra.mrb[0].mxu0 %v5295
        %v5917 = vpop.f32.mrb[0].mxu0
        %v5918 = vadd.f32 %v5869, %v5917
        %v5919 = vpop.f32.mrb[0].mxu0
        %v5920 = vpop.f32.mrb[0].mxu0
        %v5921 = vadd.f32 %v5872, %v5920
        %v5922 = vpop.f32.mrb[0].mxu0
        %5923 = vmatprep.mubr.bf16.mxu0 %v5302
        %5924 = vmatmul.mubr.bf16.gmra.mrb[0].mxu0 %v5301
        %v5925 = vpop.f32.mrb[0].mxu0
        %v5926 = vadd.f32 %v5877, %v5925
        %v5927 = vpop.f32.mrb[0].mxu0
        %v5928 = vpop.f32.mrb[0].mxu0
        %v5929 = vadd.f32 %v5880, %v5928
        %v5930 = vpop.f32.mrb[0].mxu0
        %5931 = vdwg.mxu0
        %5932 = vmatprep.subr.bf16.mxu0 0
        %5933 = vmatpush1.bf16.msra.mxu0 %v5656
        %5934 = vmatprep.subr.bf16.mxu0 0
        %5935 = vmatpush1.bf16.msra.mxu0 %v5657
        %5936 = vmatprep.subr.bf16.mxu0 0
        %5937 = vmatpush1.bf16.msra.mxu0 %v5658
        %5938 = vmatprep.subr.bf16.mxu0 0
        %5939 = vmatpush1.bf16.msra.mxu0 %v5659
        %5940 = vmatprep.subr.bf16.mxu0 0
        %5941 = vmatpush1.bf16.msra.mxu0 %v5660
        %5942 = vmatprep.subr.bf16.mxu0 0
        %5943 = vmatpush1.bf16.msra.mxu0 %v5661
        %5944 = vmatprep.subr.bf16.mxu0 0
        %5945 = vmatpush1.bf16.msra.mxu0 %v5662
        %5946 = vmatprep.subr.bf16.mxu0 0
        %5947 = vmatpush1.bf16.msra.mxu0 %v5663
        %5948 = vmatprep.subr.bf16.mxu0 0
        %5949 = vmatpush1.bf16.msra.mxu0 0
        %5950 = vmatprep.subr.bf16.mxu0 0
        %5951 = vmatpush1.bf16.msra.mxu0 0
        %5952 = vmatprep.subr.bf16.mxu0 0
        %5953 = vmatpush1.bf16.msra.mxu0 0
        %5954 = vmatprep.subr.bf16.mxu0 0
        %5955 = vmatpush1.bf16.msra.mxu0 0
        %5956 = vmatprep.subr.bf16.mxu0 0
        %5957 = vmatpush1.bf16.msra.mxu0 0
        %5958 = vmatprep.subr.bf16.mxu0 0
        %5959 = vmatpush1.bf16.msra.mxu0 0
        %5960 = vmatprep.subr.bf16.mxu0 0
        %5961 = vmatpush1.bf16.msra.mxu0 0
        %5962 = vmatprep.subr.bf16.mxu0 0
        %5963 = vmatpush1.bf16.msra.mxu0 0
        %5964 = vmatprep.mubr.bf16.mxu0 0
        %5965 = vmatmul.mubr.bf16.gmra.mrb[0].mxu0 %v5297
        %v5966 = vpop.f32.mrb[0].mxu0
        %v5967 = vadd.f32 %v5918, %v5966
        %v5968 = vpop.f32.mrb[0].mxu0
        %v5969 = vpop.f32.mrb[0].mxu0
        %v5970 = vadd.f32 %v5921, %v5969
        %v5971 = vpop.f32.mrb[0].mxu0
        %5972 = vmatprep.mubr.bf16.mxu0 0
        %5973 = vmatmul.mubr.bf16.gmra.mrb[0].mxu0 %v5303
        %v5974 = vpop.f32.mrb[0].mxu0
        %v5975 = vadd.f32 %v5926, %v5974
        %v5976 = vpop.f32.mrb[0].mxu0
        %v5977 = vpop.f32.mrb[0].mxu0
        %v5978 = vadd.f32 %v5929, %v5977
        %v5979 = vpop.f32.mrb[0].mxu0
        %5980 = vdwg.mxu0
        %v5981 = vpack.c.bf16 %v4307, %v4306
        %v5982 = vpack.c.bf16 %v4309, %v4308
        %v5983 = vpack.c.bf16 %v4311, %v4310
        %v5984 = vpack.c.bf16 %v4313, %v4312
        %v5985 = vld [vmem:[%s16] sm:$0xf]
        %v5986 = vld [vmem:[%s16 + $0x4] sm:$0xf]
        %v5987 = vld [vmem:[%s16 + $0x8] sm:$0xf]
        %v5988 = vld [vmem:[%s16 + $0xc] sm:$0xf]
        %v5989 = vld [vmem:[%s16 + $0x10] sm:$0xf]
        %v5990 = vld [vmem:[%s16 + $0x14] sm:$0xf]
        %v5991 = vld [vmem:[%s16 + $0x18] sm:$0xf]
        %v5992 = vld [vmem:[%s16 + $0x1c] sm:$0xf]
        %v6001 = vunpack.c.l.b16 %v5985
        %v6002 = vunpack.c.l.b16 %v5986
        %v6003 = vunpack.c.l.b16 %v5987
        %v6004 = vunpack.c.l.b16 %v5988
        %v6005 = vunpack.c.l.b16 %v5989
        %v6006 = vunpack.c.l.b16 %v5990
        %v6007 = vunpack.c.l.b16 %v5991
        %v6008 = vunpack.c.l.b16 %v5992
        %v6009 = vpack.c.b16 %v6002, %v6001
        %v6010 = vpack.c.b16 %v6004, %v6003
        %v6011 = vpack.c.b16 %v6006, %v6005
        %v6012 = vpack.c.b16 %v6008, %v6007
        %v6018 = vsel %vm1652, %v5981, 0
        %v6021 = vsel %vm1652, %v5982, 0
        %v6024 = vsel %vm1652, %v5983, 0
        %v6027 = vsel %vm1652, %v5984, 0
        %6029 = vmatprep.subr.bf16.mxu0 0
        %6030 = vmatpush1.bf16.msra.mxu0 %v6009
        %6031 = vmatprep.subr.bf16.mxu0 0
        %6032 = vmatpush1.bf16.msra.mxu0 %v6010
        %6033 = vmatprep.subr.bf16.mxu0 0
        %6034 = vmatpush1.bf16.msra.mxu0 %v6011
        %6035 = vmatprep.subr.bf16.mxu0 0
        %6036 = vmatpush1.bf16.msra.mxu0 %v6012
        %6037 = vmatprep.subr.bf16.mxu0 0
        %6038 = vmatpush1.bf16.msra.mxu0 0
        %6039 = vmatprep.subr.bf16.mxu0 0
        %6040 = vmatpush1.bf16.msra.mxu0 0
        %6041 = vmatprep.subr.bf16.mxu0 0
        %6042 = vmatpush1.bf16.msra.mxu0 0
        %6043 = vmatprep.subr.bf16.mxu0 0
        %6044 = vmatpush1.bf16.msra.mxu0 0
        %6045 = vmatprep.subr.bf16.mxu0 0
        %6046 = vmatpush1.bf16.msra.mxu0 0
        %6047 = vmatprep.subr.bf16.mxu0 0
        %6048 = vmatpush1.bf16.msra.mxu0 0
        %6049 = vmatprep.subr.bf16.mxu0 0
        %6050 = vmatpush1.bf16.msra.mxu0 0
        %6051 = vmatprep.subr.bf16.mxu0 0
        %6052 = vmatpush1.bf16.msra.mxu0 0
        %6053 = vmatprep.subr.bf16.mxu0 0
        %6054 = vmatpush1.bf16.msra.mxu0 0
        %6055 = vmatprep.subr.bf16.mxu0 0
        %6056 = vmatpush1.bf16.msra.mxu0 0
        %6057 = vmatprep.subr.bf16.mxu0 0
        %6058 = vmatpush1.bf16.msra.mxu0 0
        %6059 = vmatprep.subr.bf16.mxu0 0
        %6060 = vmatpush1.bf16.msra.mxu0 0
        %6061 = vmatprep.mubr.bf16.mxu0 0
        %6062 = vmatmul.mubr.bf16.gmra.mrb[0].mxu0 %v6018
        %v6063 = vpop.f32.mrb[0].mxu0
        %v6064 = vadd.f32 0.0, %v6063
        %v6065 = vpop.f32.mrb[0].mxu0
        %v6066 = vpop.f32.mrb[0].mxu0
        %v6067 = vpop.f32.mrb[0].mxu0
        %6068 = vmatprep.mubr.bf16.mxu0 0
        %6069 = vmatmul.mubr.bf16.gmra.mrb[0].mxu0 %v6021
        %v6070 = vpop.f32.mrb[0].mxu0
        %v6071 = vadd.f32 0.0, %v6070
        %v6072 = vpop.f32.mrb[0].mxu0
        %v6073 = vpop.f32.mrb[0].mxu0
        %v6074 = vpop.f32.mrb[0].mxu0
        %6075 = vmatprep.mubr.bf16.mxu0 0
        %6076 = vmatmul.mubr.bf16.gmra.mrb[0].mxu0 %v6024
        %v6077 = vpop.f32.mrb[0].mxu0
        %v6078 = vadd.f32 0.0, %v6077
        %v6079 = vpop.f32.mrb[0].mxu0
        %v6080 = vpop.f32.mrb[0].mxu0
        %v6081 = vpop.f32.mrb[0].mxu0
        %6082 = vmatprep.mubr.bf16.mxu0 0
        %6083 = vmatmul.mubr.bf16.gmra.mrb[0].mxu0 %v6027
        %v6084 = vpop.f32.mrb[0].mxu0
        %v6085 = vadd.f32 0.0, %v6084
        %v6086 = vpop.f32.mrb[0].mxu0
        %v6087 = vpop.f32.mrb[0].mxu0
        %v6088 = vpop.f32.mrb[0].mxu0
        %6089 = vdwg.mxu0
        %v6094 = vrot.slane %v6064, 1
        %v6095 = vrot.slane %v6071, 1
        %v6096 = vrot.slane %v6078, 1
        %v6097 = vrot.slane %v6085, 1
        %v6102 = vrot.slane %v6064, 2
        %v6103 = vrot.slane %v6071, 2
        %v6104 = vrot.slane %v6078, 2
        %v6105 = vrot.slane %v6085, 2
        %v6110 = vrot.slane %v6064, 3
        %v6111 = vrot.slane %v6071, 3
        %v6112 = vrot.slane %v6078, 3
        %v6113 = vrot.slane %v6085, 3
        %v6118 = vsel %vm2229, %v6064, %v6094
        %v6119 = vsel %vm2229, %v6071, %v6095
        %v6120 = vsel %vm2229, %v6078, %v6096
        %v6121 = vsel %vm2229, %v6085, %v6097
        %v6122 = vsel %vm2712, %v6118, %v6102
        %v6123 = vsel %vm2712, %v6119, %v6103
        %v6124 = vsel %vm2712, %v6120, %v6104
        %v6125 = vsel %vm2712, %v6121, %v6105
        %v6126 = vsel %vm2721, %v6122, %v6110
        %v6127 = vsel %vm2721, %v6123, %v6111
        %v6128 = vsel %vm2721, %v6124, %v6112
        %v6129 = vsel %vm2721, %v6125, %v6113
        %v6130 = vld [vmem:[%s14] sm:$0x1]
        %v6132 = vlaneseq
        %v6133 = vshrl.u32 %v6132, 7
        %v6134 = vsub.s32 0, %v6133
        %v6135 = vrot.slane %v6130, %v6134
        %v6137 = vmul.f32 %v5967, %v6135
        %v6138 = vmul.f32 %v5970, %v6135
        %v6139 = vmul.f32 %v5975, %v6135
        %v6140 = vmul.f32 %v5978, %v6135
        %v6141 = vld [vmem:[%s15] sm:$0x1]
        %v6143 = vlaneseq
        %v6144 = vshrl.u32 %v6143, 7
        %v6145 = vsub.s32 0, %v6144
        %v6146 = vrot.slane %v6141, %v6145
        %v6148 = vadd.f32 %v6137, %v6146
        %v6149 = vadd.f32 %v6138, %v6146
        %v6150 = vadd.f32 %v6139, %v6146
        %v6151 = vadd.f32 %v6140, %v6146
        %v6152 = vld [vmem:[%s17] sm:$0x1]
        %v6154 = vlaneseq
        %v6155 = vshrl.u32 %v6154, 7
        %v6156 = vsub.s32 0, %v6155
        %v6157 = vrot.slane %v6152, %v6156
        %v6159 = vmul.f32 %v6126, %v6157
        %v6160 = vmul.f32 %v6127, %v6157
        %v6161 = vmul.f32 %v6128, %v6157
        %v6162 = vmul.f32 %v6129, %v6157
        %v6163 = vadd.f32 %v6148, %v6159
        %v6164 = vadd.f32 %v6149, %v6160
        %v6165 = vadd.f32 %v6150, %v6161
        %v6166 = vadd.f32 %v6151, %v6162
        %v6167 = vld [vmem:[%s18] sm:$0x1]
        %v6169 = vlaneseq
        %v6170 = vshrl.u32 %v6169, 7
        %v6171 = vsub.s32 0, %v6170
        %v6172 = vrot.slane %v6167, %v6171
        %v6174 = vadd.f32 %v6163, %v6172
        %v6175 = vadd.f32 %v6164, %v6172
        %v6176 = vadd.f32 %v6165, %v6172
        %v6177 = vadd.f32 %v6166, %v6172
        %v6178 = vmax.f32 %v6174, 0.0
        %v6179 = vmax.f32 %v6175, 0.0
        %v6180 = vmax.f32 %v6176, 0.0
        %v6181 = vmax.f32 %v6177, 0.0
        %v6182 = vsel %vm2730, %v6178, 0.0
        %v6183 = vsel %vm2730, %v6179, 0.0
        %v6184 = vadd.f32 %v6182, %v6183
        %v6185 = vsel %vm2730, %v6180, 0.0
        %v6186 = vadd.f32 %v6184, %v6185
        %v6187 = vsel %vm2730, %v6181, 0.0
        %v6188 = vadd.f32 %v6186, %v6187
        %v6189 = vsel %vm2730, %v6188, 0.0
        %v6190 = vrot.slane %v6189, 4
        %v6191 = vadd.f32 %v6189, %v6190
        %v6192 = vrot.slane %v6191, 2
        %v6193 = vadd.f32 %v6191, %v6192
        %v6194 = vrot.slane %v6193, 1
        %v6195 = vadd.f32 %v6193, %v6194
        %v6196 = vmul.f32 %v6195, 0.0625
        %6197 = vst [vmem:[%s594] sm:$0x1] %v6196
        %s6198 = sand.u32 %s445, 1
        %s6199 = scalar_lea.sflag [#allocation3], %s6198
        %s6200 = sand.u32 %s445, 1
        %s6201 = scalar_lea.vmem [#allocation2], %s6200
        // Predicated region
        $region97: #{_lambda_.1} parent=95 // pred_check
          %p6202 = pneg %p455
        $region98: #{_lambda_.1} parent=95 // pred_check_branch
          %6204 = sbr.rel (%p6202) target = $region100
        $region99: #{_lambda_.1} parent=95 // pred_region
          %s6206 = ssub.s32 16, 16
          %6207 = vsyncadd %s6199, %s6206
          %s6208 = smul.addr %s33, 16
          %s6209 = scalar_lea.hbm %s19, %s6208
          %s6211 = sshll.u32 %s6201, 4
          %s6212 = int_to_ptr.vmem [resolvable:$true] %s6211
          %6214 = dma.vmem_to_hbm [thread:$0]  %s6212, 16, %s6209, %s6199
        $region100: #{_lambda_.1} parent=95 // pred_fallthru
          _
      $region96: #{_lambda_.1} parent=5 // pred_fallthru
        _
      %p6215 = scmp.le.s32.totalorder 2, %s28
      // Predicated region
      $region101: #{_lambda_.1} parent=5 // pred_check
        %p6216 = pneg %p6215
      $region102: #{_lambda_.1} parent=5 // pred_check_branch
        %6218 = sbr.rel (%p6216) target = $region104
      $region103: #{_lambda_.1} parent=5 // pred_region
        %s6219 = ssub.s32 %s28, 2
        // Predicated region
        $region105: #{_lambda_.1} parent=103 // pred_check
          %p6220 = pneg %p461
        $region106: #{_lambda_.1} parent=103 // pred_check_branch
          %6222 = sbr.rel (%p6220) target = $region108
        $region107: #{_lambda_.1} parent=103 // pred_region
          %s6223 = sand.u32 %s446, 1
          %s6224 = scalar_lea.sflag [#allocation3], %s6223
          %s6225 = sand.u32 %s446, 1
          %s6226 = scalar_lea.vmem [#allocation2], %s6225
          %6227 = dma.done %s6224, 16
        $region108: #{_lambda_.1} parent=103 // pred_fallthru
          _
      $region104: #{_lambda_.1} parent=5 // pred_fallthru
        _
    $region6: #{_lambda_.1} parent=1 // loop_footer
      %s32 = sadd.s32 1, %s28
    $region7: #{_lambda_.1} parent=1 // loop_footer_branch
      %27 = sbr.rel target = $region3
    $region8: #{_lambda_.1} parent=1 // loop_exit
      _
    %6228 = vsyncpa [#allocation3], 1
    %s6229 = scalar_lea.sflag [#allocation3], 1
    %6230 = vsyncpa %s6229, 1

</llo_original>
